<compile_context>
chip_gen: v7x
topology: tpu7x:2x2x1
jax: 0.10.0
libtpu: 0.0.40
codegen_flags: <defaults>
</compile_context>

<pallas_src>
import jax
import jax.numpy as jnp
from jax.experimental import pallas as pl
from jax.experimental.pallas import tpu as pltpu

CPAD = 128      # padded channel width (lane axis) inside the embedding kernel
CIN_PAD = 8     # input channels padded to one sublane quantum


# ----------------------------------------------------------------------------
# Pallas kernel 1: fused 3-stage feature pyramid + embedding generation
#   All ops are lane-dense matmuls on (pixels/cells, 128)-shaped tiles.
# ----------------------------------------------------------------------------
def _padim_embed_kernel(x_ref, w1_ref, b1_ref, p1_ref,
                        w2_ref, b2_ref, p2_ref,
                        w3_ref, b3_ref, p3_ref,
                        u2_ref, u3_ref,
                        s1_ref, s2_ref, s3_ref,
                        emb_ref):
    f32 = jnp.float32
    # stage 1: 1x1 conv + ReLU over all pixels of one image, then avg-pool (P1)
    y1 = jnp.maximum(
        jnp.dot(x_ref[...], w1_ref[...], preferred_element_type=f32) + b1_ref[...], 0.0)
    f1 = jnp.dot(p1_ref[...], y1, preferred_element_type=f32)          # (G, 128)
    # stage 2
    y2 = jnp.maximum(
        jnp.dot(f1, w2_ref[...], preferred_element_type=f32) + b2_ref[...], 0.0)
    f2 = jnp.dot(p2_ref[...], y2, preferred_element_type=f32)          # (G/4, 128)
    # stage 3
    y3 = jnp.maximum(
        jnp.dot(f2, w3_ref[...], preferred_element_type=f32) + b3_ref[...], 0.0)
    f3 = jnp.dot(p3_ref[...], y3, preferred_element_type=f32)          # (G/16, 128)
    # nearest-upsample (U2/U3) + concat + static channel gather, all folded
    # into selection matmuls: emb = f1@S1 + (U2@f2)@S2 + (U3@f3)@S3
    e = jnp.dot(f1, s1_ref[...], preferred_element_type=f32)
    e = e + jnp.dot(jnp.dot(u2_ref[...], f2, preferred_element_type=f32),
                    s2_ref[...], preferred_element_type=f32)
    e = e + jnp.dot(jnp.dot(u3_ref[...], f3, preferred_element_type=f32),
                    s3_ref[...], preferred_element_type=f32)
    emb_ref[...] = e                                                    # (G, 128)


def _const_spec(arr):
    nd = arr.ndim
    return pl.BlockSpec(arr.shape, lambda b, _nd=nd: (0,) * _nd)


def padim_embed(x_pad, consts, batch, n_px):
    """x_pad: [B*H*W, CIN_PAD] raster-ordered pixels -> [B*G, 128] padded embedding."""
    G = consts["grid_cells"]
    operands = [x_pad,
                consts["W1p"], consts["b1p"], consts["P1"],
                consts["W2p"], consts["b2p"], consts["P2"],
                consts["W3p"], consts["b3p"], consts["P3"],
                consts["U2"], consts["U3"],
                consts["S1"], consts["S2"], consts["S3"]]
    in_specs = ([pl.BlockSpec((n_px, CIN_PAD), lambda b: (b, 0))]
                + [_const_spec(a) for a in operands[1:]])
    return pl.pallas_call(
        _padim_embed_kernel,
        out_shape=jax.ShapeDtypeStruct((batch * G, CPAD), jnp.float32),
        grid=(batch,),
        in_specs=in_specs,
        out_specs=pl.BlockSpec((G, CPAD), lambda b: (b, 0)),
        compiler_params=pltpu.CompilerParams(
            dimension_semantics=("parallel",),
            vmem_limit_bytes=32 * 1024 * 1024),
    )(*operands)


# ----------------------------------------------------------------------------
# Pallas kernel 2: per-pixel Mahalanobis distance
#   Layout: channels on sublanes, pixels on lanes.  Grid = (batch, pixel-tile);
#   the Gaussian statistics are indexed by pixel tile only (no batch
#   replication of the (C, C, HW) inverse covariance).
# ----------------------------------------------------------------------------
def _mahalanobis_kernel(emb_ref, mean_ref, cov_ref, out_ref):
    # emb_ref/mean_ref: (C, TP); cov_ref: (C, C, TP); out_ref: (1, TP)
    delta = emb_ref[...] - mean_ref[...]                 # (C, TP)
    cov = cov_ref[...]                                   # (C, C, TP)
    c = delta.shape[0]
    m = jnp.zeros_like(delta)                            # (C, TP)
    # m[j, p] = sum_i delta[i, p] * inv_cov[i, j, p]
    # sublane select + sublane broadcast + FMA per channel -- no lane slicing.
    # (Unrolled Python loop is fine at these channel counts; at production C
    #  switch to lax.fori_loop(..., unroll=True) over channel chunks.)
    for i in range(c):
        m = m + delta[i:i + 1, :] * cov[i]
    dist2 = jnp.sum(delta * m, axis=0, keepdims=True)    # (1, TP) sublane reduce
    out_ref[...] = jnp.sqrt(jnp.maximum(dist2, 0.0))


def mahalanobis(emb_b, mean_t, inv_cov_t, tp=None):
    """emb_b: [B, C, HW], mean_t: [C, HW], inv_cov_t: [C, C, HW] -> [B, 1, HW].

    TP tiles the pixel (lane) axis with a parallel grid axis.  At production
    sizes pick TP as a multiple of 128 dividing HW so double-buffered
    (C, C, TP) inv_cov tiles fit the per-generation VMEM budget (v7x has half
    the VMEM of v5e/v6e); here HW is tiny so one full-extent tile per image.
    """
    B, C, HW = emb_b.shape
    if tp is None or tp >= HW:
        tp = HW
    assert HW % tp == 0, (HW, tp)
    n_t = HW // tp
    return pl.pallas_call(
        _mahalanobis_kernel,
        out_shape=jax.ShapeDtypeStruct((B, 1, HW), jnp.float32),
        grid=(B, n_t),
        in_specs=[
            pl.BlockSpec((None, C, tp), lambda b, t: (b, 0, t)),
            pl.BlockSpec((C, tp), lambda b, t: (0, t)),
            pl.BlockSpec((C, C, tp), lambda b, t: (0, 0, t)),
        ],
        out_specs=pl.BlockSpec((None, 1, tp), lambda b, t: (b, 0, t)),
        compiler_params=pltpu.CompilerParams(
            dimension_semantics=("parallel", "parallel"),
            vmem_limit_bytes=32 * 1024 * 1024),
    )(emb_b, mean_t, inv_cov_t)


# ----------------------------------------------------------------------------
# Host-side static matrix construction (pooling / upsample / gather as matmuls)
# ----------------------------------------------------------------------------
def _pad2(w, rows, cols):
    out = jnp.zeros((rows, cols), jnp.float32)
    return out.at[:w.shape[0], :w.shape[1]].set(w.astype(jnp.float32))


def _pool_matrix(src_h, src_w, k):
    """Average-pool k x k as a (dst_cells, src_cells) matrix, raster order."""
    dh, dw = src_h // k, src_w // k
    idx = jnp.arange(src_h * src_w)
    r, c = idx // src_w, idx % src_w
    dst_of_src = (r // k) * dw + (c // k)
    return jax.nn.one_hot(dst_of_src, dh * dw, dtype=jnp.float32).T / float(k * k)


def _upsample_matrix(dst_h, dst_w, factor):
    """Nearest-neighbour upsample as a (dst_cells, src_cells) 0/1 matrix."""
    sh, sw = dst_h // factor, dst_w // factor
    idx = jnp.arange(dst_h * dst_w)
    r, c = idx // dst_w, idx % dst_w
    src_of_dst = (r // factor) * sw + (c // factor)
    return jax.nn.one_hot(src_of_dst, sh * sw, dtype=jnp.float32)


def _sel_matrix(index, offset, width, cpad):
    """S[c, j] = 1 if embedding slot j selects channel c of this stage."""
    nf = index.shape[0]
    rel = index - offset
    rel = jnp.where((rel >= 0) & (rel < width), rel, -1)   # -1 -> all-zero row
    oh = jax.nn.one_hot(rel, cpad, dtype=jnp.float32)       # (nf, cpad)
    s = jnp.zeros((cpad, cpad), jnp.float32)
    return s.at[:, :nf].set(oh.T)


def prepare_padim(params, image_hw=(32, 32)):
    """Precompute all static, kernel-side constants (done once per model)."""
    H, W = image_hw
    c1 = params["W1"].shape[1]
    c2 = params["W2"].shape[1]
    c3 = params["W3"].shape[1]
    nf = params["index"].shape[0]
    gh, gw = H // 4, W // 4                      # stage-1 / embedding grid
    return {
        "num_features": nf,
        "grid_hw": (gh, gw),
        "grid_cells": gh * gw,
        "mask_size": params["mask_size"],
        "W1p": _pad2(params["W1"], CIN_PAD, CPAD),
        "b1p": _pad2(params["b1"].reshape(1, -1), 1, CPAD),
        "W2p": _pad2(params["W2"], CPAD, CPAD),
        "b2p": _pad2(params["b2"].reshape(1, -1), 1, CPAD),
        "W3p": _pad2(params["W3"], CPAD, CPAD),
        "b3p": _pad2(params["b3"].reshape(1, -1), 1, CPAD),
        "P1": _pool_matrix(H, W, 4),             # (G, H*W)
        "P2": _pool_matrix(gh, gw, 2),           # (G/4, G)
        "P3": _pool_matrix(gh // 2, gw // 2, 2), # (G/16, G/4)
        "U2": _upsample_matrix(gh, gw, 2),       # (G, G/4)
        "U3": _upsample_matrix(gh, gw, 4),       # (G, G/16)
        "S1": _sel_matrix(params["index"], 0, c1, CPAD),
        "S2": _sel_matrix(params["index"], c1, c2, CPAD),
        "S3": _sel_matrix(params["index"], c1 + c2, c3, CPAD),
        "mean_t": params["mean"].astype(jnp.float32),                          # (C, HW)
        "inv_cov_t": jnp.transpose(params["inv_cov"], (1, 2, 0)).astype(jnp.float32),  # (C, C, HW)
    }


# ----------------------------------------------------------------------------
# Forward pass (mirrors PaDiM.forward: embeddings if training, anomaly map else)
# ----------------------------------------------------------------------------
def padim_forward(x_nchw, consts, training):
    B, Cin, H, W = x_nchw.shape
    # NCHW -> flattened raster pixels, channels last, padded to CIN_PAD lanes
    x = jnp.transpose(x_nchw, (0, 2, 3, 1)).astype(jnp.float32).reshape(B * H * W, Cin)
    x = jnp.pad(x, ((0, 0), (0, CIN_PAD - Cin)))

    emb_pad = padim_embed(x, consts, B, H * W)          # (B*G, 128), lanes 0..nf-1 real
    nf = consts["num_features"]
    gh, gw = consts["grid_hw"]
    G = consts["grid_cells"]
    emb = emb_pad[:, :nf]                               # (B*G, nf)

    if training:
        return jnp.transpose(emb.reshape(B, gh, gw, nf), (0, 3, 1, 2))  # NCHW embeddings

    # eval: Mahalanobis anomaly map.  Arrange embeddings as (B, C, HW) so the
    # Gaussian statistics are indexed per-pixel-tile inside the kernel and
    # never replicated across the batch.
    emb_b = jnp.transpose(emb.reshape(B, G, nf), (0, 2, 1))   # (B, nf, G)
    dist = mahalanobis(emb_b, consts["mean_t"], consts["inv_cov_t"])   # (B, 1, G)

    amap = dist.reshape(B, 1, gh, gw)
    mh, mw = consts["mask_size"]
    amap = jax.image.resize(amap, (B, 1, mh, mw), method="bilinear")
    # TODO(synk): AnomalyMap's Gaussian-blur smoothing parameters are not in the
    # reference snippet; only Mahalanobis + bilinear upsample are implemented.
    return amap


# ----------------------------------------------------------------------------
# Deterministic parameter construction (synthetic, no checkpoint load)
# ----------------------------------------------------------------------------
def make_params(key, c_in=3, c1=8, c2=16, c3=24, num_features=16,
                n_patches=64, mask_size=(32, 32)):
    ks = jax.random.split(key, 9)
    max_features = c1 + c2 + c3
    params = {
        "W1": jax.random.normal(ks[0], (c_in, c1), jnp.float32) * 0.5,
        "b1": jax.random.normal(ks[1], (c1,), jnp.float32) * 0.1,
        "W2": jax.random.normal(ks[2], (c1, c2), jnp.float32) * 0.3,
        "b2": jax.random.normal(ks[3], (c2,), jnp.float32) * 0.1,
        "W3": jax.random.normal(ks[4], (c2, c3), jnp.float32) * 0.3,
        "b3": jax.random.normal(ks[5], (c3,), jnp.float32) * 0.1,
        # random.sample(range(max_features), num_features) analogue
        "index": jax.random.permutation(ks[6], max_features)[:num_features],
        # MultiVariateGaussian buffers: mean [C, HW], inv_cov [HW, C, C] (PSD)
        "mean": jax.random.normal(ks[7], (num_features, n_patches), jnp.float32) * 0.1,
        "mask_size": mask_size,
    }
    A = jax.random.normal(ks[8], (n_patches, num_features, num_features), jnp.float32) * 0.1
    params["inv_cov"] = (jnp.eye(num_features, dtype=jnp.float32)[None]
                         + jnp.einsum("tij,tkj->tik", A, A))
    return params


if __name__ == "__main__":
    key = jax.random.PRNGKey(0)
    k_x, k_p = jax.random.split(key)

    # small input consistent with PaDiM's forward: NCHW image batch
    x = jax.random.normal(k_x, (2, 3, 32, 32), jnp.float32)
    params = make_params(k_p)
    consts = prepare_padim(params, image_hw=(32, 32))

    # training mode -> embeddings [B, num_features, 8, 8]
    embeddings = padim_forward(x, consts, training=True)
    embeddings = jax.block_until_ready(embeddings)
    assert embeddings.shape == (2, 16, 8, 8), embeddings.shape

    # eval mode -> anomaly map [B, 1, mask_h, mask_w]
    anomaly_map = padim_forward(x, consts, training=False)
    anomaly_map = jax.block_until_ready(anomaly_map)
    assert anomaly_map.shape == (2, 1, 32, 32), anomaly_map.shape
    assert bool(jnp.all(jnp.isfinite(anomaly_map)))

    print("KERNEL_OK")
</pallas_src>

<mosaic_0001>
module attributes {stable_mosaic.version = 11 : i64} {
  func.func @_padim_embed_kernel(%arg0: i32, %arg1: memref<1024x8xf32, #tpu.memory_space<vmem>>, %arg2: memref<8x128xf32, #tpu.memory_space<vmem>>, %arg3: memref<1x128xf32, #tpu.memory_space<vmem>>, %arg4: memref<64x1024xf32, #tpu.memory_space<vmem>>, %arg5: memref<128x128xf32, #tpu.memory_space<vmem>>, %arg6: memref<1x128xf32, #tpu.memory_space<vmem>>, %arg7: memref<16x64xf32, #tpu.memory_space<vmem>>, %arg8: memref<128x128xf32, #tpu.memory_space<vmem>>, %arg9: memref<1x128xf32, #tpu.memory_space<vmem>>, %arg10: memref<4x16xf32, #tpu.memory_space<vmem>>, %arg11: memref<64x16xf32, #tpu.memory_space<vmem>>, %arg12: memref<64x4xf32, #tpu.memory_space<vmem>>, %arg13: memref<128x128xf32, #tpu.memory_space<vmem>>, %arg14: memref<128x128xf32, #tpu.memory_space<vmem>>, %arg15: memref<128x128xf32, #tpu.memory_space<vmem>>, %arg16: memref<64x128xf32, #tpu.memory_space<vmem>>) attributes {dimension_semantics = [#tpu.dimension_semantics<parallel>], iteration_bounds = array<i64: 2>, scalar_prefetch = 0 : i64, scratch_operands = 0 : i64, tpu.core_type = #tpu.core_type<tc>, window_params = [{transform_indices = @transform_0, window_bounds = array<i64: 1024, 8>}, {pipeline_mode = #tpu.pipeline_mode<synchronous>, transform_indices = @transform_1, window_bounds = array<i64: 8, 128>}, {pipeline_mode = #tpu.pipeline_mode<synchronous>, transform_indices = @transform_2, window_bounds = array<i64: 1, 128>}, {pipeline_mode = #tpu.pipeline_mode<synchronous>, transform_indices = @transform_3, window_bounds = array<i64: 64, 1024>}, {pipeline_mode = #tpu.pipeline_mode<synchronous>, transform_indices = @transform_4, window_bounds = array<i64: 128, 128>}, {pipeline_mode = #tpu.pipeline_mode<synchronous>, transform_indices = @transform_5, window_bounds = array<i64: 1, 128>}, {pipeline_mode = #tpu.pipeline_mode<synchronous>, transform_indices = @transform_6, window_bounds = array<i64: 16, 64>}, {pipeline_mode = #tpu.pipeline_mode<synchronous>, transform_indices = @transform_7, window_bounds = array<i64: 128, 128>}, {pipeline_mode = #tpu.pipeline_mode<synchronous>, transform_indices = @transform_8, window_bounds = array<i64: 1, 128>}, {pipeline_mode = #tpu.pipeline_mode<synchronous>, transform_indices = @transform_9, window_bounds = array<i64: 4, 16>}, {pipeline_mode = #tpu.pipeline_mode<synchronous>, transform_indices = @transform_10, window_bounds = array<i64: 64, 16>}, {pipeline_mode = #tpu.pipeline_mode<synchronous>, transform_indices = @transform_11, window_bounds = array<i64: 64, 4>}, {pipeline_mode = #tpu.pipeline_mode<synchronous>, transform_indices = @transform_12, window_bounds = array<i64: 128, 128>}, {pipeline_mode = #tpu.pipeline_mode<synchronous>, transform_indices = @transform_13, window_bounds = array<i64: 128, 128>}, {pipeline_mode = #tpu.pipeline_mode<synchronous>, transform_indices = @transform_14, window_bounds = array<i64: 128, 128>}, {transform_indices = @transform_15, window_bounds = array<i64: 64, 128>}]} {
    %c0 = arith.constant 0 : index
    %c0_0 = arith.constant 0 : index
    %0 = vector.load %arg1[%c0, %c0_0] : memref<1024x8xf32, #tpu.memory_space<vmem>>, vector<1024x8xf32>
    %c0_1 = arith.constant 0 : index
    %c0_2 = arith.constant 0 : index
    %1 = vector.load %arg2[%c0_1, %c0_2] : memref<8x128xf32, #tpu.memory_space<vmem>>, vector<8x128xf32>
    %cst = arith.constant dense<0.000000e+00> : vector<1024x128xf32>
    %2 = tpu.matmul %0, %1, %cst {dimension_numbers = #tpu.dot_dimension_numbers<[1], [0], [0], [1], [0, 0, 1, 1], [], []>} : vector<1024x8xf32>, vector<8x128xf32>, vector<1024x128xf32> -> vector<1024x128xf32>
    %c0_3 = arith.constant 0 : index
    %c0_4 = arith.constant 0 : index
    %3 = vector.load %arg3[%c0_3, %c0_4] : memref<1x128xf32, #tpu.memory_space<vmem>>, vector<1x128xf32>
    %4 = vector.broadcast %3 : vector<1x128xf32> to vector<1024x128xf32>
    %5 = arith.addf %2, %4 : vector<1024x128xf32>
    %cst_5 = arith.constant 0.000000e+00 : f32
    %6 = vector.broadcast %cst_5 : f32 to vector<1024x128xf32>
    %7 = arith.maximumf %5, %6 : vector<1024x128xf32>
    %c0_6 = arith.constant 0 : index
    %c0_7 = arith.constant 0 : index
    %8 = vector.load %arg4[%c0_6, %c0_7] : memref<64x1024xf32, #tpu.memory_space<vmem>>, vector<64x1024xf32>
    %cst_8 = arith.constant dense<0.000000e+00> : vector<64x128xf32>
    %9 = tpu.matmul %8, %7, %cst_8 {dimension_numbers = #tpu.dot_dimension_numbers<[1], [0], [0], [1], [0, 0, 1, 1], [], []>} : vector<64x1024xf32>, vector<1024x128xf32>, vector<64x128xf32> -> vector<64x128xf32>
    %c0_9 = arith.constant 0 : index
    %c0_10 = arith.constant 0 : index
    %10 = vector.load %arg5[%c0_9, %c0_10] : memref<128x128xf32, #tpu.memory_space<vmem>>, vector<128x128xf32>
    %cst_11 = arith.constant dense<0.000000e+00> : vector<64x128xf32>
    %11 = tpu.matmul %9, %10, %cst_11 {dimension_numbers = #tpu.dot_dimension_numbers<[1], [0], [0], [1], [0, 0, 1, 1], [], []>} : vector<64x128xf32>, vector<128x128xf32>, vector<64x128xf32> -> vector<64x128xf32>
    %c0_12 = arith.constant 0 : index
    %c0_13 = arith.constant 0 : index
    %12 = vector.load %arg6[%c0_12, %c0_13] : memref<1x128xf32, #tpu.memory_space<vmem>>, vector<1x128xf32>
    %13 = vector.broadcast %12 : vector<1x128xf32> to vector<64x128xf32>
    %14 = arith.addf %11, %13 : vector<64x128xf32>
    %cst_14 = arith.constant 0.000000e+00 : f32
    %15 = vector.broadcast %cst_14 : f32 to vector<64x128xf32>
    %16 = arith.maximumf %14, %15 : vector<64x128xf32>
    %c0_15 = arith.constant 0 : index
    %c0_16 = arith.constant 0 : index
    %17 = vector.load %arg7[%c0_15, %c0_16] : memref<16x64xf32, #tpu.memory_space<vmem>>, vector<16x64xf32>
    %cst_17 = arith.constant dense<0.000000e+00> : vector<16x128xf32>
    %18 = tpu.matmul %17, %16, %cst_17 {dimension_numbers = #tpu.dot_dimension_numbers<[1], [0], [0], [1], [0, 0, 1, 1], [], []>} : vector<16x64xf32>, vector<64x128xf32>, vector<16x128xf32> -> vector<16x128xf32>
    %c0_18 = arith.constant 0 : index
    %c0_19 = arith.constant 0 : index
    %19 = vector.load %arg8[%c0_18, %c0_19] : memref<128x128xf32, #tpu.memory_space<vmem>>, vector<128x128xf32>
    %cst_20 = arith.constant dense<0.000000e+00> : vector<16x128xf32>
    %20 = tpu.matmul %18, %19, %cst_20 {dimension_numbers = #tpu.dot_dimension_numbers<[1], [0], [0], [1], [0, 0, 1, 1], [], []>} : vector<16x128xf32>, vector<128x128xf32>, vector<16x128xf32> -> vector<16x128xf32>
    %c0_21 = arith.constant 0 : index
    %c0_22 = arith.constant 0 : index
    %21 = vector.load %arg9[%c0_21, %c0_22] : memref<1x128xf32, #tpu.memory_space<vmem>>, vector<1x128xf32>
    %22 = vector.broadcast %21 : vector<1x128xf32> to vector<16x128xf32>
    %23 = arith.addf %20, %22 : vector<16x128xf32>
    %cst_23 = arith.constant 0.000000e+00 : f32
    %24 = vector.broadcast %cst_23 : f32 to vector<16x128xf32>
    %25 = arith.maximumf %23, %24 : vector<16x128xf32>
    %c0_24 = arith.constant 0 : index
    %c0_25 = arith.constant 0 : index
    %26 = vector.load %arg10[%c0_24, %c0_25] : memref<4x16xf32, #tpu.memory_space<vmem>>, vector<4x16xf32>
    %cst_26 = arith.constant dense<0.000000e+00> : vector<4x128xf32>
    %27 = tpu.matmul %26, %25, %cst_26 {dimension_numbers = #tpu.dot_dimension_numbers<[1], [0], [0], [1], [0, 0, 1, 1], [], []>} : vector<4x16xf32>, vector<16x128xf32>, vector<4x128xf32> -> vector<4x128xf32>
    %c0_27 = arith.constant 0 : index
    %c0_28 = arith.constant 0 : index
    %28 = vector.load %arg13[%c0_27, %c0_28] : memref<128x128xf32, #tpu.memory_space<vmem>>, vector<128x128xf32>
    %cst_29 = arith.constant dense<0.000000e+00> : vector<64x128xf32>
    %29 = tpu.matmul %9, %28, %cst_29 {dimension_numbers = #tpu.dot_dimension_numbers<[1], [0], [0], [1], [0, 0, 1, 1], [], []>} : vector<64x128xf32>, vector<128x128xf32>, vector<64x128xf32> -> vector<64x128xf32>
    %c0_30 = arith.constant 0 : index
    %c0_31 = arith.constant 0 : index
    %30 = vector.load %arg11[%c0_30, %c0_31] : memref<64x16xf32, #tpu.memory_space<vmem>>, vector<64x16xf32>
    %cst_32 = arith.constant dense<0.000000e+00> : vector<64x128xf32>
    %31 = tpu.matmul %30, %18, %cst_32 {dimension_numbers = #tpu.dot_dimension_numbers<[1], [0], [0], [1], [0, 0, 1, 1], [], []>} : vector<64x16xf32>, vector<16x128xf32>, vector<64x128xf32> -> vector<64x128xf32>
    %c0_33 = arith.constant 0 : index
    %c0_34 = arith.constant 0 : index
    %32 = vector.load %arg14[%c0_33, %c0_34] : memref<128x128xf32, #tpu.memory_space<vmem>>, vector<128x128xf32>
    %cst_35 = arith.constant dense<0.000000e+00> : vector<64x128xf32>
    %33 = tpu.matmul %31, %32, %cst_35 {dimension_numbers = #tpu.dot_dimension_numbers<[1], [0], [0], [1], [0, 0, 1, 1], [], []>} : vector<64x128xf32>, vector<128x128xf32>, vector<64x128xf32> -> vector<64x128xf32>
    %34 = arith.addf %29, %33 : vector<64x128xf32>
    %c0_36 = arith.constant 0 : index
    %c0_37 = arith.constant 0 : index
    %35 = vector.load %arg12[%c0_36, %c0_37] : memref<64x4xf32, #tpu.memory_space<vmem>>, vector<64x4xf32>
    %cst_38 = arith.constant dense<0.000000e+00> : vector<64x128xf32>
    %36 = tpu.matmul %35, %27, %cst_38 {dimension_numbers = #tpu.dot_dimension_numbers<[1], [0], [0], [1], [0, 0, 1, 1], [], []>} : vector<64x4xf32>, vector<4x128xf32>, vector<64x128xf32> -> vector<64x128xf32>
    %c0_39 = arith.constant 0 : index
    %c0_40 = arith.constant 0 : index
    %37 = vector.load %arg15[%c0_39, %c0_40] : memref<128x128xf32, #tpu.memory_space<vmem>>, vector<128x128xf32>
    %cst_41 = arith.constant dense<0.000000e+00> : vector<64x128xf32>
    %38 = tpu.matmul %36, %37, %cst_41 {dimension_numbers = #tpu.dot_dimension_numbers<[1], [0], [0], [1], [0, 0, 1, 1], [], []>} : vector<64x128xf32>, vector<128x128xf32>, vector<64x128xf32> -> vector<64x128xf32>
    %39 = arith.addf %34, %38 : vector<64x128xf32>
    %c0_42 = arith.constant 0 : index
    %c0_43 = arith.constant 0 : index
    %40 = vector.load %arg16[%c0_42, %c0_43] : memref<64x128xf32, #tpu.memory_space<vmem>>, vector<64x128xf32>
    tpu.vector_store %arg16[%c0_42, %c0_43], %39 {strides = array<i32>} : memref<64x128xf32, #tpu.memory_space<vmem>>, vector<64x128xf32>,
    return
  }
  func.func @transform_0(%arg0: i32) -> (i32, i32) {
    %c0_i32 = arith.constant 0 : i32
    %c0_i32_0 = arith.constant 0 : i32
    return %arg0, %c0_i32 : i32, i32
  }
  func.func @transform_1(%arg0: i32) -> (i32, i32) {
    %c0_i32 = arith.constant 0 : i32
    %c0_i32_0 = arith.constant 0 : i32
    %c0_i32_1 = arith.constant 0 : i32
    return %c0_i32, %c0_i32_0 : i32, i32
  }
  func.func @transform_2(%arg0: i32) -> (i32, i32) {
    %c0_i32 = arith.constant 0 : i32
    %c0_i32_0 = arith.constant 0 : i32
    %c0_i32_1 = arith.constant 0 : i32
    return %c0_i32, %c0_i32_0 : i32, i32
  }
  func.func @transform_3(%arg0: i32) -> (i32, i32) {
    %c0_i32 = arith.constant 0 : i32
    %c0_i32_0 = arith.constant 0 : i32
    %c0_i32_1 = arith.constant 0 : i32
    return %c0_i32, %c0_i32_0 : i32, i32
  }
  func.func @transform_4(%arg0: i32) -> (i32, i32) {
    %c0_i32 = arith.constant 0 : i32
    %c0_i32_0 = arith.constant 0 : i32
    %c0_i32_1 = arith.constant 0 : i32
    return %c0_i32, %c0_i32_0 : i32, i32
  }
  func.func @transform_5(%arg0: i32) -> (i32, i32) {
    %c0_i32 = arith.constant 0 : i32
    %c0_i32_0 = arith.constant 0 : i32
    %c0_i32_1 = arith.constant 0 : i32
    return %c0_i32, %c0_i32_0 : i32, i32
  }
  func.func @transform_6(%arg0: i32) -> (i32, i32) {
    %c0_i32 = arith.constant 0 : i32
    %c0_i32_0 = arith.constant 0 : i32
    %c0_i32_1 = arith.constant 0 : i32
    return %c0_i32, %c0_i32_0 : i32, i32
  }
  func.func @transform_7(%arg0: i32) -> (i32, i32) {
    %c0_i32 = arith.constant 0 : i32
    %c0_i32_0 = arith.constant 0 : i32
    %c0_i32_1 = arith.constant 0 : i32
    return %c0_i32, %c0_i32_0 : i32, i32
  }
  func.func @transform_8(%arg0: i32) -> (i32, i32) {
    %c0_i32 = arith.constant 0 : i32
    %c0_i32_0 = arith.constant 0 : i32
    %c0_i32_1 = arith.constant 0 : i32
    return %c0_i32, %c0_i32_0 : i32, i32
  }
  func.func @transform_9(%arg0: i32) -> (i32, i32) {
    %c0_i32 = arith.constant 0 : i32
    %c0_i32_0 = arith.constant 0 : i32
    %c0_i32_1 = arith.constant 0 : i32
    return %c0_i32, %c0_i32_0 : i32, i32
  }
  func.func @transform_10(%arg0: i32) -> (i32, i32) {
    %c0_i32 = arith.constant 0 : i32
    %c0_i32_0 = arith.constant 0 : i32
    %c0_i32_1 = arith.constant 0 : i32
    return %c0_i32, %c0_i32_0 : i32, i32
  }
  func.func @transform_11(%arg0: i32) -> (i32, i32) {
    %c0_i32 = arith.constant 0 : i32
    %c0_i32_0 = arith.constant 0 : i32
    %c0_i32_1 = arith.constant 0 : i32
    return %c0_i32, %c0_i32_0 : i32, i32
  }
  func.func @transform_12(%arg0: i32) -> (i32, i32) {
    %c0_i32 = arith.constant 0 : i32
    %c0_i32_0 = arith.constant 0 : i32
    %c0_i32_1 = arith.constant 0 : i32
    return %c0_i32, %c0_i32_0 : i32, i32
  }
  func.func @transform_13(%arg0: i32) -> (i32, i32) {
    %c0_i32 = arith.constant 0 : i32
    %c0_i32_0 = arith.constant 0 : i32
    %c0_i32_1 = arith.constant 0 : i32
    return %c0_i32, %c0_i32_0 : i32, i32
  }
  func.func @transform_14(%arg0: i32) -> (i32, i32) {
    %c0_i32 = arith.constant 0 : i32
    %c0_i32_0 = arith.constant 0 : i32
    %c0_i32_1 = arith.constant 0 : i32
    return %c0_i32, %c0_i32_0 : i32, i32
  }
  func.func @transform_15(%arg0: i32) -> (i32, i32) {
    %c0_i32 = arith.constant 0 : i32
    %c0_i32_0 = arith.constant 0 : i32
    return %arg0, %c0_i32 : i32, i32
  }
}

</mosaic_0001>

<llo_original>
// kernel: tpu_custom_call.1
$region0: #{tpu_custom_call.1}
  #allocation0 [shape = 'u32[]', space=smem, size = 0x4, offset = 0x4, fixed_abs, tag = 'smem constant byte address 0x4 - core index']
  #allocation1 [shape = 'u32[144,128]{1,0:T(1,128)}', space=vmem, size = 0x12000, scoped, tag = 'internal scratch']
  %s0 = inlined_call_operand.vmem [shape: f32[2048,8], index: 0, kind: input, shape index: {}]
  %s1 = inlined_call_operand.vmem [shape: f32[8,128], index: 1, kind: input, shape index: {}]
  %s2 = inlined_call_operand.vmem [shape: f32[1,128], index: 2, kind: input, shape index: {}]
  %s3 = inlined_call_operand.vmem [shape: f32[64,1024], index: 3, kind: input, shape index: {}]
  %s4 = inlined_call_operand.vmem [shape: f32[128,128], index: 4, kind: input, shape index: {}]
  %s5 = inlined_call_operand.vmem [shape: f32[1,128], index: 5, kind: input, shape index: {}]
  %s6 = inlined_call_operand.vmem [shape: f32[16,64], index: 6, kind: input, shape index: {}]
  %s7 = inlined_call_operand.vmem [shape: f32[128,128], index: 7, kind: input, shape index: {}]
  %s8 = inlined_call_operand.vmem [shape: f32[1,128], index: 8, kind: input, shape index: {}]
  %s9 = inlined_call_operand.vmem [shape: f32[4,16], index: 9, kind: input, shape index: {}]
  %s10 = inlined_call_operand.vmem [shape: f32[64,16], index: 10, kind: input, shape index: {}]
  %s11 = inlined_call_operand.vmem [shape: f32[64,4], index: 11, kind: input, shape index: {}]
  %s12 = inlined_call_operand.vmem [shape: f32[128,128], index: 12, kind: input, shape index: {}]
  %s13 = inlined_call_operand.vmem [shape: f32[128,128], index: 13, kind: input, shape index: {}]
  %s14 = inlined_call_operand.vmem [shape: f32[128,128], index: 14, kind: input, shape index: {}]
  %s15 = inlined_call_operand.hbm [shape: f32[128,128], index: 15, kind: output, shape index: {}]
  %s16 = sld [smem:[#allocation0]]
  $region93: #{tpu_custom_call.1} parent=0
    _
  %s18 = ssub.s32 1, %s16
  %s19 = scalar_select 0, %s18, %s16
  $region1: #{tpu_custom_call.1} parent=0
    #allocation2 [shape = 'u8[65536]{0}', space=vmem, size = 0x10000, scoped, tag = 'output window, operand 0']
    #allocation3 [shape = 's32[2]{0}', space=sflag, size = 0x8, scoped, tag = 'scoped memory for tpu_custom_call.1']
    %20 = vsyncpa [#allocation3], 0
    %s21 = scalar_lea.sflag [#allocation3], 1
    %22 = vsyncpa %s21, 0
    loop: start=0, step=1, limit=4
    $region2: #{tpu_custom_call.1} parent=1 // loop_pre_header
      _
    $region3: #{tpu_custom_call.1} parent=1 // loop_header
      %s24 = sphi 0, %s28
      %p25 = scmp.ge.s32.totalorder %s24, 4
      %s34 = sphi 0, %s36
      %s37 = sphi 0, %s34
      %s38 = sphi 0, %s37
      %s54 = sphi 0, %s38
      %s58 = sphi 0, %s58
      %s60 = sphi 0, %s58
      %s61 = sphi 0, %s60
      %s75 = sphi 0, %s61
      %s79 = sphi 0, %s79
      %s81 = sphi 0, %s79
      %s82 = sphi 0, %s81
      %s96 = sphi 0, %s82
      %s100 = sphi 0, %s100
      %s102 = sphi 0, %s100
      %s103 = sphi 0, %s102
      %s117 = sphi 0, %s103
      %s121 = sphi 0, %s121
      %s123 = sphi 0, %s121
      %s124 = sphi 0, %s123
      %s138 = sphi 0, %s124
      %s142 = sphi 0, %s142
      %s144 = sphi 0, %s142
      %s145 = sphi 0, %s144
      %s159 = sphi 0, %s145
      %s163 = sphi 0, %s163
      %s165 = sphi 0, %s163
      %s166 = sphi 0, %s165
      %s180 = sphi 0, %s166
      %s184 = sphi 0, %s184
      %s186 = sphi 0, %s184
      %s187 = sphi 0, %s186
      %s201 = sphi 0, %s187
      %s205 = sphi 0, %s205
      %s207 = sphi 0, %s205
      %s208 = sphi 0, %s207
      %s222 = sphi 0, %s208
      %s226 = sphi 0, %s226
      %s228 = sphi 0, %s226
      %s229 = sphi 0, %s228
      %s243 = sphi 0, %s229
      %s247 = sphi 0, %s247
      %s249 = sphi 0, %s247
      %s250 = sphi 0, %s249
      %s264 = sphi 0, %s250
      %s268 = sphi 0, %s268
      %s270 = sphi 0, %s268
      %s271 = sphi 0, %s270
      %s285 = sphi 0, %s271
      %s289 = sphi 0, %s289
      %s291 = sphi 0, %s289
      %s292 = sphi 0, %s291
      %s306 = sphi 0, %s292
      %s310 = sphi 0, %s310
      %s312 = sphi 0, %s310
      %s313 = sphi 0, %s312
      %s327 = sphi 0, %s313
      %s331 = sphi 0, %s331
      %s333 = sphi 0, %s331
      %s334 = sphi 0, %s333
      %s348 = sphi 0, %s334
      %s354 = sphi 0, %s356
      %s357 = sphi 0, %s354
      %s358 = sphi 0, %s357
      %s374 = sphi 0, %s358
    $region4: #{tpu_custom_call.1} parent=1 // loop_header_branch
      %27 = sbr.rel (%p25) target = $region8
    $region5: #{tpu_custom_call.1} parent=1 // loop_body
      %s29 = ssub.s32 %s24, 1
      %s30 = ssub.s32 %s24, 2
      %s31 = sadd.s32 %s24, 1
      %s32 = ssub.s32 %s24, %s31
      %p33 = scmp.eq.s32.totalorder %s32, 0
      %s35 = sadd.s32 %s34, 1
      %s36 = scalar_select %p33, %s34, %s35
      %p39 = pneg %p33
      %p40 = scmp.eq.s32.totalorder %s24, 1
      %p41 = por %p39, %p40
      %p42 = scmp.ne.s32.totalorder %s34, %s37
      %p43 = scmp.eq.s32.totalorder %s24, 0
      %p44 = por %p42, %p43
      %p45 = scmp.ne.s32.totalorder %s34, %s37
      %p46 = scmp.eq.s32.totalorder %s29, 1
      %p47 = por %p45, %p46
      %p48 = scmp.ne.s32.totalorder %s37, %s38
      %p49 = scmp.eq.s32.totalorder %s29, 0
      %p50 = por %p48, %p49
      %p51 = scmp.ne.s32.totalorder %s37, %s38
      %p52 = scmp.eq.s32.totalorder %s30, 1
      %p53 = por %p51, %p52
      %p55 = scmp.ne.s32.totalorder %s38, %s54
      %p56 = scmp.eq.s32.totalorder %s30, 0
      %p57 = por %p55, %p56
      %s59 = sadd.s32 %s58, 1
      %p62 = scmp.eq.s32.totalorder %s24, 1
      %p63 = scmp.ne.s32.totalorder %s58, %s60
      %p64 = scmp.eq.s32.totalorder %s24, 0
      %p65 = por %p63, %p64
      %p66 = scmp.ne.s32.totalorder %s58, %s60
      %p67 = scmp.eq.s32.totalorder %s29, 1
      %p68 = por %p66, %p67
      %p69 = scmp.ne.s32.totalorder %s60, %s61
      %p70 = scmp.eq.s32.totalorder %s29, 0
      %p71 = por %p69, %p70
      %p72 = scmp.ne.s32.totalorder %s60, %s61
      %p73 = scmp.eq.s32.totalorder %s30, 1
      %p74 = por %p72, %p73
      %p76 = scmp.ne.s32.totalorder %s61, %s75
      %p77 = scmp.eq.s32.totalorder %s30, 0
      %p78 = por %p76, %p77
      %s80 = sadd.s32 %s79, 1
      %p83 = scmp.eq.s32.totalorder %s24, 1
      %p84 = scmp.ne.s32.totalorder %s79, %s81
      %p85 = scmp.eq.s32.totalorder %s24, 0
      %p86 = por %p84, %p85
      %p87 = scmp.ne.s32.totalorder %s79, %s81
      %p88 = scmp.eq.s32.totalorder %s29, 1
      %p89 = por %p87, %p88
      %p90 = scmp.ne.s32.totalorder %s81, %s82
      %p91 = scmp.eq.s32.totalorder %s29, 0
      %p92 = por %p90, %p91
      %p93 = scmp.ne.s32.totalorder %s81, %s82
      %p94 = scmp.eq.s32.totalorder %s30, 1
      %p95 = por %p93, %p94
      %p97 = scmp.ne.s32.totalorder %s82, %s96
      %p98 = scmp.eq.s32.totalorder %s30, 0
      %p99 = por %p97, %p98
      %s101 = sadd.s32 %s100, 1
      %p104 = scmp.eq.s32.totalorder %s24, 1
      %p105 = scmp.ne.s32.totalorder %s100, %s102
      %p106 = scmp.eq.s32.totalorder %s24, 0
      %p107 = por %p105, %p106
      %p108 = scmp.ne.s32.totalorder %s100, %s102
      %p109 = scmp.eq.s32.totalorder %s29, 1
      %p110 = por %p108, %p109
      %p111 = scmp.ne.s32.totalorder %s102, %s103
      %p112 = scmp.eq.s32.totalorder %s29, 0
      %p113 = por %p111, %p112
      %p114 = scmp.ne.s32.totalorder %s102, %s103
      %p115 = scmp.eq.s32.totalorder %s30, 1
      %p116 = por %p114, %p115
      %p118 = scmp.ne.s32.totalorder %s103, %s117
      %p119 = scmp.eq.s32.totalorder %s30, 0
      %p120 = por %p118, %p119
      %s122 = sadd.s32 %s121, 1
      %p125 = scmp.eq.s32.totalorder %s24, 1
      %p126 = scmp.ne.s32.totalorder %s121, %s123
      %p127 = scmp.eq.s32.totalorder %s24, 0
      %p128 = por %p126, %p127
      %p129 = scmp.ne.s32.totalorder %s121, %s123
      %p130 = scmp.eq.s32.totalorder %s29, 1
      %p131 = por %p129, %p130
      %p132 = scmp.ne.s32.totalorder %s123, %s124
      %p133 = scmp.eq.s32.totalorder %s29, 0
      %p134 = por %p132, %p133
      %p135 = scmp.ne.s32.totalorder %s123, %s124
      %p136 = scmp.eq.s32.totalorder %s30, 1
      %p137 = por %p135, %p136
      %p139 = scmp.ne.s32.totalorder %s124, %s138
      %p140 = scmp.eq.s32.totalorder %s30, 0
      %p141 = por %p139, %p140
      %s143 = sadd.s32 %s142, 1
      %p146 = scmp.eq.s32.totalorder %s24, 1
      %p147 = scmp.ne.s32.totalorder %s142, %s144
      %p148 = scmp.eq.s32.totalorder %s24, 0
      %p149 = por %p147, %p148
      %p150 = scmp.ne.s32.totalorder %s142, %s144
      %p151 = scmp.eq.s32.totalorder %s29, 1
      %p152 = por %p150, %p151
      %p153 = scmp.ne.s32.totalorder %s144, %s145
      %p154 = scmp.eq.s32.totalorder %s29, 0
      %p155 = por %p153, %p154
      %p156 = scmp.ne.s32.totalorder %s144, %s145
      %p157 = scmp.eq.s32.totalorder %s30, 1
      %p158 = por %p156, %p157
      %p160 = scmp.ne.s32.totalorder %s145, %s159
      %p161 = scmp.eq.s32.totalorder %s30, 0
      %p162 = por %p160, %p161
      %s164 = sadd.s32 %s163, 1
      %p167 = scmp.eq.s32.totalorder %s24, 1
      %p168 = scmp.ne.s32.totalorder %s163, %s165
      %p169 = scmp.eq.s32.totalorder %s24, 0
      %p170 = por %p168, %p169
      %p171 = scmp.ne.s32.totalorder %s163, %s165
      %p172 = scmp.eq.s32.totalorder %s29, 1
      %p173 = por %p171, %p172
      %p174 = scmp.ne.s32.totalorder %s165, %s166
      %p175 = scmp.eq.s32.totalorder %s29, 0
      %p176 = por %p174, %p175
      %p177 = scmp.ne.s32.totalorder %s165, %s166
      %p178 = scmp.eq.s32.totalorder %s30, 1
      %p179 = por %p177, %p178
      %p181 = scmp.ne.s32.totalorder %s166, %s180
      %p182 = scmp.eq.s32.totalorder %s30, 0
      %p183 = por %p181, %p182
      %s185 = sadd.s32 %s184, 1
      %p188 = scmp.eq.s32.totalorder %s24, 1
      %p189 = scmp.ne.s32.totalorder %s184, %s186
      %p190 = scmp.eq.s32.totalorder %s24, 0
      %p191 = por %p189, %p190
      %p192 = scmp.ne.s32.totalorder %s184, %s186
      %p193 = scmp.eq.s32.totalorder %s29, 1
      %p194 = por %p192, %p193
      %p195 = scmp.ne.s32.totalorder %s186, %s187
      %p196 = scmp.eq.s32.totalorder %s29, 0
      %p197 = por %p195, %p196
      %p198 = scmp.ne.s32.totalorder %s186, %s187
      %p199 = scmp.eq.s32.totalorder %s30, 1
      %p200 = por %p198, %p199
      %p202 = scmp.ne.s32.totalorder %s187, %s201
      %p203 = scmp.eq.s32.totalorder %s30, 0
      %p204 = por %p202, %p203
      %s206 = sadd.s32 %s205, 1
      %p209 = scmp.eq.s32.totalorder %s24, 1
      %p210 = scmp.ne.s32.totalorder %s205, %s207
      %p211 = scmp.eq.s32.totalorder %s24, 0
      %p212 = por %p210, %p211
      %p213 = scmp.ne.s32.totalorder %s205, %s207
      %p214 = scmp.eq.s32.totalorder %s29, 1
      %p215 = por %p213, %p214
      %p216 = scmp.ne.s32.totalorder %s207, %s208
      %p217 = scmp.eq.s32.totalorder %s29, 0
      %p218 = por %p216, %p217
      %p219 = scmp.ne.s32.totalorder %s207, %s208
      %p220 = scmp.eq.s32.totalorder %s30, 1
      %p221 = por %p219, %p220
      %p223 = scmp.ne.s32.totalorder %s208, %s222
      %p224 = scmp.eq.s32.totalorder %s30, 0
      %p225 = por %p223, %p224
      %s227 = sadd.s32 %s226, 1
      %p230 = scmp.eq.s32.totalorder %s24, 1
      %p231 = scmp.ne.s32.totalorder %s226, %s228
      %p232 = scmp.eq.s32.totalorder %s24, 0
      %p233 = por %p231, %p232
      %p234 = scmp.ne.s32.totalorder %s226, %s228
      %p235 = scmp.eq.s32.totalorder %s29, 1
      %p236 = por %p234, %p235
      %p237 = scmp.ne.s32.totalorder %s228, %s229
      %p238 = scmp.eq.s32.totalorder %s29, 0
      %p239 = por %p237, %p238
      %p240 = scmp.ne.s32.totalorder %s228, %s229
      %p241 = scmp.eq.s32.totalorder %s30, 1
      %p242 = por %p240, %p241
      %p244 = scmp.ne.s32.totalorder %s229, %s243
      %p245 = scmp.eq.s32.totalorder %s30, 0
      %p246 = por %p244, %p245
      %s248 = sadd.s32 %s247, 1
      %p251 = scmp.eq.s32.totalorder %s24, 1
      %p252 = scmp.ne.s32.totalorder %s247, %s249
      %p253 = scmp.eq.s32.totalorder %s24, 0
      %p254 = por %p252, %p253
      %p255 = scmp.ne.s32.totalorder %s247, %s249
      %p256 = scmp.eq.s32.totalorder %s29, 1
      %p257 = por %p255, %p256
      %p258 = scmp.ne.s32.totalorder %s249, %s250
      %p259 = scmp.eq.s32.totalorder %s29, 0
      %p260 = por %p258, %p259
      %p261 = scmp.ne.s32.totalorder %s249, %s250
      %p262 = scmp.eq.s32.totalorder %s30, 1
      %p263 = por %p261, %p262
      %p265 = scmp.ne.s32.totalorder %s250, %s264
      %p266 = scmp.eq.s32.totalorder %s30, 0
      %p267 = por %p265, %p266
      %s269 = sadd.s32 %s268, 1
      %p272 = scmp.eq.s32.totalorder %s24, 1
      %p273 = scmp.ne.s32.totalorder %s268, %s270
      %p274 = scmp.eq.s32.totalorder %s24, 0
      %p275 = por %p273, %p274
      %p276 = scmp.ne.s32.totalorder %s268, %s270
      %p277 = scmp.eq.s32.totalorder %s29, 1
      %p278 = por %p276, %p277
      %p279 = scmp.ne.s32.totalorder %s270, %s271
      %p280 = scmp.eq.s32.totalorder %s29, 0
      %p281 = por %p279, %p280
      %p282 = scmp.ne.s32.totalorder %s270, %s271
      %p283 = scmp.eq.s32.totalorder %s30, 1
      %p284 = por %p282, %p283
      %p286 = scmp.ne.s32.totalorder %s271, %s285
      %p287 = scmp.eq.s32.totalorder %s30, 0
      %p288 = por %p286, %p287
      %s290 = sadd.s32 %s289, 1
      %p293 = scmp.eq.s32.totalorder %s24, 1
      %p294 = scmp.ne.s32.totalorder %s289, %s291
      %p295 = scmp.eq.s32.totalorder %s24, 0
      %p296 = por %p294, %p295
      %p297 = scmp.ne.s32.totalorder %s289, %s291
      %p298 = scmp.eq.s32.totalorder %s29, 1
      %p299 = por %p297, %p298
      %p300 = scmp.ne.s32.totalorder %s291, %s292
      %p301 = scmp.eq.s32.totalorder %s29, 0
      %p302 = por %p300, %p301
      %p303 = scmp.ne.s32.totalorder %s291, %s292
      %p304 = scmp.eq.s32.totalorder %s30, 1
      %p305 = por %p303, %p304
      %p307 = scmp.ne.s32.totalorder %s292, %s306
      %p308 = scmp.eq.s32.totalorder %s30, 0
      %p309 = por %p307, %p308
      %s311 = sadd.s32 %s310, 1
      %p314 = scmp.eq.s32.totalorder %s24, 1
      %p315 = scmp.ne.s32.totalorder %s310, %s312
      %p316 = scmp.eq.s32.totalorder %s24, 0
      %p317 = por %p315, %p316
      %p318 = scmp.ne.s32.totalorder %s310, %s312
      %p319 = scmp.eq.s32.totalorder %s29, 1
      %p320 = por %p318, %p319
      %p321 = scmp.ne.s32.totalorder %s312, %s313
      %p322 = scmp.eq.s32.totalorder %s29, 0
      %p323 = por %p321, %p322
      %p324 = scmp.ne.s32.totalorder %s312, %s313
      %p325 = scmp.eq.s32.totalorder %s30, 1
      %p326 = por %p324, %p325
      %p328 = scmp.ne.s32.totalorder %s313, %s327
      %p329 = scmp.eq.s32.totalorder %s30, 0
      %p330 = por %p328, %p329
      %s332 = sadd.s32 %s331, 1
      %p335 = scmp.eq.s32.totalorder %s24, 1
      %p336 = scmp.ne.s32.totalorder %s331, %s333
      %p337 = scmp.eq.s32.totalorder %s24, 0
      %p338 = por %p336, %p337
      %p339 = scmp.ne.s32.totalorder %s331, %s333
      %p340 = scmp.eq.s32.totalorder %s29, 1
      %p341 = por %p339, %p340
      %p342 = scmp.ne.s32.totalorder %s333, %s334
      %p343 = scmp.eq.s32.totalorder %s29, 0
      %p344 = por %p342, %p343
      %p345 = scmp.ne.s32.totalorder %s333, %s334
      %p346 = scmp.eq.s32.totalorder %s30, 1
      %p347 = por %p345, %p346
      %p349 = scmp.ne.s32.totalorder %s334, %s348
      %p350 = scmp.eq.s32.totalorder %s30, 0
      %p351 = por %p349, %p350
      %s352 = ssub.s32 %s24, %s31
      %p353 = scmp.eq.s32.totalorder %s352, 0
      %s355 = sadd.s32 %s354, 1
      %s356 = scalar_select %p353, %s354, %s355
      %p359 = pneg %p353
      %p360 = scmp.eq.s32.totalorder %s24, 1
      %p361 = por %p359, %p360
      %p362 = scmp.ne.s32.totalorder %s354, %s357
      %p363 = scmp.eq.s32.totalorder %s24, 0
      %p364 = por %p362, %p363
      %p365 = scmp.ne.s32.totalorder %s354, %s357
      %p366 = scmp.eq.s32.totalorder %s29, 1
      %p367 = por %p365, %p366
      %p368 = scmp.ne.s32.totalorder %s357, %s358
      %p369 = scmp.eq.s32.totalorder %s29, 0
      %p370 = por %p368, %p369
      %p371 = scmp.ne.s32.totalorder %s357, %s358
      %p372 = scmp.eq.s32.totalorder %s30, 1
      %p373 = por %p371, %p372
      %p375 = scmp.ne.s32.totalorder %s358, %s374
      %p376 = scmp.eq.s32.totalorder %s30, 0
      %p377 = por %p375, %p376
      %p378 = scmp.le.s32.totalorder 1, %s24
      %p379 = scmp.lt.s32.totalorder %s24, 3
      %p380 = pnand %p378, %p379
      %p381 = pneg %p380
      // Predicated region
      $region9: #{tpu_custom_call.1} parent=5 // pred_check
        _
      $region10: #{tpu_custom_call.1} parent=5 // pred_check_branch
        %383 = sbr.rel (%p380) target = $region12
      $region11: #{tpu_custom_call.1} parent=5 // pred_region
        %s384 = ssub.s32 %s24, 1
        // Predicated region
        $region13: #{tpu_custom_call.1} parent=11 // pred_check
          %p385 = pneg %p71
        $region14: #{tpu_custom_call.1} parent=11 // pred_check_branch
          %387 = sbr.rel (%p385) target = $region16
        $region15: #{tpu_custom_call.1} parent=11 // pred_region
          _
        $region16: #{tpu_custom_call.1} parent=11 // pred_fallthru
          _
        // Predicated region
        $region17: #{tpu_custom_call.1} parent=11 // pred_check
          %p388 = pneg %p92
        $region18: #{tpu_custom_call.1} parent=11 // pred_check_branch
          %390 = sbr.rel (%p388) target = $region20
        $region19: #{tpu_custom_call.1} parent=11 // pred_region
          _
        $region20: #{tpu_custom_call.1} parent=11 // pred_fallthru
          _
        // Predicated region
        $region21: #{tpu_custom_call.1} parent=11 // pred_check
          %p391 = pneg %p113
        $region22: #{tpu_custom_call.1} parent=11 // pred_check_branch
          %393 = sbr.rel (%p391) target = $region24
        $region23: #{tpu_custom_call.1} parent=11 // pred_region
          _
        $region24: #{tpu_custom_call.1} parent=11 // pred_fallthru
          _
        // Predicated region
        $region25: #{tpu_custom_call.1} parent=11 // pred_check
          %p394 = pneg %p134
        $region26: #{tpu_custom_call.1} parent=11 // pred_check_branch
          %396 = sbr.rel (%p394) target = $region28
        $region27: #{tpu_custom_call.1} parent=11 // pred_region
          _
        $region28: #{tpu_custom_call.1} parent=11 // pred_fallthru
          _
        // Predicated region
        $region29: #{tpu_custom_call.1} parent=11 // pred_check
          %p397 = pneg %p155
        $region30: #{tpu_custom_call.1} parent=11 // pred_check_branch
          %399 = sbr.rel (%p397) target = $region32
        $region31: #{tpu_custom_call.1} parent=11 // pred_region
          _
        $region32: #{tpu_custom_call.1} parent=11 // pred_fallthru
          _
        // Predicated region
        $region33: #{tpu_custom_call.1} parent=11 // pred_check
          %p400 = pneg %p176
        $region34: #{tpu_custom_call.1} parent=11 // pred_check_branch
          %402 = sbr.rel (%p400) target = $region36
        $region35: #{tpu_custom_call.1} parent=11 // pred_region
          _
        $region36: #{tpu_custom_call.1} parent=11 // pred_fallthru
          _
        // Predicated region
        $region37: #{tpu_custom_call.1} parent=11 // pred_check
          %p403 = pneg %p197
        $region38: #{tpu_custom_call.1} parent=11 // pred_check_branch
          %405 = sbr.rel (%p403) target = $region40
        $region39: #{tpu_custom_call.1} parent=11 // pred_region
          _
        $region40: #{tpu_custom_call.1} parent=11 // pred_fallthru
          _
        // Predicated region
        $region41: #{tpu_custom_call.1} parent=11 // pred_check
          %p406 = pneg %p218
        $region42: #{tpu_custom_call.1} parent=11 // pred_check_branch
          %408 = sbr.rel (%p406) target = $region44
        $region43: #{tpu_custom_call.1} parent=11 // pred_region
          _
        $region44: #{tpu_custom_call.1} parent=11 // pred_fallthru
          _
        // Predicated region
        $region45: #{tpu_custom_call.1} parent=11 // pred_check
          %p409 = pneg %p239
        $region46: #{tpu_custom_call.1} parent=11 // pred_check_branch
          %411 = sbr.rel (%p409) target = $region48
        $region47: #{tpu_custom_call.1} parent=11 // pred_region
          _
        $region48: #{tpu_custom_call.1} parent=11 // pred_fallthru
          _
        // Predicated region
        $region49: #{tpu_custom_call.1} parent=11 // pred_check
          %p412 = pneg %p260
        $region50: #{tpu_custom_call.1} parent=11 // pred_check_branch
          %414 = sbr.rel (%p412) target = $region52
        $region51: #{tpu_custom_call.1} parent=11 // pred_region
          _
        $region52: #{tpu_custom_call.1} parent=11 // pred_fallthru
          _
        // Predicated region
        $region53: #{tpu_custom_call.1} parent=11 // pred_check
          %p415 = pneg %p281
        $region54: #{tpu_custom_call.1} parent=11 // pred_check_branch
          %417 = sbr.rel (%p415) target = $region56
        $region55: #{tpu_custom_call.1} parent=11 // pred_region
          _
        $region56: #{tpu_custom_call.1} parent=11 // pred_fallthru
          _
        // Predicated region
        $region57: #{tpu_custom_call.1} parent=11 // pred_check
          %p418 = pneg %p302
        $region58: #{tpu_custom_call.1} parent=11 // pred_check_branch
          %420 = sbr.rel (%p418) target = $region60
        $region59: #{tpu_custom_call.1} parent=11 // pred_region
          _
        $region60: #{tpu_custom_call.1} parent=11 // pred_fallthru
          _
        // Predicated region
        $region61: #{tpu_custom_call.1} parent=11 // pred_check
          %p421 = pneg %p323
        $region62: #{tpu_custom_call.1} parent=11 // pred_check_branch
          %423 = sbr.rel (%p421) target = $region64
        $region63: #{tpu_custom_call.1} parent=11 // pred_region
          _
        $region64: #{tpu_custom_call.1} parent=11 // pred_fallthru
          _
        // Predicated region
        $region65: #{tpu_custom_call.1} parent=11 // pred_check
          %p424 = pneg %p344
        $region66: #{tpu_custom_call.1} parent=11 // pred_check_branch
          %426 = sbr.rel (%p424) target = $region68
        $region67: #{tpu_custom_call.1} parent=11 // pred_region
          _
        $region68: #{tpu_custom_call.1} parent=11 // pred_fallthru
          _
      $region12: #{tpu_custom_call.1} parent=5 // pred_fallthru
        _
      %p427 = scmp.lt.s32.totalorder %s24, 2
      // Predicated region
      $region69: #{tpu_custom_call.1} parent=5 // pred_check
        %p428 = pneg %p427
      $region70: #{tpu_custom_call.1} parent=5 // pred_check_branch
        %430 = sbr.rel (%p428) target = $region72
      $region71: #{tpu_custom_call.1} parent=5 // pred_region
        // Predicated region
        $region73: #{tpu_custom_call.1} parent=71 // pred_check
          %p431 = pneg %p44
        $region74: #{tpu_custom_call.1} parent=71 // pred_check_branch
          %433 = sbr.rel (%p431) target = $region76
        $region75: #{tpu_custom_call.1} parent=71 // pred_region
          %s434 = smul.u32 128, %s24
          %p435 = scmp.lt.s32.totalorder %s434, 255
          %s436 = scalar_select %p435, %s434, 255
          %s437 = smul.addr %s436, 8
          %s438 = scalar_lea.vmem %s0, %s437
          %s439 = smul.u32 128, %s24
        $region76: #{tpu_custom_call.1} parent=71 // pred_fallthru
          _
      $region72: #{tpu_custom_call.1} parent=5 // pred_fallthru
        _
      %p440 = scmp.le.s32.totalorder 1, %s24
      %p441 = scmp.lt.s32.totalorder %s24, 3
      %p442 = pnand %p440, %p441
      %p443 = pneg %p442
      // Predicated region
      $region77: #{tpu_custom_call.1} parent=5 // pred_check
        _
      $region78: #{tpu_custom_call.1} parent=5 // pred_check_branch
        %445 = sbr.rel (%p442) target = $region80
      $region79: #{tpu_custom_call.1} parent=5 // pred_region
        %s446 = ssub.s32 %s24, 1
        %s447 = smul.u32 128, %s29
        %p448 = scmp.lt.s32.totalorder %s447, 255
        %s449 = scalar_select %p448, %s447, 255
        %s450 = smul.addr %s449, 8
        %s451 = scalar_lea.vmem %s0, %s450
        %p452 = pneg %p50
        %p453 = pneg %p47
        %p454 = pneg %p71
        %p455 = pneg %p68
        %p456 = pneg %p92
        %p457 = pneg %p89
        %p458 = pneg %p113
        %p459 = pneg %p110
        %p460 = pneg %p134
        %p461 = pneg %p131
        %p462 = pneg %p155
        %p463 = pneg %p152
        %p464 = pneg %p176
        %p465 = pneg %p173
        %p466 = pneg %p197
        %p467 = pneg %p194
        %p468 = pneg %p218
        %p469 = pneg %p215
        %p470 = pneg %p239
        %p471 = pneg %p236
        %p472 = pneg %p260
        %p473 = pneg %p257
        %p474 = pneg %p281
        %p475 = pneg %p278
        %p476 = pneg %p302
        %p477 = pneg %p299
        %p478 = pneg %p323
        %p479 = pneg %p320
        %p480 = pneg %p344
        %p481 = pneg %p341
        %p482 = pneg %p370
        %p483 = pneg %p367
        %s484 = sand.u32 %s357, 1
        %s485 = scalar_lea.sflag [#allocation3], %s484
        %s486 = sand.u32 %s357, 1
        %s487 = smul.addr %s486, 64
        %s488 = scalar_lea.vmem [#allocation2], %s487
        %s489 = smul.u32 128, %s29
        %p490 = scmp.lt.s32.totalorder %s489, 255
        %s491 = scalar_select %p490, %s489, 255
        %s492 = smul.addr %s491, 8
        %s493 = scalar_lea.vmem %s0, %s492
        %s494 = smul.u32 128, %s29
        %s495 = smul.u32 8, %s29
        %v496 = vld [vmem:[%s493] sm:$0xff]
        %v497 = vld [vmem:[%s493 + $0x8] sm:$0xff]
        %v498 = vld [vmem:[%s493 + $0x10] sm:$0xff]
        %v499 = vld [vmem:[%s493 + $0x18] sm:$0xff]
        %v500 = vld [vmem:[%s493 + $0x20] sm:$0xff]
        %v501 = vld [vmem:[%s493 + $0x28] sm:$0xff]
        %v502 = vld [vmem:[%s493 + $0x30] sm:$0xff]
        %v503 = vld [vmem:[%s493 + $0x38] sm:$0xff]
        %v504 = vld [vmem:[%s493 + $0x40] sm:$0xff]
        %v505 = vld [vmem:[%s493 + $0x48] sm:$0xff]
        %v506 = vld [vmem:[%s493 + $0x50] sm:$0xff]
        %v507 = vld [vmem:[%s493 + $0x58] sm:$0xff]
        %v508 = vld [vmem:[%s493 + $0x60] sm:$0xff]
        %v509 = vld [vmem:[%s493 + $0x68] sm:$0xff]
        %v510 = vld [vmem:[%s493 + $0x70] sm:$0xff]
        %v511 = vld [vmem:[%s493 + $0x78] sm:$0xff]
        %v512 = vld [vmem:[%s493 + $0x80] sm:$0xff]
        %v513 = vld [vmem:[%s493 + $0x88] sm:$0xff]
        %v514 = vld [vmem:[%s493 + $0x90] sm:$0xff]
        %v515 = vld [vmem:[%s493 + $0x98] sm:$0xff]
        %v516 = vld [vmem:[%s493 + $0xa0] sm:$0xff]
        %v517 = vld [vmem:[%s493 + $0xa8] sm:$0xff]
        %v518 = vld [vmem:[%s493 + $0xb0] sm:$0xff]
        %v519 = vld [vmem:[%s493 + $0xb8] sm:$0xff]
        %v520 = vld [vmem:[%s493 + $0xc0] sm:$0xff]
        %v521 = vld [vmem:[%s493 + $0xc8] sm:$0xff]
        %v522 = vld [vmem:[%s493 + $0xd0] sm:$0xff]
        %v523 = vld [vmem:[%s493 + $0xd8] sm:$0xff]
        %v524 = vld [vmem:[%s493 + $0xe0] sm:$0xff]
        %v525 = vld [vmem:[%s493 + $0xe8] sm:$0xff]
        %v526 = vld [vmem:[%s493 + $0xf0] sm:$0xff]
        %v527 = vld [vmem:[%s493 + $0xf8] sm:$0xff]
        %v528 = vld [vmem:[%s493 + $0x100] sm:$0xff]
        %v529 = vld [vmem:[%s493 + $0x108] sm:$0xff]
        %v530 = vld [vmem:[%s493 + $0x110] sm:$0xff]
        %v531 = vld [vmem:[%s493 + $0x118] sm:$0xff]
        %v532 = vld [vmem:[%s493 + $0x120] sm:$0xff]
        %v533 = vld [vmem:[%s493 + $0x128] sm:$0xff]
        %v534 = vld [vmem:[%s493 + $0x130] sm:$0xff]
        %v535 = vld [vmem:[%s493 + $0x138] sm:$0xff]
        %v536 = vld [vmem:[%s493 + $0x140] sm:$0xff]
        %v537 = vld [vmem:[%s493 + $0x148] sm:$0xff]
        %v538 = vld [vmem:[%s493 + $0x150] sm:$0xff]
        %v539 = vld [vmem:[%s493 + $0x158] sm:$0xff]
        %v540 = vld [vmem:[%s493 + $0x160] sm:$0xff]
        %v541 = vld [vmem:[%s493 + $0x168] sm:$0xff]
        %v542 = vld [vmem:[%s493 + $0x170] sm:$0xff]
        %v543 = vld [vmem:[%s493 + $0x178] sm:$0xff]
        %v544 = vld [vmem:[%s493 + $0x180] sm:$0xff]
        %v545 = vld [vmem:[%s493 + $0x188] sm:$0xff]
        %v546 = vld [vmem:[%s493 + $0x190] sm:$0xff]
        %v547 = vld [vmem:[%s493 + $0x198] sm:$0xff]
        %v548 = vld [vmem:[%s493 + $0x1a0] sm:$0xff]
        %v549 = vld [vmem:[%s493 + $0x1a8] sm:$0xff]
        %v550 = vld [vmem:[%s493 + $0x1b0] sm:$0xff]
        %v551 = vld [vmem:[%s493 + $0x1b8] sm:$0xff]
        %v552 = vld [vmem:[%s493 + $0x1c0] sm:$0xff]
        %v553 = vld [vmem:[%s493 + $0x1c8] sm:$0xff]
        %v554 = vld [vmem:[%s493 + $0x1d0] sm:$0xff]
        %v555 = vld [vmem:[%s493 + $0x1d8] sm:$0xff]
        %v556 = vld [vmem:[%s493 + $0x1e0] sm:$0xff]
        %v557 = vld [vmem:[%s493 + $0x1e8] sm:$0xff]
        %v558 = vld [vmem:[%s493 + $0x1f0] sm:$0xff]
        %v559 = vld [vmem:[%s493 + $0x1f8] sm:$0xff]
        %v560 = vld [vmem:[%s493 + $0x200] sm:$0xff]
        %v561 = vld [vmem:[%s493 + $0x208] sm:$0xff]
        %v562 = vld [vmem:[%s493 + $0x210] sm:$0xff]
        %v563 = vld [vmem:[%s493 + $0x218] sm:$0xff]
        %v564 = vld [vmem:[%s493 + $0x220] sm:$0xff]
        %v565 = vld [vmem:[%s493 + $0x228] sm:$0xff]
        %v566 = vld [vmem:[%s493 + $0x230] sm:$0xff]
        %v567 = vld [vmem:[%s493 + $0x238] sm:$0xff]
        %v568 = vld [vmem:[%s493 + $0x240] sm:$0xff]
        %v569 = vld [vmem:[%s493 + $0x248] sm:$0xff]
        %v570 = vld [vmem:[%s493 + $0x250] sm:$0xff]
        %v571 = vld [vmem:[%s493 + $0x258] sm:$0xff]
        %v572 = vld [vmem:[%s493 + $0x260] sm:$0xff]
        %v573 = vld [vmem:[%s493 + $0x268] sm:$0xff]
        %v574 = vld [vmem:[%s493 + $0x270] sm:$0xff]
        %v575 = vld [vmem:[%s493 + $0x278] sm:$0xff]
        %v576 = vld [vmem:[%s493 + $0x280] sm:$0xff]
        %v577 = vld [vmem:[%s493 + $0x288] sm:$0xff]
        %v578 = vld [vmem:[%s493 + $0x290] sm:$0xff]
        %v579 = vld [vmem:[%s493 + $0x298] sm:$0xff]
        %v580 = vld [vmem:[%s493 + $0x2a0] sm:$0xff]
        %v581 = vld [vmem:[%s493 + $0x2a8] sm:$0xff]
        %v582 = vld [vmem:[%s493 + $0x2b0] sm:$0xff]
        %v583 = vld [vmem:[%s493 + $0x2b8] sm:$0xff]
        %v584 = vld [vmem:[%s493 + $0x2c0] sm:$0xff]
        %v585 = vld [vmem:[%s493 + $0x2c8] sm:$0xff]
        %v586 = vld [vmem:[%s493 + $0x2d0] sm:$0xff]
        %v587 = vld [vmem:[%s493 + $0x2d8] sm:$0xff]
        %v588 = vld [vmem:[%s493 + $0x2e0] sm:$0xff]
        %v589 = vld [vmem:[%s493 + $0x2e8] sm:$0xff]
        %v590 = vld [vmem:[%s493 + $0x2f0] sm:$0xff]
        %v591 = vld [vmem:[%s493 + $0x2f8] sm:$0xff]
        %v592 = vld [vmem:[%s493 + $0x300] sm:$0xff]
        %v593 = vld [vmem:[%s493 + $0x308] sm:$0xff]
        %v594 = vld [vmem:[%s493 + $0x310] sm:$0xff]
        %v595 = vld [vmem:[%s493 + $0x318] sm:$0xff]
        %v596 = vld [vmem:[%s493 + $0x320] sm:$0xff]
        %v597 = vld [vmem:[%s493 + $0x328] sm:$0xff]
        %v598 = vld [vmem:[%s493 + $0x330] sm:$0xff]
        %v599 = vld [vmem:[%s493 + $0x338] sm:$0xff]
        %v600 = vld [vmem:[%s493 + $0x340] sm:$0xff]
        %v601 = vld [vmem:[%s493 + $0x348] sm:$0xff]
        %v602 = vld [vmem:[%s493 + $0x350] sm:$0xff]
        %v603 = vld [vmem:[%s493 + $0x358] sm:$0xff]
        %v604 = vld [vmem:[%s493 + $0x360] sm:$0xff]
        %v605 = vld [vmem:[%s493 + $0x368] sm:$0xff]
        %v606 = vld [vmem:[%s493 + $0x370] sm:$0xff]
        %v607 = vld [vmem:[%s493 + $0x378] sm:$0xff]
        %v608 = vld [vmem:[%s493 + $0x380] sm:$0xff]
        %v609 = vld [vmem:[%s493 + $0x388] sm:$0xff]
        %v610 = vld [vmem:[%s493 + $0x390] sm:$0xff]
        %v611 = vld [vmem:[%s493 + $0x398] sm:$0xff]
        %v612 = vld [vmem:[%s493 + $0x3a0] sm:$0xff]
        %v613 = vld [vmem:[%s493 + $0x3a8] sm:$0xff]
        %v614 = vld [vmem:[%s493 + $0x3b0] sm:$0xff]
        %v615 = vld [vmem:[%s493 + $0x3b8] sm:$0xff]
        %v616 = vld [vmem:[%s493 + $0x3c0] sm:$0xff]
        %v617 = vld [vmem:[%s493 + $0x3c8] sm:$0xff]
        %v618 = vld [vmem:[%s493 + $0x3d0] sm:$0xff]
        %v619 = vld [vmem:[%s493 + $0x3d8] sm:$0xff]
        %v620 = vld [vmem:[%s493 + $0x3e0] sm:$0xff]
        %v621 = vld [vmem:[%s493 + $0x3e8] sm:$0xff]
        %v622 = vld [vmem:[%s493 + $0x3f0] sm:$0xff]
        %v623 = vld [vmem:[%s493 + $0x3f8] sm:$0xff]
        %v624 = vld [vmem:[%s1] sm:$0xff]
        %v625 = vld [vmem:[%s2] sm:$0x1]
        %v627 = vlaneseq
        %v628 = vshrl.u32 %v627, 7
        %v629 = vsub.s32 0, %v628
        %v630 = vrot.slane %v625, %v629
        %vm632 = vcmask 64512
        %v634 = vsel %vm632, %v496, 0
        %v637 = vsel %vm632, %v497, 0
        %v640 = vsel %vm632, %v498, 0
        %v643 = vsel %vm632, %v499, 0
        %v646 = vsel %vm632, %v500, 0
        %v649 = vsel %vm632, %v501, 0
        %v652 = vsel %vm632, %v502, 0
        %v655 = vsel %vm632, %v503, 0
        %v658 = vsel %vm632, %v504, 0
        %v661 = vsel %vm632, %v505, 0
        %v664 = vsel %vm632, %v506, 0
        %v667 = vsel %vm632, %v507, 0
        %v670 = vsel %vm632, %v508, 0
        %v673 = vsel %vm632, %v509, 0
        %v676 = vsel %vm632, %v510, 0
        %v679 = vsel %vm632, %v511, 0
        %v682 = vsel %vm632, %v512, 0
        %v685 = vsel %vm632, %v513, 0
        %v688 = vsel %vm632, %v514, 0
        %v691 = vsel %vm632, %v515, 0
        %v694 = vsel %vm632, %v516, 0
        %v697 = vsel %vm632, %v517, 0
        %v700 = vsel %vm632, %v518, 0
        %v703 = vsel %vm632, %v519, 0
        %v706 = vsel %vm632, %v520, 0
        %v709 = vsel %vm632, %v521, 0
        %v712 = vsel %vm632, %v522, 0
        %v715 = vsel %vm632, %v523, 0
        %v718 = vsel %vm632, %v524, 0
        %v721 = vsel %vm632, %v525, 0
        %v724 = vsel %vm632, %v526, 0
        %v727 = vsel %vm632, %v527, 0
        %v730 = vsel %vm632, %v528, 0
        %v733 = vsel %vm632, %v529, 0
        %v736 = vsel %vm632, %v530, 0
        %v739 = vsel %vm632, %v531, 0
        %v742 = vsel %vm632, %v532, 0
        %v745 = vsel %vm632, %v533, 0
        %v748 = vsel %vm632, %v534, 0
        %v751 = vsel %vm632, %v535, 0
        %v754 = vsel %vm632, %v536, 0
        %v757 = vsel %vm632, %v537, 0
        %v760 = vsel %vm632, %v538, 0
        %v763 = vsel %vm632, %v539, 0
        %v766 = vsel %vm632, %v540, 0
        %v769 = vsel %vm632, %v541, 0
        %v772 = vsel %vm632, %v542, 0
        %v775 = vsel %vm632, %v543, 0
        %v778 = vsel %vm632, %v544, 0
        %v781 = vsel %vm632, %v545, 0
        %v784 = vsel %vm632, %v546, 0
        %v787 = vsel %vm632, %v547, 0
        %v790 = vsel %vm632, %v548, 0
        %v793 = vsel %vm632, %v549, 0
        %v796 = vsel %vm632, %v550, 0
        %v799 = vsel %vm632, %v551, 0
        %v802 = vsel %vm632, %v552, 0
        %v805 = vsel %vm632, %v553, 0
        %v808 = vsel %vm632, %v554, 0
        %v811 = vsel %vm632, %v555, 0
        %v814 = vsel %vm632, %v556, 0
        %v817 = vsel %vm632, %v557, 0
        %v820 = vsel %vm632, %v558, 0
        %v823 = vsel %vm632, %v559, 0
        %v826 = vsel %vm632, %v560, 0
        %v829 = vsel %vm632, %v561, 0
        %v832 = vsel %vm632, %v562, 0
        %v835 = vsel %vm632, %v563, 0
        %v838 = vsel %vm632, %v564, 0
        %v841 = vsel %vm632, %v565, 0
        %v844 = vsel %vm632, %v566, 0
        %v847 = vsel %vm632, %v567, 0
        %v850 = vsel %vm632, %v568, 0
        %v853 = vsel %vm632, %v569, 0
        %v856 = vsel %vm632, %v570, 0
        %v859 = vsel %vm632, %v571, 0
        %v862 = vsel %vm632, %v572, 0
        %v865 = vsel %vm632, %v573, 0
        %v868 = vsel %vm632, %v574, 0
        %v871 = vsel %vm632, %v575, 0
        %v874 = vsel %vm632, %v576, 0
        %v877 = vsel %vm632, %v577, 0
        %v880 = vsel %vm632, %v578, 0
        %v883 = vsel %vm632, %v579, 0
        %v886 = vsel %vm632, %v580, 0
        %v889 = vsel %vm632, %v581, 0
        %v892 = vsel %vm632, %v582, 0
        %v895 = vsel %vm632, %v583, 0
        %v898 = vsel %vm632, %v584, 0
        %v901 = vsel %vm632, %v585, 0
        %v904 = vsel %vm632, %v586, 0
        %v907 = vsel %vm632, %v587, 0
        %v910 = vsel %vm632, %v588, 0
        %v913 = vsel %vm632, %v589, 0
        %v916 = vsel %vm632, %v590, 0
        %v919 = vsel %vm632, %v591, 0
        %v922 = vsel %vm632, %v592, 0
        %v925 = vsel %vm632, %v593, 0
        %v928 = vsel %vm632, %v594, 0
        %v931 = vsel %vm632, %v595, 0
        %v934 = vsel %vm632, %v596, 0
        %v937 = vsel %vm632, %v597, 0
        %v940 = vsel %vm632, %v598, 0
        %v943 = vsel %vm632, %v599, 0
        %v946 = vsel %vm632, %v600, 0
        %v949 = vsel %vm632, %v601, 0
        %v952 = vsel %vm632, %v602, 0
        %v955 = vsel %vm632, %v603, 0
        %v958 = vsel %vm632, %v604, 0
        %v961 = vsel %vm632, %v605, 0
        %v964 = vsel %vm632, %v606, 0
        %v967 = vsel %vm632, %v607, 0
        %v970 = vsel %vm632, %v608, 0
        %v973 = vsel %vm632, %v609, 0
        %v976 = vsel %vm632, %v610, 0
        %v979 = vsel %vm632, %v611, 0
        %v982 = vsel %vm632, %v612, 0
        %v985 = vsel %vm632, %v613, 0
        %v988 = vsel %vm632, %v614, 0
        %v991 = vsel %vm632, %v615, 0
        %v994 = vsel %vm632, %v616, 0
        %v997 = vsel %vm632, %v617, 0
        %v1000 = vsel %vm632, %v618, 0
        %v1003 = vsel %vm632, %v619, 0
        %v1006 = vsel %vm632, %v620, 0
        %v1009 = vsel %vm632, %v621, 0
        %v1012 = vsel %vm632, %v622, 0
        %v1015 = vsel %vm632, %v623, 0
        %1017 = vmatprep.subr.mxu0 0.0
        %1018 = vmatpush1.msra.mxu0 %v624
        %1019 = vmatprep.subr.mxu0 0.0
        %1020 = vmatpush1.msra.mxu0 0.0
        %1021 = vmatprep.subr.mxu0 0.0
        %1022 = vmatpush1.msra.mxu0 0.0
        %1023 = vmatprep.subr.mxu0 0.0
        %1024 = vmatpush1.msra.mxu0 0.0
        %1025 = vmatprep.subr.mxu0 0.0
        %1026 = vmatpush1.msra.mxu0 0.0
        %1027 = vmatprep.subr.mxu0 0.0
        %1028 = vmatpush1.msra.mxu0 0.0
        %1029 = vmatprep.subr.mxu0 0.0
        %1030 = vmatpush1.msra.mxu0 0.0
        %1031 = vmatprep.subr.mxu0 0.0
        %1032 = vmatpush1.msra.mxu0 0.0
        %1033 = vmatprep.subr.mxu0 0.0
        %1034 = vmatpush1.msra.mxu0 0.0
        %1035 = vmatprep.subr.mxu0 0.0
        %1036 = vmatpush1.msra.mxu0 0.0
        %1037 = vmatprep.subr.mxu0 0.0
        %1038 = vmatpush1.msra.mxu0 0.0
        %1039 = vmatprep.subr.mxu0 0.0
        %1040 = vmatpush1.msra.mxu0 0.0
        %1041 = vmatprep.subr.mxu0 0.0
        %1042 = vmatpush1.msra.mxu0 0.0
        %1043 = vmatprep.subr.mxu0 0.0
        %1044 = vmatpush1.msra.mxu0 0.0
        %1045 = vmatprep.subr.mxu0 0.0
        %1046 = vmatpush1.msra.mxu0 0.0
        %1047 = vmatprep.subr.mxu0 0.0
        %1048 = vmatpush1.msra.mxu0 0.0
        %1049 = vmatprep.subr.mxu0 0.0
        %1050 = vmatpush1.msra.mxu0 0.0
        %1051 = vmatprep.subr.mxu0 0.0
        %1052 = vmatpush1.msra.mxu0 0.0
        %1053 = vmatprep.subr.mxu0 0.0
        %1054 = vmatpush1.msra.mxu0 0.0
        %1055 = vmatprep.subr.mxu0 0.0
        %1056 = vmatpush1.msra.mxu0 0.0
        %1057 = vmatprep.subr.mxu0 0.0
        %1058 = vmatpush1.msra.mxu0 0.0
        %1059 = vmatprep.subr.mxu0 0.0
        %1060 = vmatpush1.msra.mxu0 0.0
        %1061 = vmatprep.subr.mxu0 0.0
        %1062 = vmatpush1.msra.mxu0 0.0
        %1063 = vmatprep.subr.mxu0 0.0
        %1064 = vmatpush1.msra.mxu0 0.0
        %1065 = vmatprep.subr.mxu0 0.0
        %1066 = vmatpush1.msra.mxu0 0.0
        %1067 = vmatprep.subr.mxu0 0.0
        %1068 = vmatpush1.msra.mxu0 0.0
        %1069 = vmatprep.subr.mxu0 0.0
        %1070 = vmatpush1.msra.mxu0 0.0
        %1071 = vmatprep.subr.mxu0 0.0
        %1072 = vmatpush1.msra.mxu0 0.0
        %1073 = vmatprep.subr.mxu0 0.0
        %1074 = vmatpush1.msra.mxu0 0.0
        %1075 = vmatprep.subr.mxu0 0.0
        %1076 = vmatpush1.msra.mxu0 0.0
        %1077 = vmatprep.subr.mxu0 0.0
        %1078 = vmatpush1.msra.mxu0 0.0
        %1079 = vmatprep.subr.mxu0 0.0
        %1080 = vmatpush1.msra.mxu0 0.0
        %1081 = vmatprep.mubr.f32.mxu0 0.0
        %1082 = vmatmul.mubr.f32.gmra.mrb[0].mxu0 %v634
        %v1083 = vpop.f32.mrb[0].mxu0
        %v1084 = vadd.f32 %v630, %v1083
        %v1085 = vpop.f32.mrb[0].mxu0
        %1086 = vmatprep.mubr.f32.mxu0 0.0
        %1087 = vmatmul.mubr.f32.gmra.mrb[0].mxu0 %v637
        %v1088 = vpop.f32.mrb[0].mxu0
        %v1089 = vadd.f32 %v630, %v1088
        %v1090 = vpop.f32.mrb[0].mxu0
        %1091 = vmatprep.mubr.f32.mxu0 0.0
        %1092 = vmatmul.mubr.f32.gmra.mrb[0].mxu0 %v640
        %v1093 = vpop.f32.mrb[0].mxu0
        %v1094 = vadd.f32 %v630, %v1093
        %v1095 = vpop.f32.mrb[0].mxu0
        %1096 = vmatprep.mubr.f32.mxu0 0.0
        %1097 = vmatmul.mubr.f32.gmra.mrb[0].mxu0 %v643
        %v1098 = vpop.f32.mrb[0].mxu0
        %v1099 = vadd.f32 %v630, %v1098
        %v1100 = vpop.f32.mrb[0].mxu0
        %1101 = vmatprep.mubr.f32.mxu0 0.0
        %1102 = vmatmul.mubr.f32.gmra.mrb[0].mxu0 %v646
        %v1103 = vpop.f32.mrb[0].mxu0
        %v1104 = vadd.f32 %v630, %v1103
        %v1105 = vpop.f32.mrb[0].mxu0
        %1106 = vmatprep.mubr.f32.mxu0 0.0
        %1107 = vmatmul.mubr.f32.gmra.mrb[0].mxu0 %v649
        %v1108 = vpop.f32.mrb[0].mxu0
        %v1109 = vadd.f32 %v630, %v1108
        %v1110 = vpop.f32.mrb[0].mxu0
        %1111 = vmatprep.mubr.f32.mxu0 0.0
        %1112 = vmatmul.mubr.f32.gmra.mrb[0].mxu0 %v652
        %v1113 = vpop.f32.mrb[0].mxu0
        %v1114 = vadd.f32 %v630, %v1113
        %v1115 = vpop.f32.mrb[0].mxu0
        %1116 = vmatprep.mubr.f32.mxu0 0.0
        %1117 = vmatmul.mubr.f32.gmra.mrb[0].mxu0 %v655
        %v1118 = vpop.f32.mrb[0].mxu0
        %v1119 = vadd.f32 %v630, %v1118
        %v1120 = vpop.f32.mrb[0].mxu0
        %1121 = vmatprep.mubr.f32.mxu0 0.0
        %1122 = vmatmul.mubr.f32.gmra.mrb[0].mxu0 %v658
        %v1123 = vpop.f32.mrb[0].mxu0
        %v1124 = vadd.f32 %v630, %v1123
        %v1125 = vpop.f32.mrb[0].mxu0
        %1126 = vmatprep.mubr.f32.mxu0 0.0
        %1127 = vmatmul.mubr.f32.gmra.mrb[0].mxu0 %v661
        %v1128 = vpop.f32.mrb[0].mxu0
        %v1129 = vadd.f32 %v630, %v1128
        %v1130 = vpop.f32.mrb[0].mxu0
        %1131 = vmatprep.mubr.f32.mxu0 0.0
        %1132 = vmatmul.mubr.f32.gmra.mrb[0].mxu0 %v664
        %v1133 = vpop.f32.mrb[0].mxu0
        %v1134 = vadd.f32 %v630, %v1133
        %v1135 = vpop.f32.mrb[0].mxu0
        %1136 = vmatprep.mubr.f32.mxu0 0.0
        %1137 = vmatmul.mubr.f32.gmra.mrb[0].mxu0 %v667
        %v1138 = vpop.f32.mrb[0].mxu0
        %v1139 = vadd.f32 %v630, %v1138
        %v1140 = vpop.f32.mrb[0].mxu0
        %1141 = vmatprep.mubr.f32.mxu0 0.0
        %1142 = vmatmul.mubr.f32.gmra.mrb[0].mxu0 %v670
        %v1143 = vpop.f32.mrb[0].mxu0
        %v1144 = vadd.f32 %v630, %v1143
        %v1145 = vpop.f32.mrb[0].mxu0
        %1146 = vmatprep.mubr.f32.mxu0 0.0
        %1147 = vmatmul.mubr.f32.gmra.mrb[0].mxu0 %v673
        %v1148 = vpop.f32.mrb[0].mxu0
        %v1149 = vadd.f32 %v630, %v1148
        %v1150 = vpop.f32.mrb[0].mxu0
        %1151 = vmatprep.mubr.f32.mxu0 0.0
        %1152 = vmatmul.mubr.f32.gmra.mrb[0].mxu0 %v676
        %v1153 = vpop.f32.mrb[0].mxu0
        %v1154 = vadd.f32 %v630, %v1153
        %v1155 = vpop.f32.mrb[0].mxu0
        %1156 = vmatprep.mubr.f32.mxu0 0.0
        %1157 = vmatmul.mubr.f32.gmra.mrb[0].mxu0 %v679
        %v1158 = vpop.f32.mrb[0].mxu0
        %v1159 = vadd.f32 %v630, %v1158
        %v1160 = vpop.f32.mrb[0].mxu0
        %1161 = vmatprep.mubr.f32.mxu0 0.0
        %1162 = vmatmul.mubr.f32.gmra.mrb[0].mxu0 %v682
        %v1163 = vpop.f32.mrb[0].mxu0
        %v1164 = vadd.f32 %v630, %v1163
        %v1165 = vpop.f32.mrb[0].mxu0
        %1166 = vmatprep.mubr.f32.mxu0 0.0
        %1167 = vmatmul.mubr.f32.gmra.mrb[0].mxu0 %v685
        %v1168 = vpop.f32.mrb[0].mxu0
        %v1169 = vadd.f32 %v630, %v1168
        %v1170 = vpop.f32.mrb[0].mxu0
        %1171 = vmatprep.mubr.f32.mxu0 0.0
        %1172 = vmatmul.mubr.f32.gmra.mrb[0].mxu0 %v688
        %v1173 = vpop.f32.mrb[0].mxu0
        %v1174 = vadd.f32 %v630, %v1173
        %v1175 = vpop.f32.mrb[0].mxu0
        %1176 = vmatprep.mubr.f32.mxu0 0.0
        %1177 = vmatmul.mubr.f32.gmra.mrb[0].mxu0 %v691
        %v1178 = vpop.f32.mrb[0].mxu0
        %v1179 = vadd.f32 %v630, %v1178
        %v1180 = vpop.f32.mrb[0].mxu0
        %1181 = vmatprep.mubr.f32.mxu0 0.0
        %1182 = vmatmul.mubr.f32.gmra.mrb[0].mxu0 %v694
        %v1183 = vpop.f32.mrb[0].mxu0
        %v1184 = vadd.f32 %v630, %v1183
        %v1185 = vpop.f32.mrb[0].mxu0
        %1186 = vmatprep.mubr.f32.mxu0 0.0
        %1187 = vmatmul.mubr.f32.gmra.mrb[0].mxu0 %v697
        %v1188 = vpop.f32.mrb[0].mxu0
        %v1189 = vadd.f32 %v630, %v1188
        %v1190 = vpop.f32.mrb[0].mxu0
        %1191 = vmatprep.mubr.f32.mxu0 0.0
        %1192 = vmatmul.mubr.f32.gmra.mrb[0].mxu0 %v700
        %v1193 = vpop.f32.mrb[0].mxu0
        %v1194 = vadd.f32 %v630, %v1193
        %v1195 = vpop.f32.mrb[0].mxu0
        %1196 = vmatprep.mubr.f32.mxu0 0.0
        %1197 = vmatmul.mubr.f32.gmra.mrb[0].mxu0 %v703
        %v1198 = vpop.f32.mrb[0].mxu0
        %v1199 = vadd.f32 %v630, %v1198
        %v1200 = vpop.f32.mrb[0].mxu0
        %1201 = vmatprep.mubr.f32.mxu0 0.0
        %1202 = vmatmul.mubr.f32.gmra.mrb[0].mxu0 %v706
        %v1203 = vpop.f32.mrb[0].mxu0
        %v1204 = vadd.f32 %v630, %v1203
        %v1205 = vpop.f32.mrb[0].mxu0
        %1206 = vmatprep.mubr.f32.mxu0 0.0
        %1207 = vmatmul.mubr.f32.gmra.mrb[0].mxu0 %v709
        %v1208 = vpop.f32.mrb[0].mxu0
        %v1209 = vadd.f32 %v630, %v1208
        %v1210 = vpop.f32.mrb[0].mxu0
        %1211 = vmatprep.mubr.f32.mxu0 0.0
        %1212 = vmatmul.mubr.f32.gmra.mrb[0].mxu0 %v712
        %v1213 = vpop.f32.mrb[0].mxu0
        %v1214 = vadd.f32 %v630, %v1213
        %v1215 = vpop.f32.mrb[0].mxu0
        %1216 = vmatprep.mubr.f32.mxu0 0.0
        %1217 = vmatmul.mubr.f32.gmra.mrb[0].mxu0 %v715
        %v1218 = vpop.f32.mrb[0].mxu0
        %v1219 = vadd.f32 %v630, %v1218
        %v1220 = vpop.f32.mrb[0].mxu0
        %1221 = vmatprep.mubr.f32.mxu0 0.0
        %1222 = vmatmul.mubr.f32.gmra.mrb[0].mxu0 %v718
        %v1223 = vpop.f32.mrb[0].mxu0
        %v1224 = vadd.f32 %v630, %v1223
        %v1225 = vpop.f32.mrb[0].mxu0
        %1226 = vmatprep.mubr.f32.mxu0 0.0
        %1227 = vmatmul.mubr.f32.gmra.mrb[0].mxu0 %v721
        %v1228 = vpop.f32.mrb[0].mxu0
        %v1229 = vadd.f32 %v630, %v1228
        %v1230 = vpop.f32.mrb[0].mxu0
        %1231 = vmatprep.mubr.f32.mxu0 0.0
        %1232 = vmatmul.mubr.f32.gmra.mrb[0].mxu0 %v724
        %v1233 = vpop.f32.mrb[0].mxu0
        %v1234 = vadd.f32 %v630, %v1233
        %v1235 = vpop.f32.mrb[0].mxu0
        %1236 = vmatprep.mubr.f32.mxu0 0.0
        %1237 = vmatmul.mubr.f32.gmra.mrb[0].mxu0 %v727
        %v1238 = vpop.f32.mrb[0].mxu0
        %v1239 = vadd.f32 %v630, %v1238
        %v1240 = vpop.f32.mrb[0].mxu0
        %1241 = vmatprep.mubr.f32.mxu0 0.0
        %1242 = vmatmul.mubr.f32.gmra.mrb[0].mxu0 %v730
        %v1243 = vpop.f32.mrb[0].mxu0
        %v1244 = vadd.f32 %v630, %v1243
        %v1245 = vpop.f32.mrb[0].mxu0
        %1246 = vmatprep.mubr.f32.mxu0 0.0
        %1247 = vmatmul.mubr.f32.gmra.mrb[0].mxu0 %v733
        %v1248 = vpop.f32.mrb[0].mxu0
        %v1249 = vadd.f32 %v630, %v1248
        %v1250 = vpop.f32.mrb[0].mxu0
        %1251 = vmatprep.mubr.f32.mxu0 0.0
        %1252 = vmatmul.mubr.f32.gmra.mrb[0].mxu0 %v736
        %v1253 = vpop.f32.mrb[0].mxu0
        %v1254 = vadd.f32 %v630, %v1253
        %v1255 = vpop.f32.mrb[0].mxu0
        %1256 = vmatprep.mubr.f32.mxu0 0.0
        %1257 = vmatmul.mubr.f32.gmra.mrb[0].mxu0 %v739
        %v1258 = vpop.f32.mrb[0].mxu0
        %v1259 = vadd.f32 %v630, %v1258
        %v1260 = vpop.f32.mrb[0].mxu0
        %1261 = vmatprep.mubr.f32.mxu0 0.0
        %1262 = vmatmul.mubr.f32.gmra.mrb[0].mxu0 %v742
        %v1263 = vpop.f32.mrb[0].mxu0
        %v1264 = vadd.f32 %v630, %v1263
        %v1265 = vpop.f32.mrb[0].mxu0
        %1266 = vmatprep.mubr.f32.mxu0 0.0
        %1267 = vmatmul.mubr.f32.gmra.mrb[0].mxu0 %v745
        %v1268 = vpop.f32.mrb[0].mxu0
        %v1269 = vadd.f32 %v630, %v1268
        %v1270 = vpop.f32.mrb[0].mxu0
        %1271 = vmatprep.mubr.f32.mxu0 0.0
        %1272 = vmatmul.mubr.f32.gmra.mrb[0].mxu0 %v748
        %v1273 = vpop.f32.mrb[0].mxu0
        %v1274 = vadd.f32 %v630, %v1273
        %v1275 = vpop.f32.mrb[0].mxu0
        %1276 = vmatprep.mubr.f32.mxu0 0.0
        %1277 = vmatmul.mubr.f32.gmra.mrb[0].mxu0 %v751
        %v1278 = vpop.f32.mrb[0].mxu0
        %v1279 = vadd.f32 %v630, %v1278
        %v1280 = vpop.f32.mrb[0].mxu0
        %1281 = vmatprep.mubr.f32.mxu0 0.0
        %1282 = vmatmul.mubr.f32.gmra.mrb[0].mxu0 %v754
        %v1283 = vpop.f32.mrb[0].mxu0
        %v1284 = vadd.f32 %v630, %v1283
        %v1285 = vpop.f32.mrb[0].mxu0
        %1286 = vmatprep.mubr.f32.mxu0 0.0
        %1287 = vmatmul.mubr.f32.gmra.mrb[0].mxu0 %v757
        %v1288 = vpop.f32.mrb[0].mxu0
        %v1289 = vadd.f32 %v630, %v1288
        %v1290 = vpop.f32.mrb[0].mxu0
        %1291 = vmatprep.mubr.f32.mxu0 0.0
        %1292 = vmatmul.mubr.f32.gmra.mrb[0].mxu0 %v760
        %v1293 = vpop.f32.mrb[0].mxu0
        %v1294 = vadd.f32 %v630, %v1293
        %v1295 = vpop.f32.mrb[0].mxu0
        %1296 = vmatprep.mubr.f32.mxu0 0.0
        %1297 = vmatmul.mubr.f32.gmra.mrb[0].mxu0 %v763
        %v1298 = vpop.f32.mrb[0].mxu0
        %v1299 = vadd.f32 %v630, %v1298
        %v1300 = vpop.f32.mrb[0].mxu0
        %1301 = vmatprep.mubr.f32.mxu0 0.0
        %1302 = vmatmul.mubr.f32.gmra.mrb[0].mxu0 %v766
        %v1303 = vpop.f32.mrb[0].mxu0
        %v1304 = vadd.f32 %v630, %v1303
        %v1305 = vpop.f32.mrb[0].mxu0
        %1306 = vmatprep.mubr.f32.mxu0 0.0
        %1307 = vmatmul.mubr.f32.gmra.mrb[0].mxu0 %v769
        %v1308 = vpop.f32.mrb[0].mxu0
        %v1309 = vadd.f32 %v630, %v1308
        %v1310 = vpop.f32.mrb[0].mxu0
        %1311 = vmatprep.mubr.f32.mxu0 0.0
        %1312 = vmatmul.mubr.f32.gmra.mrb[0].mxu0 %v772
        %v1313 = vpop.f32.mrb[0].mxu0
        %v1314 = vadd.f32 %v630, %v1313
        %v1315 = vpop.f32.mrb[0].mxu0
        %1316 = vmatprep.mubr.f32.mxu0 0.0
        %1317 = vmatmul.mubr.f32.gmra.mrb[0].mxu0 %v775
        %v1318 = vpop.f32.mrb[0].mxu0
        %v1319 = vadd.f32 %v630, %v1318
        %v1320 = vpop.f32.mrb[0].mxu0
        %1321 = vmatprep.mubr.f32.mxu0 0.0
        %1322 = vmatmul.mubr.f32.gmra.mrb[0].mxu0 %v778
        %v1323 = vpop.f32.mrb[0].mxu0
        %v1324 = vadd.f32 %v630, %v1323
        %v1325 = vpop.f32.mrb[0].mxu0
        %1326 = vmatprep.mubr.f32.mxu0 0.0
        %1327 = vmatmul.mubr.f32.gmra.mrb[0].mxu0 %v781
        %v1328 = vpop.f32.mrb[0].mxu0
        %v1329 = vadd.f32 %v630, %v1328
        %v1330 = vpop.f32.mrb[0].mxu0
        %1331 = vmatprep.mubr.f32.mxu0 0.0
        %1332 = vmatmul.mubr.f32.gmra.mrb[0].mxu0 %v784
        %v1333 = vpop.f32.mrb[0].mxu0
        %v1334 = vadd.f32 %v630, %v1333
        %v1335 = vpop.f32.mrb[0].mxu0
        %1336 = vmatprep.mubr.f32.mxu0 0.0
        %1337 = vmatmul.mubr.f32.gmra.mrb[0].mxu0 %v787
        %v1338 = vpop.f32.mrb[0].mxu0
        %v1339 = vadd.f32 %v630, %v1338
        %v1340 = vpop.f32.mrb[0].mxu0
        %1341 = vmatprep.mubr.f32.mxu0 0.0
        %1342 = vmatmul.mubr.f32.gmra.mrb[0].mxu0 %v790
        %v1343 = vpop.f32.mrb[0].mxu0
        %v1344 = vadd.f32 %v630, %v1343
        %v1345 = vpop.f32.mrb[0].mxu0
        %1346 = vmatprep.mubr.f32.mxu0 0.0
        %1347 = vmatmul.mubr.f32.gmra.mrb[0].mxu0 %v793
        %v1348 = vpop.f32.mrb[0].mxu0
        %v1349 = vadd.f32 %v630, %v1348
        %v1350 = vpop.f32.mrb[0].mxu0
        %1351 = vmatprep.mubr.f32.mxu0 0.0
        %1352 = vmatmul.mubr.f32.gmra.mrb[0].mxu0 %v796
        %v1353 = vpop.f32.mrb[0].mxu0
        %v1354 = vadd.f32 %v630, %v1353
        %v1355 = vpop.f32.mrb[0].mxu0
        %1356 = vmatprep.mubr.f32.mxu0 0.0
        %1357 = vmatmul.mubr.f32.gmra.mrb[0].mxu0 %v799
        %v1358 = vpop.f32.mrb[0].mxu0
        %v1359 = vadd.f32 %v630, %v1358
        %v1360 = vpop.f32.mrb[0].mxu0
        %1361 = vmatprep.mubr.f32.mxu0 0.0
        %1362 = vmatmul.mubr.f32.gmra.mrb[0].mxu0 %v802
        %v1363 = vpop.f32.mrb[0].mxu0
        %v1364 = vadd.f32 %v630, %v1363
        %v1365 = vpop.f32.mrb[0].mxu0
        %1366 = vmatprep.mubr.f32.mxu0 0.0
        %1367 = vmatmul.mubr.f32.gmra.mrb[0].mxu0 %v805
        %v1368 = vpop.f32.mrb[0].mxu0
        %v1369 = vadd.f32 %v630, %v1368
        %v1370 = vpop.f32.mrb[0].mxu0
        %1371 = vmatprep.mubr.f32.mxu0 0.0
        %1372 = vmatmul.mubr.f32.gmra.mrb[0].mxu0 %v808
        %v1373 = vpop.f32.mrb[0].mxu0
        %v1374 = vadd.f32 %v630, %v1373
        %v1375 = vpop.f32.mrb[0].mxu0
        %1376 = vmatprep.mubr.f32.mxu0 0.0
        %1377 = vmatmul.mubr.f32.gmra.mrb[0].mxu0 %v811
        %v1378 = vpop.f32.mrb[0].mxu0
        %v1379 = vadd.f32 %v630, %v1378
        %v1380 = vpop.f32.mrb[0].mxu0
        %1381 = vmatprep.mubr.f32.mxu0 0.0
        %1382 = vmatmul.mubr.f32.gmra.mrb[0].mxu0 %v814
        %v1383 = vpop.f32.mrb[0].mxu0
        %v1384 = vadd.f32 %v630, %v1383
        %v1385 = vpop.f32.mrb[0].mxu0
        %1386 = vmatprep.mubr.f32.mxu0 0.0
        %1387 = vmatmul.mubr.f32.gmra.mrb[0].mxu0 %v817
        %v1388 = vpop.f32.mrb[0].mxu0
        %v1389 = vadd.f32 %v630, %v1388
        %v1390 = vpop.f32.mrb[0].mxu0
        %1391 = vmatprep.mubr.f32.mxu0 0.0
        %1392 = vmatmul.mubr.f32.gmra.mrb[0].mxu0 %v820
        %v1393 = vpop.f32.mrb[0].mxu0
        %v1394 = vadd.f32 %v630, %v1393
        %v1395 = vpop.f32.mrb[0].mxu0
        %1396 = vmatprep.mubr.f32.mxu0 0.0
        %1397 = vmatmul.mubr.f32.gmra.mrb[0].mxu0 %v823
        %v1398 = vpop.f32.mrb[0].mxu0
        %v1399 = vadd.f32 %v630, %v1398
        %v1400 = vpop.f32.mrb[0].mxu0
        %1401 = vmatprep.mubr.f32.mxu0 0.0
        %1402 = vmatmul.mubr.f32.gmra.mrb[0].mxu0 %v826
        %v1403 = vpop.f32.mrb[0].mxu0
        %v1404 = vadd.f32 %v630, %v1403
        %v1405 = vpop.f32.mrb[0].mxu0
        %1406 = vmatprep.mubr.f32.mxu0 0.0
        %1407 = vmatmul.mubr.f32.gmra.mrb[0].mxu0 %v829
        %v1408 = vpop.f32.mrb[0].mxu0
        %v1409 = vadd.f32 %v630, %v1408
        %v1410 = vpop.f32.mrb[0].mxu0
        %1411 = vmatprep.mubr.f32.mxu0 0.0
        %1412 = vmatmul.mubr.f32.gmra.mrb[0].mxu0 %v832
        %v1413 = vpop.f32.mrb[0].mxu0
        %v1414 = vadd.f32 %v630, %v1413
        %v1415 = vpop.f32.mrb[0].mxu0
        %1416 = vmatprep.mubr.f32.mxu0 0.0
        %1417 = vmatmul.mubr.f32.gmra.mrb[0].mxu0 %v835
        %v1418 = vpop.f32.mrb[0].mxu0
        %v1419 = vadd.f32 %v630, %v1418
        %v1420 = vpop.f32.mrb[0].mxu0
        %1421 = vmatprep.mubr.f32.mxu0 0.0
        %1422 = vmatmul.mubr.f32.gmra.mrb[0].mxu0 %v838
        %v1423 = vpop.f32.mrb[0].mxu0
        %v1424 = vadd.f32 %v630, %v1423
        %v1425 = vpop.f32.mrb[0].mxu0
        %1426 = vmatprep.mubr.f32.mxu0 0.0
        %1427 = vmatmul.mubr.f32.gmra.mrb[0].mxu0 %v841
        %v1428 = vpop.f32.mrb[0].mxu0
        %v1429 = vadd.f32 %v630, %v1428
        %v1430 = vpop.f32.mrb[0].mxu0
        %1431 = vmatprep.mubr.f32.mxu0 0.0
        %1432 = vmatmul.mubr.f32.gmra.mrb[0].mxu0 %v844
        %v1433 = vpop.f32.mrb[0].mxu0
        %v1434 = vadd.f32 %v630, %v1433
        %v1435 = vpop.f32.mrb[0].mxu0
        %1436 = vmatprep.mubr.f32.mxu0 0.0
        %1437 = vmatmul.mubr.f32.gmra.mrb[0].mxu0 %v847
        %v1438 = vpop.f32.mrb[0].mxu0
        %v1439 = vadd.f32 %v630, %v1438
        %v1440 = vpop.f32.mrb[0].mxu0
        %1441 = vmatprep.mubr.f32.mxu0 0.0
        %1442 = vmatmul.mubr.f32.gmra.mrb[0].mxu0 %v850
        %v1443 = vpop.f32.mrb[0].mxu0
        %v1444 = vadd.f32 %v630, %v1443
        %v1445 = vpop.f32.mrb[0].mxu0
        %1446 = vmatprep.mubr.f32.mxu0 0.0
        %1447 = vmatmul.mubr.f32.gmra.mrb[0].mxu0 %v853
        %v1448 = vpop.f32.mrb[0].mxu0
        %v1449 = vadd.f32 %v630, %v1448
        %v1450 = vpop.f32.mrb[0].mxu0
        %1451 = vmatprep.mubr.f32.mxu0 0.0
        %1452 = vmatmul.mubr.f32.gmra.mrb[0].mxu0 %v856
        %v1453 = vpop.f32.mrb[0].mxu0
        %v1454 = vadd.f32 %v630, %v1453
        %v1455 = vpop.f32.mrb[0].mxu0
        %1456 = vmatprep.mubr.f32.mxu0 0.0
        %1457 = vmatmul.mubr.f32.gmra.mrb[0].mxu0 %v859
        %v1458 = vpop.f32.mrb[0].mxu0
        %v1459 = vadd.f32 %v630, %v1458
        %v1460 = vpop.f32.mrb[0].mxu0
        %1461 = vmatprep.mubr.f32.mxu0 0.0
        %1462 = vmatmul.mubr.f32.gmra.mrb[0].mxu0 %v862
        %v1463 = vpop.f32.mrb[0].mxu0
        %v1464 = vadd.f32 %v630, %v1463
        %v1465 = vpop.f32.mrb[0].mxu0
        %1466 = vmatprep.mubr.f32.mxu0 0.0
        %1467 = vmatmul.mubr.f32.gmra.mrb[0].mxu0 %v865
        %v1468 = vpop.f32.mrb[0].mxu0
        %v1469 = vadd.f32 %v630, %v1468
        %v1470 = vpop.f32.mrb[0].mxu0
        %1471 = vmatprep.mubr.f32.mxu0 0.0
        %1472 = vmatmul.mubr.f32.gmra.mrb[0].mxu0 %v868
        %v1473 = vpop.f32.mrb[0].mxu0
        %v1474 = vadd.f32 %v630, %v1473
        %v1475 = vpop.f32.mrb[0].mxu0
        %1476 = vmatprep.mubr.f32.mxu0 0.0
        %1477 = vmatmul.mubr.f32.gmra.mrb[0].mxu0 %v871
        %v1478 = vpop.f32.mrb[0].mxu0
        %v1479 = vadd.f32 %v630, %v1478
        %v1480 = vpop.f32.mrb[0].mxu0
        %1481 = vmatprep.mubr.f32.mxu0 0.0
        %1482 = vmatmul.mubr.f32.gmra.mrb[0].mxu0 %v874
        %v1483 = vpop.f32.mrb[0].mxu0
        %v1484 = vadd.f32 %v630, %v1483
        %v1485 = vpop.f32.mrb[0].mxu0
        %1486 = vmatprep.mubr.f32.mxu0 0.0
        %1487 = vmatmul.mubr.f32.gmra.mrb[0].mxu0 %v877
        %v1488 = vpop.f32.mrb[0].mxu0
        %v1489 = vadd.f32 %v630, %v1488
        %v1490 = vpop.f32.mrb[0].mxu0
        %1491 = vmatprep.mubr.f32.mxu0 0.0
        %1492 = vmatmul.mubr.f32.gmra.mrb[0].mxu0 %v880
        %v1493 = vpop.f32.mrb[0].mxu0
        %v1494 = vadd.f32 %v630, %v1493
        %v1495 = vpop.f32.mrb[0].mxu0
        %1496 = vmatprep.mubr.f32.mxu0 0.0
        %1497 = vmatmul.mubr.f32.gmra.mrb[0].mxu0 %v883
        %v1498 = vpop.f32.mrb[0].mxu0
        %v1499 = vadd.f32 %v630, %v1498
        %v1500 = vpop.f32.mrb[0].mxu0
        %1501 = vmatprep.mubr.f32.mxu0 0.0
        %1502 = vmatmul.mubr.f32.gmra.mrb[0].mxu0 %v886
        %v1503 = vpop.f32.mrb[0].mxu0
        %v1504 = vadd.f32 %v630, %v1503
        %v1505 = vpop.f32.mrb[0].mxu0
        %1506 = vmatprep.mubr.f32.mxu0 0.0
        %1507 = vmatmul.mubr.f32.gmra.mrb[0].mxu0 %v889
        %v1508 = vpop.f32.mrb[0].mxu0
        %v1509 = vadd.f32 %v630, %v1508
        %v1510 = vpop.f32.mrb[0].mxu0
        %1511 = vmatprep.mubr.f32.mxu0 0.0
        %1512 = vmatmul.mubr.f32.gmra.mrb[0].mxu0 %v892
        %v1513 = vpop.f32.mrb[0].mxu0
        %v1514 = vadd.f32 %v630, %v1513
        %v1515 = vpop.f32.mrb[0].mxu0
        %1516 = vmatprep.mubr.f32.mxu0 0.0
        %1517 = vmatmul.mubr.f32.gmra.mrb[0].mxu0 %v895
        %v1518 = vpop.f32.mrb[0].mxu0
        %v1519 = vadd.f32 %v630, %v1518
        %v1520 = vpop.f32.mrb[0].mxu0
        %1521 = vmatprep.mubr.f32.mxu0 0.0
        %1522 = vmatmul.mubr.f32.gmra.mrb[0].mxu0 %v898
        %v1523 = vpop.f32.mrb[0].mxu0
        %v1524 = vadd.f32 %v630, %v1523
        %v1525 = vpop.f32.mrb[0].mxu0
        %1526 = vmatprep.mubr.f32.mxu0 0.0
        %1527 = vmatmul.mubr.f32.gmra.mrb[0].mxu0 %v901
        %v1528 = vpop.f32.mrb[0].mxu0
        %v1529 = vadd.f32 %v630, %v1528
        %v1530 = vpop.f32.mrb[0].mxu0
        %1531 = vmatprep.mubr.f32.mxu0 0.0
        %1532 = vmatmul.mubr.f32.gmra.mrb[0].mxu0 %v904
        %v1533 = vpop.f32.mrb[0].mxu0
        %v1534 = vadd.f32 %v630, %v1533
        %v1535 = vpop.f32.mrb[0].mxu0
        %1536 = vmatprep.mubr.f32.mxu0 0.0
        %1537 = vmatmul.mubr.f32.gmra.mrb[0].mxu0 %v907
        %v1538 = vpop.f32.mrb[0].mxu0
        %v1539 = vadd.f32 %v630, %v1538
        %v1540 = vpop.f32.mrb[0].mxu0
        %1541 = vmatprep.mubr.f32.mxu0 0.0
        %1542 = vmatmul.mubr.f32.gmra.mrb[0].mxu0 %v910
        %v1543 = vpop.f32.mrb[0].mxu0
        %v1544 = vadd.f32 %v630, %v1543
        %v1545 = vpop.f32.mrb[0].mxu0
        %1546 = vmatprep.mubr.f32.mxu0 0.0
        %1547 = vmatmul.mubr.f32.gmra.mrb[0].mxu0 %v913
        %v1548 = vpop.f32.mrb[0].mxu0
        %v1549 = vadd.f32 %v630, %v1548
        %v1550 = vpop.f32.mrb[0].mxu0
        %1551 = vmatprep.mubr.f32.mxu0 0.0
        %1552 = vmatmul.mubr.f32.gmra.mrb[0].mxu0 %v916
        %v1553 = vpop.f32.mrb[0].mxu0
        %v1554 = vadd.f32 %v630, %v1553
        %v1555 = vpop.f32.mrb[0].mxu0
        %1556 = vmatprep.mubr.f32.mxu0 0.0
        %1557 = vmatmul.mubr.f32.gmra.mrb[0].mxu0 %v919
        %v1558 = vpop.f32.mrb[0].mxu0
        %v1559 = vadd.f32 %v630, %v1558
        %v1560 = vpop.f32.mrb[0].mxu0
        %1561 = vmatprep.mubr.f32.mxu0 0.0
        %1562 = vmatmul.mubr.f32.gmra.mrb[0].mxu0 %v922
        %v1563 = vpop.f32.mrb[0].mxu0
        %v1564 = vadd.f32 %v630, %v1563
        %v1565 = vpop.f32.mrb[0].mxu0
        %1566 = vmatprep.mubr.f32.mxu0 0.0
        %1567 = vmatmul.mubr.f32.gmra.mrb[0].mxu0 %v925
        %v1568 = vpop.f32.mrb[0].mxu0
        %v1569 = vadd.f32 %v630, %v1568
        %v1570 = vpop.f32.mrb[0].mxu0
        %1571 = vmatprep.mubr.f32.mxu0 0.0
        %1572 = vmatmul.mubr.f32.gmra.mrb[0].mxu0 %v928
        %v1573 = vpop.f32.mrb[0].mxu0
        %v1574 = vadd.f32 %v630, %v1573
        %v1575 = vpop.f32.mrb[0].mxu0
        %1576 = vmatprep.mubr.f32.mxu0 0.0
        %1577 = vmatmul.mubr.f32.gmra.mrb[0].mxu0 %v931
        %v1578 = vpop.f32.mrb[0].mxu0
        %v1579 = vadd.f32 %v630, %v1578
        %v1580 = vpop.f32.mrb[0].mxu0
        %1581 = vmatprep.mubr.f32.mxu0 0.0
        %1582 = vmatmul.mubr.f32.gmra.mrb[0].mxu0 %v934
        %v1583 = vpop.f32.mrb[0].mxu0
        %v1584 = vadd.f32 %v630, %v1583
        %v1585 = vpop.f32.mrb[0].mxu0
        %1586 = vmatprep.mubr.f32.mxu0 0.0
        %1587 = vmatmul.mubr.f32.gmra.mrb[0].mxu0 %v937
        %v1588 = vpop.f32.mrb[0].mxu0
        %v1589 = vadd.f32 %v630, %v1588
        %v1590 = vpop.f32.mrb[0].mxu0
        %1591 = vmatprep.mubr.f32.mxu0 0.0
        %1592 = vmatmul.mubr.f32.gmra.mrb[0].mxu0 %v940
        %v1593 = vpop.f32.mrb[0].mxu0
        %v1594 = vadd.f32 %v630, %v1593
        %v1595 = vpop.f32.mrb[0].mxu0
        %1596 = vmatprep.mubr.f32.mxu0 0.0
        %1597 = vmatmul.mubr.f32.gmra.mrb[0].mxu0 %v943
        %v1598 = vpop.f32.mrb[0].mxu0
        %v1599 = vadd.f32 %v630, %v1598
        %v1600 = vpop.f32.mrb[0].mxu0
        %1601 = vmatprep.mubr.f32.mxu0 0.0
        %1602 = vmatmul.mubr.f32.gmra.mrb[0].mxu0 %v946
        %v1603 = vpop.f32.mrb[0].mxu0
        %v1604 = vadd.f32 %v630, %v1603
        %v1605 = vpop.f32.mrb[0].mxu0
        %1606 = vmatprep.mubr.f32.mxu0 0.0
        %1607 = vmatmul.mubr.f32.gmra.mrb[0].mxu0 %v949
        %v1608 = vpop.f32.mrb[0].mxu0
        %v1609 = vadd.f32 %v630, %v1608
        %v1610 = vpop.f32.mrb[0].mxu0
        %1611 = vmatprep.mubr.f32.mxu0 0.0
        %1612 = vmatmul.mubr.f32.gmra.mrb[0].mxu0 %v952
        %v1613 = vpop.f32.mrb[0].mxu0
        %v1614 = vadd.f32 %v630, %v1613
        %v1615 = vpop.f32.mrb[0].mxu0
        %1616 = vmatprep.mubr.f32.mxu0 0.0
        %1617 = vmatmul.mubr.f32.gmra.mrb[0].mxu0 %v955
        %v1618 = vpop.f32.mrb[0].mxu0
        %v1619 = vadd.f32 %v630, %v1618
        %v1620 = vpop.f32.mrb[0].mxu0
        %1621 = vmatprep.mubr.f32.mxu0 0.0
        %1622 = vmatmul.mubr.f32.gmra.mrb[0].mxu0 %v958
        %v1623 = vpop.f32.mrb[0].mxu0
        %v1624 = vadd.f32 %v630, %v1623
        %v1625 = vpop.f32.mrb[0].mxu0
        %1626 = vmatprep.mubr.f32.mxu0 0.0
        %1627 = vmatmul.mubr.f32.gmra.mrb[0].mxu0 %v961
        %v1628 = vpop.f32.mrb[0].mxu0
        %v1629 = vadd.f32 %v630, %v1628
        %v1630 = vpop.f32.mrb[0].mxu0
        %1631 = vmatprep.mubr.f32.mxu0 0.0
        %1632 = vmatmul.mubr.f32.gmra.mrb[0].mxu0 %v964
        %v1633 = vpop.f32.mrb[0].mxu0
        %v1634 = vadd.f32 %v630, %v1633
        %v1635 = vpop.f32.mrb[0].mxu0
        %1636 = vmatprep.mubr.f32.mxu0 0.0
        %1637 = vmatmul.mubr.f32.gmra.mrb[0].mxu0 %v967
        %v1638 = vpop.f32.mrb[0].mxu0
        %v1639 = vadd.f32 %v630, %v1638
        %v1640 = vpop.f32.mrb[0].mxu0
        %1641 = vmatprep.mubr.f32.mxu0 0.0
        %1642 = vmatmul.mubr.f32.gmra.mrb[0].mxu0 %v970
        %v1643 = vpop.f32.mrb[0].mxu0
        %v1644 = vadd.f32 %v630, %v1643
        %v1645 = vpop.f32.mrb[0].mxu0
        %1646 = vmatprep.mubr.f32.mxu0 0.0
        %1647 = vmatmul.mubr.f32.gmra.mrb[0].mxu0 %v973
        %v1648 = vpop.f32.mrb[0].mxu0
        %v1649 = vadd.f32 %v630, %v1648
        %v1650 = vpop.f32.mrb[0].mxu0
        %1651 = vmatprep.mubr.f32.mxu0 0.0
        %1652 = vmatmul.mubr.f32.gmra.mrb[0].mxu0 %v976
        %v1653 = vpop.f32.mrb[0].mxu0
        %v1654 = vadd.f32 %v630, %v1653
        %v1655 = vpop.f32.mrb[0].mxu0
        %1656 = vmatprep.mubr.f32.mxu0 0.0
        %1657 = vmatmul.mubr.f32.gmra.mrb[0].mxu0 %v979
        %v1658 = vpop.f32.mrb[0].mxu0
        %v1659 = vadd.f32 %v630, %v1658
        %v1660 = vpop.f32.mrb[0].mxu0
        %1661 = vmatprep.mubr.f32.mxu0 0.0
        %1662 = vmatmul.mubr.f32.gmra.mrb[0].mxu0 %v982
        %v1663 = vpop.f32.mrb[0].mxu0
        %v1664 = vadd.f32 %v630, %v1663
        %v1665 = vpop.f32.mrb[0].mxu0
        %1666 = vmatprep.mubr.f32.mxu0 0.0
        %1667 = vmatmul.mubr.f32.gmra.mrb[0].mxu0 %v985
        %v1668 = vpop.f32.mrb[0].mxu0
        %v1669 = vadd.f32 %v630, %v1668
        %v1670 = vpop.f32.mrb[0].mxu0
        %1671 = vmatprep.mubr.f32.mxu0 0.0
        %1672 = vmatmul.mubr.f32.gmra.mrb[0].mxu0 %v988
        %v1673 = vpop.f32.mrb[0].mxu0
        %v1674 = vadd.f32 %v630, %v1673
        %v1675 = vpop.f32.mrb[0].mxu0
        %1676 = vmatprep.mubr.f32.mxu0 0.0
        %1677 = vmatmul.mubr.f32.gmra.mrb[0].mxu0 %v991
        %v1678 = vpop.f32.mrb[0].mxu0
        %v1679 = vadd.f32 %v630, %v1678
        %v1680 = vpop.f32.mrb[0].mxu0
        %1681 = vmatprep.mubr.f32.mxu0 0.0
        %1682 = vmatmul.mubr.f32.gmra.mrb[0].mxu0 %v994
        %v1683 = vpop.f32.mrb[0].mxu0
        %v1684 = vadd.f32 %v630, %v1683
        %v1685 = vpop.f32.mrb[0].mxu0
        %1686 = vmatprep.mubr.f32.mxu0 0.0
        %1687 = vmatmul.mubr.f32.gmra.mrb[0].mxu0 %v997
        %v1688 = vpop.f32.mrb[0].mxu0
        %v1689 = vadd.f32 %v630, %v1688
        %v1690 = vpop.f32.mrb[0].mxu0
        %1691 = vmatprep.mubr.f32.mxu0 0.0
        %1692 = vmatmul.mubr.f32.gmra.mrb[0].mxu0 %v1000
        %v1693 = vpop.f32.mrb[0].mxu0
        %v1694 = vadd.f32 %v630, %v1693
        %v1695 = vpop.f32.mrb[0].mxu0
        %1696 = vmatprep.mubr.f32.mxu0 0.0
        %1697 = vmatmul.mubr.f32.gmra.mrb[0].mxu0 %v1003
        %v1698 = vpop.f32.mrb[0].mxu0
        %v1699 = vadd.f32 %v630, %v1698
        %v1700 = vpop.f32.mrb[0].mxu0
        %1701 = vmatprep.mubr.f32.mxu0 0.0
        %1702 = vmatmul.mubr.f32.gmra.mrb[0].mxu0 %v1006
        %v1703 = vpop.f32.mrb[0].mxu0
        %v1704 = vadd.f32 %v630, %v1703
        %v1705 = vpop.f32.mrb[0].mxu0
        %1706 = vmatprep.mubr.f32.mxu0 0.0
        %1707 = vmatmul.mubr.f32.gmra.mrb[0].mxu0 %v1009
        %v1708 = vpop.f32.mrb[0].mxu0
        %v1709 = vadd.f32 %v630, %v1708
        %v1710 = vpop.f32.mrb[0].mxu0
        %1711 = vmatprep.mubr.f32.mxu0 0.0
        %1712 = vmatmul.mubr.f32.gmra.mrb[0].mxu0 %v1012
        %v1713 = vpop.f32.mrb[0].mxu0
        %v1714 = vadd.f32 %v630, %v1713
        %v1715 = vpop.f32.mrb[0].mxu0
        %1716 = vmatprep.mubr.f32.mxu0 0.0
        %1717 = vmatmul.mubr.f32.gmra.mrb[0].mxu0 %v1015
        %v1718 = vpop.f32.mrb[0].mxu0
        %v1719 = vadd.f32 %v630, %v1718
        %v1720 = vpop.f32.mrb[0].mxu0
        %1721 = vdwg.mxu0
        %v1722 = vmax.f32 %v1084, 0.0
        %v1723 = vmax.f32 %v1089, 0.0
        %v1724 = vmax.f32 %v1094, 0.0
        %v1725 = vmax.f32 %v1099, 0.0
        %v1726 = vmax.f32 %v1104, 0.0
        %v1727 = vmax.f32 %v1109, 0.0
        %v1728 = vmax.f32 %v1114, 0.0
        %v1729 = vmax.f32 %v1119, 0.0
        %v1730 = vmax.f32 %v1124, 0.0
        %v1731 = vmax.f32 %v1129, 0.0
        %v1732 = vmax.f32 %v1134, 0.0
        %v1733 = vmax.f32 %v1139, 0.0
        %v1734 = vmax.f32 %v1144, 0.0
        %v1735 = vmax.f32 %v1149, 0.0
        %v1736 = vmax.f32 %v1154, 0.0
        %v1737 = vmax.f32 %v1159, 0.0
        %v1738 = vmax.f32 %v1164, 0.0
        %v1739 = vmax.f32 %v1169, 0.0
        %v1740 = vmax.f32 %v1174, 0.0
        %v1741 = vmax.f32 %v1179, 0.0
        %v1742 = vmax.f32 %v1184, 0.0
        %v1743 = vmax.f32 %v1189, 0.0
        %v1744 = vmax.f32 %v1194, 0.0
        %v1745 = vmax.f32 %v1199, 0.0
        %v1746 = vmax.f32 %v1204, 0.0
        %v1747 = vmax.f32 %v1209, 0.0
        %v1748 = vmax.f32 %v1214, 0.0
        %v1749 = vmax.f32 %v1219, 0.0
        %v1750 = vmax.f32 %v1224, 0.0
        %v1751 = vmax.f32 %v1229, 0.0
        %v1752 = vmax.f32 %v1234, 0.0
        %v1753 = vmax.f32 %v1239, 0.0
        %v1754 = vmax.f32 %v1244, 0.0
        %v1755 = vmax.f32 %v1249, 0.0
        %v1756 = vmax.f32 %v1254, 0.0
        %v1757 = vmax.f32 %v1259, 0.0
        %v1758 = vmax.f32 %v1264, 0.0
        %v1759 = vmax.f32 %v1269, 0.0
        %v1760 = vmax.f32 %v1274, 0.0
        %v1761 = vmax.f32 %v1279, 0.0
        %v1762 = vmax.f32 %v1284, 0.0
        %v1763 = vmax.f32 %v1289, 0.0
        %v1764 = vmax.f32 %v1294, 0.0
        %v1765 = vmax.f32 %v1299, 0.0
        %v1766 = vmax.f32 %v1304, 0.0
        %v1767 = vmax.f32 %v1309, 0.0
        %v1768 = vmax.f32 %v1314, 0.0
        %v1769 = vmax.f32 %v1319, 0.0
        %v1770 = vmax.f32 %v1324, 0.0
        %v1771 = vmax.f32 %v1329, 0.0
        %v1772 = vmax.f32 %v1334, 0.0
        %v1773 = vmax.f32 %v1339, 0.0
        %v1774 = vmax.f32 %v1344, 0.0
        %v1775 = vmax.f32 %v1349, 0.0
        %v1776 = vmax.f32 %v1354, 0.0
        %v1777 = vmax.f32 %v1359, 0.0
        %v1778 = vmax.f32 %v1364, 0.0
        %v1779 = vmax.f32 %v1369, 0.0
        %v1780 = vmax.f32 %v1374, 0.0
        %v1781 = vmax.f32 %v1379, 0.0
        %v1782 = vmax.f32 %v1384, 0.0
        %v1783 = vmax.f32 %v1389, 0.0
        %v1784 = vmax.f32 %v1394, 0.0
        %v1785 = vmax.f32 %v1399, 0.0
        %v1786 = vmax.f32 %v1404, 0.0
        %v1787 = vmax.f32 %v1409, 0.0
        %v1788 = vmax.f32 %v1414, 0.0
        %v1789 = vmax.f32 %v1419, 0.0
        %v1790 = vmax.f32 %v1424, 0.0
        %v1791 = vmax.f32 %v1429, 0.0
        %v1792 = vmax.f32 %v1434, 0.0
        %v1793 = vmax.f32 %v1439, 0.0
        %v1794 = vmax.f32 %v1444, 0.0
        %v1795 = vmax.f32 %v1449, 0.0
        %v1796 = vmax.f32 %v1454, 0.0
        %v1797 = vmax.f32 %v1459, 0.0
        %v1798 = vmax.f32 %v1464, 0.0
        %v1799 = vmax.f32 %v1469, 0.0
        %v1800 = vmax.f32 %v1474, 0.0
        %v1801 = vmax.f32 %v1479, 0.0
        %v1802 = vmax.f32 %v1484, 0.0
        %v1803 = vmax.f32 %v1489, 0.0
        %v1804 = vmax.f32 %v1494, 0.0
        %v1805 = vmax.f32 %v1499, 0.0
        %v1806 = vmax.f32 %v1504, 0.0
        %v1807 = vmax.f32 %v1509, 0.0
        %v1808 = vmax.f32 %v1514, 0.0
        %v1809 = vmax.f32 %v1519, 0.0
        %v1810 = vmax.f32 %v1524, 0.0
        %v1811 = vmax.f32 %v1529, 0.0
        %v1812 = vmax.f32 %v1534, 0.0
        %v1813 = vmax.f32 %v1539, 0.0
        %v1814 = vmax.f32 %v1544, 0.0
        %v1815 = vmax.f32 %v1549, 0.0
        %v1816 = vmax.f32 %v1554, 0.0
        %v1817 = vmax.f32 %v1559, 0.0
        %v1818 = vmax.f32 %v1564, 0.0
        %v1819 = vmax.f32 %v1569, 0.0
        %v1820 = vmax.f32 %v1574, 0.0
        %v1821 = vmax.f32 %v1579, 0.0
        %v1822 = vmax.f32 %v1584, 0.0
        %v1823 = vmax.f32 %v1589, 0.0
        %v1824 = vmax.f32 %v1594, 0.0
        %v1825 = vmax.f32 %v1599, 0.0
        %v1826 = vmax.f32 %v1604, 0.0
        %v1827 = vmax.f32 %v1609, 0.0
        %v1828 = vmax.f32 %v1614, 0.0
        %v1829 = vmax.f32 %v1619, 0.0
        %v1830 = vmax.f32 %v1624, 0.0
        %v1831 = vmax.f32 %v1629, 0.0
        %v1832 = vmax.f32 %v1634, 0.0
        %v1833 = vmax.f32 %v1639, 0.0
        %v1834 = vmax.f32 %v1644, 0.0
        %v1835 = vmax.f32 %v1649, 0.0
        %v1836 = vmax.f32 %v1654, 0.0
        %v1837 = vmax.f32 %v1659, 0.0
        %v1838 = vmax.f32 %v1664, 0.0
        %v1839 = vmax.f32 %v1669, 0.0
        %v1840 = vmax.f32 %v1674, 0.0
        %v1841 = vmax.f32 %v1679, 0.0
        %v1842 = vmax.f32 %v1684, 0.0
        %v1843 = vmax.f32 %v1689, 0.0
        %v1844 = vmax.f32 %v1694, 0.0
        %v1845 = vmax.f32 %v1699, 0.0
        %v1846 = vmax.f32 %v1704, 0.0
        %v1847 = vmax.f32 %v1709, 0.0
        %v1848 = vmax.f32 %v1714, 0.0
        %v1849 = vmax.f32 %v1719, 0.0
        %v1850 = vld [vmem:[%s3] sm:$0xff]
        %v1851 = vld [vmem:[%s3 + $0x8] sm:$0xff]
        %v1852 = vld [vmem:[%s3 + $0x10] sm:$0xff]
        %v1853 = vld [vmem:[%s3 + $0x18] sm:$0xff]
        %v1854 = vld [vmem:[%s3 + $0x20] sm:$0xff]
        %v1855 = vld [vmem:[%s3 + $0x28] sm:$0xff]
        %v1856 = vld [vmem:[%s3 + $0x30] sm:$0xff]
        %v1857 = vld [vmem:[%s3 + $0x38] sm:$0xff]
        %v1858 = vld [vmem:[%s3 + $0x40] sm:$0xff]
        %v1859 = vld [vmem:[%s3 + $0x48] sm:$0xff]
        %v1860 = vld [vmem:[%s3 + $0x50] sm:$0xff]
        %v1861 = vld [vmem:[%s3 + $0x58] sm:$0xff]
        %v1862 = vld [vmem:[%s3 + $0x60] sm:$0xff]
        %v1863 = vld [vmem:[%s3 + $0x68] sm:$0xff]
        %v1864 = vld [vmem:[%s3 + $0x70] sm:$0xff]
        %v1865 = vld [vmem:[%s3 + $0x78] sm:$0xff]
        %v1866 = vld [vmem:[%s3 + $0x80] sm:$0xff]
        %v1867 = vld [vmem:[%s3 + $0x88] sm:$0xff]
        %v1868 = vld [vmem:[%s3 + $0x90] sm:$0xff]
        %v1869 = vld [vmem:[%s3 + $0x98] sm:$0xff]
        %v1870 = vld [vmem:[%s3 + $0xa0] sm:$0xff]
        %v1871 = vld [vmem:[%s3 + $0xa8] sm:$0xff]
        %v1872 = vld [vmem:[%s3 + $0xb0] sm:$0xff]
        %v1873 = vld [vmem:[%s3 + $0xb8] sm:$0xff]
        %v1874 = vld [vmem:[%s3 + $0xc0] sm:$0xff]
        %v1875 = vld [vmem:[%s3 + $0xc8] sm:$0xff]
        %v1876 = vld [vmem:[%s3 + $0xd0] sm:$0xff]
        %v1877 = vld [vmem:[%s3 + $0xd8] sm:$0xff]
        %v1878 = vld [vmem:[%s3 + $0xe0] sm:$0xff]
        %v1879 = vld [vmem:[%s3 + $0xe8] sm:$0xff]
        %v1880 = vld [vmem:[%s3 + $0xf0] sm:$0xff]
        %v1881 = vld [vmem:[%s3 + $0xf8] sm:$0xff]
        %v1882 = vld [vmem:[%s3 + $0x100] sm:$0xff]
        %v1883 = vld [vmem:[%s3 + $0x108] sm:$0xff]
        %v1884 = vld [vmem:[%s3 + $0x110] sm:$0xff]
        %v1885 = vld [vmem:[%s3 + $0x118] sm:$0xff]
        %v1886 = vld [vmem:[%s3 + $0x120] sm:$0xff]
        %v1887 = vld [vmem:[%s3 + $0x128] sm:$0xff]
        %v1888 = vld [vmem:[%s3 + $0x130] sm:$0xff]
        %v1889 = vld [vmem:[%s3 + $0x138] sm:$0xff]
        %v1890 = vld [vmem:[%s3 + $0x140] sm:$0xff]
        %v1891 = vld [vmem:[%s3 + $0x148] sm:$0xff]
        %v1892 = vld [vmem:[%s3 + $0x150] sm:$0xff]
        %v1893 = vld [vmem:[%s3 + $0x158] sm:$0xff]
        %v1894 = vld [vmem:[%s3 + $0x160] sm:$0xff]
        %v1895 = vld [vmem:[%s3 + $0x168] sm:$0xff]
        %v1896 = vld [vmem:[%s3 + $0x170] sm:$0xff]
        %v1897 = vld [vmem:[%s3 + $0x178] sm:$0xff]
        %v1898 = vld [vmem:[%s3 + $0x180] sm:$0xff]
        %v1899 = vld [vmem:[%s3 + $0x188] sm:$0xff]
        %v1900 = vld [vmem:[%s3 + $0x190] sm:$0xff]
        %v1901 = vld [vmem:[%s3 + $0x198] sm:$0xff]
        %v1902 = vld [vmem:[%s3 + $0x1a0] sm:$0xff]
        %v1903 = vld [vmem:[%s3 + $0x1a8] sm:$0xff]
        %v1904 = vld [vmem:[%s3 + $0x1b0] sm:$0xff]
        %v1905 = vld [vmem:[%s3 + $0x1b8] sm:$0xff]
        %v1906 = vld [vmem:[%s3 + $0x1c0] sm:$0xff]
        %v1907 = vld [vmem:[%s3 + $0x1c8] sm:$0xff]
        %v1908 = vld [vmem:[%s3 + $0x1d0] sm:$0xff]
        %v1909 = vld [vmem:[%s3 + $0x1d8] sm:$0xff]
        %v1910 = vld [vmem:[%s3 + $0x1e0] sm:$0xff]
        %v1911 = vld [vmem:[%s3 + $0x1e8] sm:$0xff]
        %v1912 = vld [vmem:[%s3 + $0x1f0] sm:$0xff]
        %v1913 = vld [vmem:[%s3 + $0x1f8] sm:$0xff]
        %1914 = vmatprep.subr.mxu0 0.0
        %1915 = vmatpush1.msra.mxu0 %v1722
        %1916 = vmatprep.subr.mxu0 0.0
        %1917 = vmatpush1.msra.mxu0 %v1723
        %1918 = vmatprep.subr.mxu0 0.0
        %1919 = vmatpush1.msra.mxu0 %v1724
        %1920 = vmatprep.subr.mxu0 0.0
        %1921 = vmatpush1.msra.mxu0 %v1725
        %1922 = vmatprep.subr.mxu0 0.0
        %1923 = vmatpush1.msra.mxu0 %v1726
        %1924 = vmatprep.subr.mxu0 0.0
        %1925 = vmatpush1.msra.mxu0 %v1727
        %1926 = vmatprep.subr.mxu0 0.0
        %1927 = vmatpush1.msra.mxu0 %v1728
        %1928 = vmatprep.subr.mxu0 0.0
        %1929 = vmatpush1.msra.mxu0 %v1729
        %1930 = vmatprep.subr.mxu0 0.0
        %1931 = vmatpush1.msra.mxu0 %v1730
        %1932 = vmatprep.subr.mxu0 0.0
        %1933 = vmatpush1.msra.mxu0 %v1731
        %1934 = vmatprep.subr.mxu0 0.0
        %1935 = vmatpush1.msra.mxu0 %v1732
        %1936 = vmatprep.subr.mxu0 0.0
        %1937 = vmatpush1.msra.mxu0 %v1733
        %1938 = vmatprep.subr.mxu0 0.0
        %1939 = vmatpush1.msra.mxu0 %v1734
        %1940 = vmatprep.subr.mxu0 0.0
        %1941 = vmatpush1.msra.mxu0 %v1735
        %1942 = vmatprep.subr.mxu0 0.0
        %1943 = vmatpush1.msra.mxu0 %v1736
        %1944 = vmatprep.subr.mxu0 0.0
        %1945 = vmatpush1.msra.mxu0 %v1737
        %1946 = vmatprep.subr.mxu0 0.0
        %1947 = vmatpush1.msra.mxu0 %v1738
        %1948 = vmatprep.subr.mxu0 0.0
        %1949 = vmatpush1.msra.mxu0 %v1739
        %1950 = vmatprep.subr.mxu0 0.0
        %1951 = vmatpush1.msra.mxu0 %v1740
        %1952 = vmatprep.subr.mxu0 0.0
        %1953 = vmatpush1.msra.mxu0 %v1741
        %1954 = vmatprep.subr.mxu0 0.0
        %1955 = vmatpush1.msra.mxu0 %v1742
        %1956 = vmatprep.subr.mxu0 0.0
        %1957 = vmatpush1.msra.mxu0 %v1743
        %1958 = vmatprep.subr.mxu0 0.0
        %1959 = vmatpush1.msra.mxu0 %v1744
        %1960 = vmatprep.subr.mxu0 0.0
        %1961 = vmatpush1.msra.mxu0 %v1745
        %1962 = vmatprep.subr.mxu0 0.0
        %1963 = vmatpush1.msra.mxu0 %v1746
        %1964 = vmatprep.subr.mxu0 0.0
        %1965 = vmatpush1.msra.mxu0 %v1747
        %1966 = vmatprep.subr.mxu0 0.0
        %1967 = vmatpush1.msra.mxu0 %v1748
        %1968 = vmatprep.subr.mxu0 0.0
        %1969 = vmatpush1.msra.mxu0 %v1749
        %1970 = vmatprep.subr.mxu0 0.0
        %1971 = vmatpush1.msra.mxu0 %v1750
        %1972 = vmatprep.subr.mxu0 0.0
        %1973 = vmatpush1.msra.mxu0 %v1751
        %1974 = vmatprep.subr.mxu0 0.0
        %1975 = vmatpush1.msra.mxu0 %v1752
        %1976 = vmatprep.subr.mxu0 0.0
        %1977 = vmatpush1.msra.mxu0 %v1753
        %1978 = vmatprep.mubr.f32.mxu0 %v1851
        %1979 = vmatmul.mubr.f32.gmra.mrb[0].mxu0 %v1850
        %v1980 = vpop.f32.mrb[0].mxu0
        %v1981 = vadd.f32 0.0, %v1980
        %v1982 = vpop.f32.mrb[0].mxu0
        %1983 = vmatprep.mubr.f32.mxu0 %v1859
        %1984 = vmatmul.mubr.f32.gmra.mrb[0].mxu0 %v1858
        %v1985 = vpop.f32.mrb[0].mxu0
        %v1986 = vadd.f32 0.0, %v1985
        %v1987 = vpop.f32.mrb[0].mxu0
        %1988 = vmatprep.mubr.f32.mxu0 %v1867
        %1989 = vmatmul.mubr.f32.gmra.mrb[0].mxu0 %v1866
        %v1990 = vpop.f32.mrb[0].mxu0
        %v1991 = vadd.f32 0.0, %v1990
        %v1992 = vpop.f32.mrb[0].mxu0
        %1993 = vmatprep.mubr.f32.mxu0 %v1875
        %1994 = vmatmul.mubr.f32.gmra.mrb[0].mxu0 %v1874
        %v1995 = vpop.f32.mrb[0].mxu0
        %v1996 = vadd.f32 0.0, %v1995
        %v1997 = vpop.f32.mrb[0].mxu0
        %1998 = vmatprep.mubr.f32.mxu0 %v1883
        %1999 = vmatmul.mubr.f32.gmra.mrb[0].mxu0 %v1882
        %v2000 = vpop.f32.mrb[0].mxu0
        %v2001 = vadd.f32 0.0, %v2000
        %v2002 = vpop.f32.mrb[0].mxu0
        %2003 = vmatprep.mubr.f32.mxu0 %v1891
        %2004 = vmatmul.mubr.f32.gmra.mrb[0].mxu0 %v1890
        %v2005 = vpop.f32.mrb[0].mxu0
        %v2006 = vadd.f32 0.0, %v2005
        %v2007 = vpop.f32.mrb[0].mxu0
        %2008 = vmatprep.mubr.f32.mxu0 %v1899
        %2009 = vmatmul.mubr.f32.gmra.mrb[0].mxu0 %v1898
        %v2010 = vpop.f32.mrb[0].mxu0
        %v2011 = vadd.f32 0.0, %v2010
        %v2012 = vpop.f32.mrb[0].mxu0
        %2013 = vmatprep.mubr.f32.mxu0 %v1907
        %2014 = vmatmul.mubr.f32.gmra.mrb[0].mxu0 %v1906
        %v2015 = vpop.f32.mrb[0].mxu0
        %v2016 = vadd.f32 0.0, %v2015
        %v2017 = vpop.f32.mrb[0].mxu0
        %2018 = vdwg.mxu0
        %2019 = vmatprep.subr.mxu0 0.0
        %2020 = vmatpush1.msra.mxu0 %v1754
        %2021 = vmatprep.subr.mxu0 0.0
        %2022 = vmatpush1.msra.mxu0 %v1755
        %2023 = vmatprep.subr.mxu0 0.0
        %2024 = vmatpush1.msra.mxu0 %v1756
        %2025 = vmatprep.subr.mxu0 0.0
        %2026 = vmatpush1.msra.mxu0 %v1757
        %2027 = vmatprep.subr.mxu0 0.0
        %2028 = vmatpush1.msra.mxu0 %v1758
        %2029 = vmatprep.subr.mxu0 0.0
        %2030 = vmatpush1.msra.mxu0 %v1759
        %2031 = vmatprep.subr.mxu0 0.0
        %2032 = vmatpush1.msra.mxu0 %v1760
        %2033 = vmatprep.subr.mxu0 0.0
        %2034 = vmatpush1.msra.mxu0 %v1761
        %2035 = vmatprep.subr.mxu0 0.0
        %2036 = vmatpush1.msra.mxu0 %v1762
        %2037 = vmatprep.subr.mxu0 0.0
        %2038 = vmatpush1.msra.mxu0 %v1763
        %2039 = vmatprep.subr.mxu0 0.0
        %2040 = vmatpush1.msra.mxu0 %v1764
        %2041 = vmatprep.subr.mxu0 0.0
        %2042 = vmatpush1.msra.mxu0 %v1765
        %2043 = vmatprep.subr.mxu0 0.0
        %2044 = vmatpush1.msra.mxu0 %v1766
        %2045 = vmatprep.subr.mxu0 0.0
        %2046 = vmatpush1.msra.mxu0 %v1767
        %2047 = vmatprep.subr.mxu0 0.0
        %2048 = vmatpush1.msra.mxu0 %v1768
        %2049 = vmatprep.subr.mxu0 0.0
        %2050 = vmatpush1.msra.mxu0 %v1769
        %2051 = vmatprep.subr.mxu0 0.0
        %2052 = vmatpush1.msra.mxu0 %v1770
        %2053 = vmatprep.subr.mxu0 0.0
        %2054 = vmatpush1.msra.mxu0 %v1771
        %2055 = vmatprep.subr.mxu0 0.0
        %2056 = vmatpush1.msra.mxu0 %v1772
        %2057 = vmatprep.subr.mxu0 0.0
        %2058 = vmatpush1.msra.mxu0 %v1773
        %2059 = vmatprep.subr.mxu0 0.0
        %2060 = vmatpush1.msra.mxu0 %v1774
        %2061 = vmatprep.subr.mxu0 0.0
        %2062 = vmatpush1.msra.mxu0 %v1775
        %2063 = vmatprep.subr.mxu0 0.0
        %2064 = vmatpush1.msra.mxu0 %v1776
        %2065 = vmatprep.subr.mxu0 0.0
        %2066 = vmatpush1.msra.mxu0 %v1777
        %2067 = vmatprep.subr.mxu0 0.0
        %2068 = vmatpush1.msra.mxu0 %v1778
        %2069 = vmatprep.subr.mxu0 0.0
        %2070 = vmatpush1.msra.mxu0 %v1779
        %2071 = vmatprep.subr.mxu0 0.0
        %2072 = vmatpush1.msra.mxu0 %v1780
        %2073 = vmatprep.subr.mxu0 0.0
        %2074 = vmatpush1.msra.mxu0 %v1781
        %2075 = vmatprep.subr.mxu0 0.0
        %2076 = vmatpush1.msra.mxu0 %v1782
        %2077 = vmatprep.subr.mxu0 0.0
        %2078 = vmatpush1.msra.mxu0 %v1783
        %2079 = vmatprep.subr.mxu0 0.0
        %2080 = vmatpush1.msra.mxu0 %v1784
        %2081 = vmatprep.subr.mxu0 0.0
        %2082 = vmatpush1.msra.mxu0 %v1785
        %2083 = vmatprep.mubr.f32.mxu0 %v1853
        %2084 = vmatmul.mubr.f32.gmra.mrb[0].mxu0 %v1852
        %v2085 = vpop.f32.mrb[0].mxu0
        %v2086 = vadd.f32 %v1981, %v2085
        %v2087 = vpop.f32.mrb[0].mxu0
        %2088 = vmatprep.mubr.f32.mxu0 %v1861
        %2089 = vmatmul.mubr.f32.gmra.mrb[0].mxu0 %v1860
        %v2090 = vpop.f32.mrb[0].mxu0
        %v2091 = vadd.f32 %v1986, %v2090
        %v2092 = vpop.f32.mrb[0].mxu0
        %2093 = vmatprep.mubr.f32.mxu0 %v1869
        %2094 = vmatmul.mubr.f32.gmra.mrb[0].mxu0 %v1868
        %v2095 = vpop.f32.mrb[0].mxu0
        %v2096 = vadd.f32 %v1991, %v2095
        %v2097 = vpop.f32.mrb[0].mxu0
        %2098 = vmatprep.mubr.f32.mxu0 %v1877
        %2099 = vmatmul.mubr.f32.gmra.mrb[0].mxu0 %v1876
        %v2100 = vpop.f32.mrb[0].mxu0
        %v2101 = vadd.f32 %v1996, %v2100
        %v2102 = vpop.f32.mrb[0].mxu0
        %2103 = vmatprep.mubr.f32.mxu0 %v1885
        %2104 = vmatmul.mubr.f32.gmra.mrb[0].mxu0 %v1884
        %v2105 = vpop.f32.mrb[0].mxu0
        %v2106 = vadd.f32 %v2001, %v2105
        %v2107 = vpop.f32.mrb[0].mxu0
        %2108 = vmatprep.mubr.f32.mxu0 %v1893
        %2109 = vmatmul.mubr.f32.gmra.mrb[0].mxu0 %v1892
        %v2110 = vpop.f32.mrb[0].mxu0
        %v2111 = vadd.f32 %v2006, %v2110
        %v2112 = vpop.f32.mrb[0].mxu0
        %2113 = vmatprep.mubr.f32.mxu0 %v1901
        %2114 = vmatmul.mubr.f32.gmra.mrb[0].mxu0 %v1900
        %v2115 = vpop.f32.mrb[0].mxu0
        %v2116 = vadd.f32 %v2011, %v2115
        %v2117 = vpop.f32.mrb[0].mxu0
        %2118 = vmatprep.mubr.f32.mxu0 %v1909
        %2119 = vmatmul.mubr.f32.gmra.mrb[0].mxu0 %v1908
        %v2120 = vpop.f32.mrb[0].mxu0
        %v2121 = vadd.f32 %v2016, %v2120
        %v2122 = vpop.f32.mrb[0].mxu0
        %2123 = vdwg.mxu0
        %2124 = vmatprep.subr.mxu0 0.0
        %2125 = vmatpush1.msra.mxu0 %v1786
        %2126 = vmatprep.subr.mxu0 0.0
        %2127 = vmatpush1.msra.mxu0 %v1787
        %2128 = vmatprep.subr.mxu0 0.0
        %2129 = vmatpush1.msra.mxu0 %v1788
        %2130 = vmatprep.subr.mxu0 0.0
        %2131 = vmatpush1.msra.mxu0 %v1789
        %2132 = vmatprep.subr.mxu0 0.0
        %2133 = vmatpush1.msra.mxu0 %v1790
        %2134 = vmatprep.subr.mxu0 0.0
        %2135 = vmatpush1.msra.mxu0 %v1791
        %2136 = vmatprep.subr.mxu0 0.0
        %2137 = vmatpush1.msra.mxu0 %v1792
        %2138 = vmatprep.subr.mxu0 0.0
        %2139 = vmatpush1.msra.mxu0 %v1793
        %2140 = vmatprep.subr.mxu0 0.0
        %2141 = vmatpush1.msra.mxu0 %v1794
        %2142 = vmatprep.subr.mxu0 0.0
        %2143 = vmatpush1.msra.mxu0 %v1795
        %2144 = vmatprep.subr.mxu0 0.0
        %2145 = vmatpush1.msra.mxu0 %v1796
        %2146 = vmatprep.subr.mxu0 0.0
        %2147 = vmatpush1.msra.mxu0 %v1797
        %2148 = vmatprep.subr.mxu0 0.0
        %2149 = vmatpush1.msra.mxu0 %v1798
        %2150 = vmatprep.subr.mxu0 0.0
        %2151 = vmatpush1.msra.mxu0 %v1799
        %2152 = vmatprep.subr.mxu0 0.0
        %2153 = vmatpush1.msra.mxu0 %v1800
        %2154 = vmatprep.subr.mxu0 0.0
        %2155 = vmatpush1.msra.mxu0 %v1801
        %2156 = vmatprep.subr.mxu0 0.0
        %2157 = vmatpush1.msra.mxu0 %v1802
        %2158 = vmatprep.subr.mxu0 0.0
        %2159 = vmatpush1.msra.mxu0 %v1803
        %2160 = vmatprep.subr.mxu0 0.0
        %2161 = vmatpush1.msra.mxu0 %v1804
        %2162 = vmatprep.subr.mxu0 0.0
        %2163 = vmatpush1.msra.mxu0 %v1805
        %2164 = vmatprep.subr.mxu0 0.0
        %2165 = vmatpush1.msra.mxu0 %v1806
        %2166 = vmatprep.subr.mxu0 0.0
        %2167 = vmatpush1.msra.mxu0 %v1807
        %2168 = vmatprep.subr.mxu0 0.0
        %2169 = vmatpush1.msra.mxu0 %v1808
        %2170 = vmatprep.subr.mxu0 0.0
        %2171 = vmatpush1.msra.mxu0 %v1809
        %2172 = vmatprep.subr.mxu0 0.0
        %2173 = vmatpush1.msra.mxu0 %v1810
        %2174 = vmatprep.subr.mxu0 0.0
        %2175 = vmatpush1.msra.mxu0 %v1811
        %2176 = vmatprep.subr.mxu0 0.0
        %2177 = vmatpush1.msra.mxu0 %v1812
        %2178 = vmatprep.subr.mxu0 0.0
        %2179 = vmatpush1.msra.mxu0 %v1813
        %2180 = vmatprep.subr.mxu0 0.0
        %2181 = vmatpush1.msra.mxu0 %v1814
        %2182 = vmatprep.subr.mxu0 0.0
        %2183 = vmatpush1.msra.mxu0 %v1815
        %2184 = vmatprep.subr.mxu0 0.0
        %2185 = vmatpush1.msra.mxu0 %v1816
        %2186 = vmatprep.subr.mxu0 0.0
        %2187 = vmatpush1.msra.mxu0 %v1817
        %2188 = vmatprep.mubr.f32.mxu0 %v1855
        %2189 = vmatmul.mubr.f32.gmra.mrb[0].mxu0 %v1854
        %v2190 = vpop.f32.mrb[0].mxu0
        %v2191 = vadd.f32 %v2086, %v2190
        %v2192 = vpop.f32.mrb[0].mxu0
        %2193 = vmatprep.mubr.f32.mxu0 %v1863
        %2194 = vmatmul.mubr.f32.gmra.mrb[0].mxu0 %v1862
        %v2195 = vpop.f32.mrb[0].mxu0
        %v2196 = vadd.f32 %v2091, %v2195
        %v2197 = vpop.f32.mrb[0].mxu0
        %2198 = vmatprep.mubr.f32.mxu0 %v1871
        %2199 = vmatmul.mubr.f32.gmra.mrb[0].mxu0 %v1870
        %v2200 = vpop.f32.mrb[0].mxu0
        %v2201 = vadd.f32 %v2096, %v2200
        %v2202 = vpop.f32.mrb[0].mxu0
        %2203 = vmatprep.mubr.f32.mxu0 %v1879
        %2204 = vmatmul.mubr.f32.gmra.mrb[0].mxu0 %v1878
        %v2205 = vpop.f32.mrb[0].mxu0
        %v2206 = vadd.f32 %v2101, %v2205
        %v2207 = vpop.f32.mrb[0].mxu0
        %2208 = vmatprep.mubr.f32.mxu0 %v1887
        %2209 = vmatmul.mubr.f32.gmra.mrb[0].mxu0 %v1886
        %v2210 = vpop.f32.mrb[0].mxu0
        %v2211 = vadd.f32 %v2106, %v2210
        %v2212 = vpop.f32.mrb[0].mxu0
        %2213 = vmatprep.mubr.f32.mxu0 %v1895
        %2214 = vmatmul.mubr.f32.gmra.mrb[0].mxu0 %v1894
        %v2215 = vpop.f32.mrb[0].mxu0
        %v2216 = vadd.f32 %v2111, %v2215
        %v2217 = vpop.f32.mrb[0].mxu0
        %2218 = vmatprep.mubr.f32.mxu0 %v1903
        %2219 = vmatmul.mubr.f32.gmra.mrb[0].mxu0 %v1902
        %v2220 = vpop.f32.mrb[0].mxu0
        %v2221 = vadd.f32 %v2116, %v2220
        %v2222 = vpop.f32.mrb[0].mxu0
        %2223 = vmatprep.mubr.f32.mxu0 %v1911
        %2224 = vmatmul.mubr.f32.gmra.mrb[0].mxu0 %v1910
        %v2225 = vpop.f32.mrb[0].mxu0
        %v2226 = vadd.f32 %v2121, %v2225
        %v2227 = vpop.f32.mrb[0].mxu0
        %2228 = vdwg.mxu0
        %2229 = vmatprep.subr.mxu0 0.0
        %2230 = vmatpush1.msra.mxu0 %v1818
        %2231 = vmatprep.subr.mxu0 0.0
        %2232 = vmatpush1.msra.mxu0 %v1819
        %2233 = vmatprep.subr.mxu0 0.0
        %2234 = vmatpush1.msra.mxu0 %v1820
        %2235 = vmatprep.subr.mxu0 0.0
        %2236 = vmatpush1.msra.mxu0 %v1821
        %2237 = vmatprep.subr.mxu0 0.0
        %2238 = vmatpush1.msra.mxu0 %v1822
        %2239 = vmatprep.subr.mxu0 0.0
        %2240 = vmatpush1.msra.mxu0 %v1823
        %2241 = vmatprep.subr.mxu0 0.0
        %2242 = vmatpush1.msra.mxu0 %v1824
        %2243 = vmatprep.subr.mxu0 0.0
        %2244 = vmatpush1.msra.mxu0 %v1825
        %2245 = vmatprep.subr.mxu0 0.0
        %2246 = vmatpush1.msra.mxu0 %v1826
        %2247 = vmatprep.subr.mxu0 0.0
        %2248 = vmatpush1.msra.mxu0 %v1827
        %2249 = vmatprep.subr.mxu0 0.0
        %2250 = vmatpush1.msra.mxu0 %v1828
        %2251 = vmatprep.subr.mxu0 0.0
        %2252 = vmatpush1.msra.mxu0 %v1829
        %2253 = vmatprep.subr.mxu0 0.0
        %2254 = vmatpush1.msra.mxu0 %v1830
        %2255 = vmatprep.subr.mxu0 0.0
        %2256 = vmatpush1.msra.mxu0 %v1831
        %2257 = vmatprep.subr.mxu0 0.0
        %2258 = vmatpush1.msra.mxu0 %v1832
        %2259 = vmatprep.subr.mxu0 0.0
        %2260 = vmatpush1.msra.mxu0 %v1833
        %2261 = vmatprep.subr.mxu0 0.0
        %2262 = vmatpush1.msra.mxu0 %v1834
        %2263 = vmatprep.subr.mxu0 0.0
        %2264 = vmatpush1.msra.mxu0 %v1835
        %2265 = vmatprep.subr.mxu0 0.0
        %2266 = vmatpush1.msra.mxu0 %v1836
        %2267 = vmatprep.subr.mxu0 0.0
        %2268 = vmatpush1.msra.mxu0 %v1837
        %2269 = vmatprep.subr.mxu0 0.0
        %2270 = vmatpush1.msra.mxu0 %v1838
        %2271 = vmatprep.subr.mxu0 0.0
        %2272 = vmatpush1.msra.mxu0 %v1839
        %2273 = vmatprep.subr.mxu0 0.0
        %2274 = vmatpush1.msra.mxu0 %v1840
        %2275 = vmatprep.subr.mxu0 0.0
        %2276 = vmatpush1.msra.mxu0 %v1841
        %2277 = vmatprep.subr.mxu0 0.0
        %2278 = vmatpush1.msra.mxu0 %v1842
        %2279 = vmatprep.subr.mxu0 0.0
        %2280 = vmatpush1.msra.mxu0 %v1843
        %2281 = vmatprep.subr.mxu0 0.0
        %2282 = vmatpush1.msra.mxu0 %v1844
        %2283 = vmatprep.subr.mxu0 0.0
        %2284 = vmatpush1.msra.mxu0 %v1845
        %2285 = vmatprep.subr.mxu0 0.0
        %2286 = vmatpush1.msra.mxu0 %v1846
        %2287 = vmatprep.subr.mxu0 0.0
        %2288 = vmatpush1.msra.mxu0 %v1847
        %2289 = vmatprep.subr.mxu0 0.0
        %2290 = vmatpush1.msra.mxu0 %v1848
        %2291 = vmatprep.subr.mxu0 0.0
        %2292 = vmatpush1.msra.mxu0 %v1849
        %2293 = vmatprep.mubr.f32.mxu0 %v1857
        %2294 = vmatmul.mubr.f32.gmra.mrb[0].mxu0 %v1856
        %v2295 = vpop.f32.mrb[0].mxu0
        %v2296 = vadd.f32 %v2191, %v2295
        %v2297 = vpop.f32.mrb[0].mxu0
        %2298 = vmatprep.mubr.f32.mxu0 %v1865
        %2299 = vmatmul.mubr.f32.gmra.mrb[0].mxu0 %v1864
        %v2300 = vpop.f32.mrb[0].mxu0
        %v2301 = vadd.f32 %v2196, %v2300
        %v2302 = vpop.f32.mrb[0].mxu0
        %2303 = vmatprep.mubr.f32.mxu0 %v1873
        %2304 = vmatmul.mubr.f32.gmra.mrb[0].mxu0 %v1872
        %v2305 = vpop.f32.mrb[0].mxu0
        %v2306 = vadd.f32 %v2201, %v2305
        %v2307 = vpop.f32.mrb[0].mxu0
        %2308 = vmatprep.mubr.f32.mxu0 %v1881
        %2309 = vmatmul.mubr.f32.gmra.mrb[0].mxu0 %v1880
        %v2310 = vpop.f32.mrb[0].mxu0
        %v2311 = vadd.f32 %v2206, %v2310
        %v2312 = vpop.f32.mrb[0].mxu0
        %2313 = vmatprep.mubr.f32.mxu0 %v1889
        %2314 = vmatmul.mubr.f32.gmra.mrb[0].mxu0 %v1888
        %v2315 = vpop.f32.mrb[0].mxu0
        %v2316 = vadd.f32 %v2211, %v2315
        %v2317 = vpop.f32.mrb[0].mxu0
        %2318 = vmatprep.mubr.f32.mxu0 %v1897
        %2319 = vmatmul.mubr.f32.gmra.mrb[0].mxu0 %v1896
        %v2320 = vpop.f32.mrb[0].mxu0
        %v2321 = vadd.f32 %v2216, %v2320
        %v2322 = vpop.f32.mrb[0].mxu0
        %2323 = vmatprep.mubr.f32.mxu0 %v1905
        %2324 = vmatmul.mubr.f32.gmra.mrb[0].mxu0 %v1904
        %v2325 = vpop.f32.mrb[0].mxu0
        %v2326 = vadd.f32 %v2221, %v2325
        %v2327 = vpop.f32.mrb[0].mxu0
        %2328 = vmatprep.mubr.f32.mxu0 %v1913
        %2329 = vmatmul.mubr.f32.gmra.mrb[0].mxu0 %v1912
        %v2330 = vpop.f32.mrb[0].mxu0
        %v2331 = vadd.f32 %v2226, %v2330
        %v2332 = vpop.f32.mrb[0].mxu0
        %2333 = vdwg.mxu0
        %v2334 = vld [vmem:[%s4] sm:$0xff]
        %v2335 = vld [vmem:[%s4 + $0x8] sm:$0xff]
        %v2336 = vld [vmem:[%s4 + $0x10] sm:$0xff]
        %v2337 = vld [vmem:[%s4 + $0x18] sm:$0xff]
        %v2338 = vld [vmem:[%s4 + $0x20] sm:$0xff]
        %v2339 = vld [vmem:[%s4 + $0x28] sm:$0xff]
        %v2340 = vld [vmem:[%s4 + $0x30] sm:$0xff]
        %v2341 = vld [vmem:[%s4 + $0x38] sm:$0xff]
        %v2342 = vld [vmem:[%s4 + $0x40] sm:$0xff]
        %v2343 = vld [vmem:[%s4 + $0x48] sm:$0xff]
        %v2344 = vld [vmem:[%s4 + $0x50] sm:$0xff]
        %v2345 = vld [vmem:[%s4 + $0x58] sm:$0xff]
        %v2346 = vld [vmem:[%s4 + $0x60] sm:$0xff]
        %v2347 = vld [vmem:[%s4 + $0x68] sm:$0xff]
        %v2348 = vld [vmem:[%s4 + $0x70] sm:$0xff]
        %v2349 = vld [vmem:[%s4 + $0x78] sm:$0xff]
        %v2350 = vld [vmem:[%s5] sm:$0x1]
        %v2352 = vlaneseq
        %v2353 = vshrl.u32 %v2352, 7
        %v2354 = vsub.s32 0, %v2353
        %v2355 = vrot.slane %v2350, %v2354
        %2357 = vmatprep.subr.mxu0 0.0
        %2358 = vmatpush1.msra.mxu0 %v2334
        %2359 = vmatprep.subr.mxu0 0.0
        %2360 = vmatpush1.msra.mxu0 %v2335
        %2361 = vmatprep.subr.mxu0 0.0
        %2362 = vmatpush1.msra.mxu0 %v2336
        %2363 = vmatprep.subr.mxu0 0.0
        %2364 = vmatpush1.msra.mxu0 %v2337
        %2365 = vmatprep.subr.mxu0 0.0
        %2366 = vmatpush1.msra.mxu0 %v2338
        %2367 = vmatprep.subr.mxu0 0.0
        %2368 = vmatpush1.msra.mxu0 %v2339
        %2369 = vmatprep.subr.mxu0 0.0
        %2370 = vmatpush1.msra.mxu0 %v2340
        %2371 = vmatprep.subr.mxu0 0.0
        %2372 = vmatpush1.msra.mxu0 %v2341
        %2373 = vmatprep.subr.mxu0 0.0
        %2374 = vmatpush1.msra.mxu0 %v2342
        %2375 = vmatprep.subr.mxu0 0.0
        %2376 = vmatpush1.msra.mxu0 %v2343
        %2377 = vmatprep.subr.mxu0 0.0
        %2378 = vmatpush1.msra.mxu0 %v2344
        %2379 = vmatprep.subr.mxu0 0.0
        %2380 = vmatpush1.msra.mxu0 %v2345
        %2381 = vmatprep.subr.mxu0 0.0
        %2382 = vmatpush1.msra.mxu0 %v2346
        %2383 = vmatprep.subr.mxu0 0.0
        %2384 = vmatpush1.msra.mxu0 %v2347
        %2385 = vmatprep.subr.mxu0 0.0
        %2386 = vmatpush1.msra.mxu0 %v2348
        %2387 = vmatprep.subr.mxu0 0.0
        %2388 = vmatpush1.msra.mxu0 %v2349
        %2389 = vmatprep.subr.mxu0 0.0
        %2390 = vmatpush1.msra.mxu0 0.0
        %2391 = vmatprep.subr.mxu0 0.0
        %2392 = vmatpush1.msra.mxu0 0.0
        %2393 = vmatprep.subr.mxu0 0.0
        %2394 = vmatpush1.msra.mxu0 0.0
        %2395 = vmatprep.subr.mxu0 0.0
        %2396 = vmatpush1.msra.mxu0 0.0
        %2397 = vmatprep.subr.mxu0 0.0
        %2398 = vmatpush1.msra.mxu0 0.0
        %2399 = vmatprep.subr.mxu0 0.0
        %2400 = vmatpush1.msra.mxu0 0.0
        %2401 = vmatprep.subr.mxu0 0.0
        %2402 = vmatpush1.msra.mxu0 0.0
        %2403 = vmatprep.subr.mxu0 0.0
        %2404 = vmatpush1.msra.mxu0 0.0
        %2405 = vmatprep.subr.mxu0 0.0
        %2406 = vmatpush1.msra.mxu0 0.0
        %2407 = vmatprep.subr.mxu0 0.0
        %2408 = vmatpush1.msra.mxu0 0.0
        %2409 = vmatprep.subr.mxu0 0.0
        %2410 = vmatpush1.msra.mxu0 0.0
        %2411 = vmatprep.subr.mxu0 0.0
        %2412 = vmatpush1.msra.mxu0 0.0
        %2413 = vmatprep.subr.mxu0 0.0
        %2414 = vmatpush1.msra.mxu0 0.0
        %2415 = vmatprep.subr.mxu0 0.0
        %2416 = vmatpush1.msra.mxu0 0.0
        %2417 = vmatprep.subr.mxu0 0.0
        %2418 = vmatpush1.msra.mxu0 0.0
        %2419 = vmatprep.subr.mxu0 0.0
        %2420 = vmatpush1.msra.mxu0 0.0
        %2421 = vmatprep.mubr.f32.mxu0 0.0
        %2422 = vmatmul.mubr.f32.gmra.mrb[0].mxu0 %v2296
        %v2423 = vpop.f32.mrb[0].mxu0
        %v2424 = vadd.f32 %v2355, %v2423
        %v2425 = vpop.f32.mrb[0].mxu0
        %2426 = vmatprep.mubr.f32.mxu0 0.0
        %2427 = vmatmul.mubr.f32.gmra.mrb[0].mxu0 %v2301
        %v2428 = vpop.f32.mrb[0].mxu0
        %v2429 = vadd.f32 %v2355, %v2428
        %v2430 = vpop.f32.mrb[0].mxu0
        %2431 = vmatprep.mubr.f32.mxu0 0.0
        %2432 = vmatmul.mubr.f32.gmra.mrb[0].mxu0 %v2306
        %v2433 = vpop.f32.mrb[0].mxu0
        %v2434 = vadd.f32 %v2355, %v2433
        %v2435 = vpop.f32.mrb[0].mxu0
        %2436 = vmatprep.mubr.f32.mxu0 0.0
        %2437 = vmatmul.mubr.f32.gmra.mrb[0].mxu0 %v2311
        %v2438 = vpop.f32.mrb[0].mxu0
        %v2439 = vadd.f32 %v2355, %v2438
        %v2440 = vpop.f32.mrb[0].mxu0
        %2441 = vmatprep.mubr.f32.mxu0 0.0
        %2442 = vmatmul.mubr.f32.gmra.mrb[0].mxu0 %v2316
        %v2443 = vpop.f32.mrb[0].mxu0
        %v2444 = vadd.f32 %v2355, %v2443
        %v2445 = vpop.f32.mrb[0].mxu0
        %2446 = vmatprep.mubr.f32.mxu0 0.0
        %2447 = vmatmul.mubr.f32.gmra.mrb[0].mxu0 %v2321
        %v2448 = vpop.f32.mrb[0].mxu0
        %v2449 = vadd.f32 %v2355, %v2448
        %v2450 = vpop.f32.mrb[0].mxu0
        %2451 = vmatprep.mubr.f32.mxu0 0.0
        %2452 = vmatmul.mubr.f32.gmra.mrb[0].mxu0 %v2326
        %v2453 = vpop.f32.mrb[0].mxu0
        %v2454 = vadd.f32 %v2355, %v2453
        %v2455 = vpop.f32.mrb[0].mxu0
        %2456 = vmatprep.mubr.f32.mxu0 0.0
        %2457 = vmatmul.mubr.f32.gmra.mrb[0].mxu0 %v2331
        %v2458 = vpop.f32.mrb[0].mxu0
        %v2459 = vadd.f32 %v2355, %v2458
        %v2460 = vpop.f32.mrb[0].mxu0
        %2461 = vdwg.mxu0
        %v2462 = vmax.f32 %v2424, 0.0
        %v2463 = vmax.f32 %v2429, 0.0
        %v2464 = vmax.f32 %v2434, 0.0
        %v2465 = vmax.f32 %v2439, 0.0
        %v2466 = vmax.f32 %v2444, 0.0
        %v2467 = vmax.f32 %v2449, 0.0
        %v2468 = vmax.f32 %v2454, 0.0
        %v2469 = vmax.f32 %v2459, 0.0
        %v2470 = vld [vmem:[%s6] sm:$0xff]
        %v2471 = vld [vmem:[%s6 + $0x8] sm:$0xff]
        %vm2472 = vcmask 523264
        %v2474 = vsel %vm2472, %v2470, 0
        %v2477 = vsel %vm2472, %v2471, 0
        %2479 = vmatprep.subr.mxu0 0.0
        %2480 = vmatpush1.msra.mxu0 %v2462
        %2481 = vmatprep.subr.mxu0 0.0
        %2482 = vmatpush1.msra.mxu0 %v2463
        %2483 = vmatprep.subr.mxu0 0.0
        %2484 = vmatpush1.msra.mxu0 %v2464
        %2485 = vmatprep.subr.mxu0 0.0
        %2486 = vmatpush1.msra.mxu0 %v2465
        %2487 = vmatprep.subr.mxu0 0.0
        %2488 = vmatpush1.msra.mxu0 %v2466
        %2489 = vmatprep.subr.mxu0 0.0
        %2490 = vmatpush1.msra.mxu0 %v2467
        %2491 = vmatprep.subr.mxu0 0.0
        %2492 = vmatpush1.msra.mxu0 %v2468
        %2493 = vmatprep.subr.mxu0 0.0
        %2494 = vmatpush1.msra.mxu0 %v2469
        %2495 = vmatprep.subr.mxu0 0.0
        %2496 = vmatpush1.msra.mxu0 0.0
        %2497 = vmatprep.subr.mxu0 0.0
        %2498 = vmatpush1.msra.mxu0 0.0
        %2499 = vmatprep.subr.mxu0 0.0
        %2500 = vmatpush1.msra.mxu0 0.0
        %2501 = vmatprep.subr.mxu0 0.0
        %2502 = vmatpush1.msra.mxu0 0.0
        %2503 = vmatprep.subr.mxu0 0.0
        %2504 = vmatpush1.msra.mxu0 0.0
        %2505 = vmatprep.subr.mxu0 0.0
        %2506 = vmatpush1.msra.mxu0 0.0
        %2507 = vmatprep.subr.mxu0 0.0
        %2508 = vmatpush1.msra.mxu0 0.0
        %2509 = vmatprep.subr.mxu0 0.0
        %2510 = vmatpush1.msra.mxu0 0.0
        %2511 = vmatprep.subr.mxu0 0.0
        %2512 = vmatpush1.msra.mxu0 0.0
        %2513 = vmatprep.subr.mxu0 0.0
        %2514 = vmatpush1.msra.mxu0 0.0
        %2515 = vmatprep.subr.mxu0 0.0
        %2516 = vmatpush1.msra.mxu0 0.0
        %2517 = vmatprep.subr.mxu0 0.0
        %2518 = vmatpush1.msra.mxu0 0.0
        %2519 = vmatprep.subr.mxu0 0.0
        %2520 = vmatpush1.msra.mxu0 0.0
        %2521 = vmatprep.subr.mxu0 0.0
        %2522 = vmatpush1.msra.mxu0 0.0
        %2523 = vmatprep.subr.mxu0 0.0
        %2524 = vmatpush1.msra.mxu0 0.0
        %2525 = vmatprep.subr.mxu0 0.0
        %2526 = vmatpush1.msra.mxu0 0.0
        %2527 = vmatprep.subr.mxu0 0.0
        %2528 = vmatpush1.msra.mxu0 0.0
        %2529 = vmatprep.subr.mxu0 0.0
        %2530 = vmatpush1.msra.mxu0 0.0
        %2531 = vmatprep.subr.mxu0 0.0
        %2532 = vmatpush1.msra.mxu0 0.0
        %2533 = vmatprep.subr.mxu0 0.0
        %2534 = vmatpush1.msra.mxu0 0.0
        %2535 = vmatprep.subr.mxu0 0.0
        %2536 = vmatpush1.msra.mxu0 0.0
        %2537 = vmatprep.subr.mxu0 0.0
        %2538 = vmatpush1.msra.mxu0 0.0
        %2539 = vmatprep.subr.mxu0 0.0
        %2540 = vmatpush1.msra.mxu0 0.0
        %2541 = vmatprep.subr.mxu0 0.0
        %2542 = vmatpush1.msra.mxu0 0.0
        %2543 = vmatprep.mubr.f32.mxu0 0.0
        %2544 = vmatmul.mubr.f32.gmra.mrb[0].mxu0 %v2474
        %v2545 = vpop.f32.mrb[0].mxu0
        %v2546 = vadd.f32 0.0, %v2545
        %v2547 = vpop.f32.mrb[0].mxu0
        %2548 = vmatprep.mubr.f32.mxu0 0.0
        %2549 = vmatmul.mubr.f32.gmra.mrb[0].mxu0 %v2477
        %v2550 = vpop.f32.mrb[0].mxu0
        %v2551 = vadd.f32 0.0, %v2550
        %v2552 = vpop.f32.mrb[0].mxu0
        %2553 = vdwg.mxu0
        %v2554 = vld [vmem:[%s7] sm:$0xff]
        %v2555 = vld [vmem:[%s7 + $0x8] sm:$0xff]
        %v2556 = vld [vmem:[%s7 + $0x10] sm:$0xff]
        %v2557 = vld [vmem:[%s7 + $0x18] sm:$0xff]
        %v2558 = vld [vmem:[%s7 + $0x20] sm:$0xff]
        %v2559 = vld [vmem:[%s7 + $0x28] sm:$0xff]
        %v2560 = vld [vmem:[%s7 + $0x30] sm:$0xff]
        %v2561 = vld [vmem:[%s7 + $0x38] sm:$0xff]
        %v2562 = vld [vmem:[%s7 + $0x40] sm:$0xff]
        %v2563 = vld [vmem:[%s7 + $0x48] sm:$0xff]
        %v2564 = vld [vmem:[%s7 + $0x50] sm:$0xff]
        %v2565 = vld [vmem:[%s7 + $0x58] sm:$0xff]
        %v2566 = vld [vmem:[%s7 + $0x60] sm:$0xff]
        %v2567 = vld [vmem:[%s7 + $0x68] sm:$0xff]
        %v2568 = vld [vmem:[%s7 + $0x70] sm:$0xff]
        %v2569 = vld [vmem:[%s7 + $0x78] sm:$0xff]
        %v2570 = vld [vmem:[%s8] sm:$0x1]
        %v2572 = vlaneseq
        %v2573 = vshrl.u32 %v2572, 7
        %v2574 = vsub.s32 0, %v2573
        %v2575 = vrot.slane %v2570, %v2574
        %2577 = vmatprep.subr.mxu0 0.0
        %2578 = vmatpush1.msra.mxu0 %v2554
        %2579 = vmatprep.subr.mxu0 0.0
        %2580 = vmatpush1.msra.mxu0 %v2555
        %2581 = vmatprep.subr.mxu0 0.0
        %2582 = vmatpush1.msra.mxu0 %v2556
        %2583 = vmatprep.subr.mxu0 0.0
        %2584 = vmatpush1.msra.mxu0 %v2557
        %2585 = vmatprep.subr.mxu0 0.0
        %2586 = vmatpush1.msra.mxu0 %v2558
        %2587 = vmatprep.subr.mxu0 0.0
        %2588 = vmatpush1.msra.mxu0 %v2559
        %2589 = vmatprep.subr.mxu0 0.0
        %2590 = vmatpush1.msra.mxu0 %v2560
        %2591 = vmatprep.subr.mxu0 0.0
        %2592 = vmatpush1.msra.mxu0 %v2561
        %2593 = vmatprep.subr.mxu0 0.0
        %2594 = vmatpush1.msra.mxu0 %v2562
        %2595 = vmatprep.subr.mxu0 0.0
        %2596 = vmatpush1.msra.mxu0 %v2563
        %2597 = vmatprep.subr.mxu0 0.0
        %2598 = vmatpush1.msra.mxu0 %v2564
        %2599 = vmatprep.subr.mxu0 0.0
        %2600 = vmatpush1.msra.mxu0 %v2565
        %2601 = vmatprep.subr.mxu0 0.0
        %2602 = vmatpush1.msra.mxu0 %v2566
        %2603 = vmatprep.subr.mxu0 0.0
        %2604 = vmatpush1.msra.mxu0 %v2567
        %2605 = vmatprep.subr.mxu0 0.0
        %2606 = vmatpush1.msra.mxu0 %v2568
        %2607 = vmatprep.subr.mxu0 0.0
        %2608 = vmatpush1.msra.mxu0 %v2569
        %2609 = vmatprep.subr.mxu0 0.0
        %2610 = vmatpush1.msra.mxu0 0.0
        %2611 = vmatprep.subr.mxu0 0.0
        %2612 = vmatpush1.msra.mxu0 0.0
        %2613 = vmatprep.subr.mxu0 0.0
        %2614 = vmatpush1.msra.mxu0 0.0
        %2615 = vmatprep.subr.mxu0 0.0
        %2616 = vmatpush1.msra.mxu0 0.0
        %2617 = vmatprep.subr.mxu0 0.0
        %2618 = vmatpush1.msra.mxu0 0.0
        %2619 = vmatprep.subr.mxu0 0.0
        %2620 = vmatpush1.msra.mxu0 0.0
        %2621 = vmatprep.subr.mxu0 0.0
        %2622 = vmatpush1.msra.mxu0 0.0
        %2623 = vmatprep.subr.mxu0 0.0
        %2624 = vmatpush1.msra.mxu0 0.0
        %2625 = vmatprep.subr.mxu0 0.0
        %2626 = vmatpush1.msra.mxu0 0.0
        %2627 = vmatprep.subr.mxu0 0.0
        %2628 = vmatpush1.msra.mxu0 0.0
        %2629 = vmatprep.subr.mxu0 0.0
        %2630 = vmatpush1.msra.mxu0 0.0
        %2631 = vmatprep.subr.mxu0 0.0
        %2632 = vmatpush1.msra.mxu0 0.0
        %2633 = vmatprep.subr.mxu0 0.0
        %2634 = vmatpush1.msra.mxu0 0.0
        %2635 = vmatprep.subr.mxu0 0.0
        %2636 = vmatpush1.msra.mxu0 0.0
        %2637 = vmatprep.subr.mxu0 0.0
        %2638 = vmatpush1.msra.mxu0 0.0
        %2639 = vmatprep.subr.mxu0 0.0
        %2640 = vmatpush1.msra.mxu0 0.0
        %2641 = vmatprep.mubr.f32.mxu0 0.0
        %2642 = vmatmul.mubr.f32.gmra.mrb[0].mxu0 %v2546
        %v2643 = vpop.f32.mrb[0].mxu0
        %v2644 = vadd.f32 %v2575, %v2643
        %v2645 = vpop.f32.mrb[0].mxu0
        %2646 = vmatprep.mubr.f32.mxu0 0.0
        %2647 = vmatmul.mubr.f32.gmra.mrb[0].mxu0 %v2551
        %v2648 = vpop.f32.mrb[0].mxu0
        %v2649 = vadd.f32 %v2575, %v2648
        %v2650 = vpop.f32.mrb[0].mxu0
        %2651 = vdwg.mxu0
        %v2652 = vmax.f32 %v2644, 0.0
        %v2653 = vmax.f32 %v2649, 0.0
        %v2654 = vld [vmem:[%s9] sm:$0xf]
        %vm2655 = vcmask 130048
        %v2657 = vsel %vm2655, %v2654, 0
        %2659 = vmatprep.subr.mxu0 0.0
        %2660 = vmatpush1.msra.mxu0 %v2652
        %2661 = vmatprep.subr.mxu0 0.0
        %2662 = vmatpush1.msra.mxu0 %v2653
        %2663 = vmatprep.subr.mxu0 0.0
        %2664 = vmatpush1.msra.mxu0 0.0
        %2665 = vmatprep.subr.mxu0 0.0
        %2666 = vmatpush1.msra.mxu0 0.0
        %2667 = vmatprep.subr.mxu0 0.0
        %2668 = vmatpush1.msra.mxu0 0.0
        %2669 = vmatprep.subr.mxu0 0.0
        %2670 = vmatpush1.msra.mxu0 0.0
        %2671 = vmatprep.subr.mxu0 0.0
        %2672 = vmatpush1.msra.mxu0 0.0
        %2673 = vmatprep.subr.mxu0 0.0
        %2674 = vmatpush1.msra.mxu0 0.0
        %2675 = vmatprep.subr.mxu0 0.0
        %2676 = vmatpush1.msra.mxu0 0.0
        %2677 = vmatprep.subr.mxu0 0.0
        %2678 = vmatpush1.msra.mxu0 0.0
        %2679 = vmatprep.subr.mxu0 0.0
        %2680 = vmatpush1.msra.mxu0 0.0
        %2681 = vmatprep.subr.mxu0 0.0
        %2682 = vmatpush1.msra.mxu0 0.0
        %2683 = vmatprep.subr.mxu0 0.0
        %2684 = vmatpush1.msra.mxu0 0.0
        %2685 = vmatprep.subr.mxu0 0.0
        %2686 = vmatpush1.msra.mxu0 0.0
        %2687 = vmatprep.subr.mxu0 0.0
        %2688 = vmatpush1.msra.mxu0 0.0
        %2689 = vmatprep.subr.mxu0 0.0
        %2690 = vmatpush1.msra.mxu0 0.0
        %2691 = vmatprep.subr.mxu0 0.0
        %2692 = vmatpush1.msra.mxu0 0.0
        %2693 = vmatprep.subr.mxu0 0.0
        %2694 = vmatpush1.msra.mxu0 0.0
        %2695 = vmatprep.subr.mxu0 0.0
        %2696 = vmatpush1.msra.mxu0 0.0
        %2697 = vmatprep.subr.mxu0 0.0
        %2698 = vmatpush1.msra.mxu0 0.0
        %2699 = vmatprep.subr.mxu0 0.0
        %2700 = vmatpush1.msra.mxu0 0.0
        %2701 = vmatprep.subr.mxu0 0.0
        %2702 = vmatpush1.msra.mxu0 0.0
        %2703 = vmatprep.subr.mxu0 0.0
        %2704 = vmatpush1.msra.mxu0 0.0
        %2705 = vmatprep.subr.mxu0 0.0
        %2706 = vmatpush1.msra.mxu0 0.0
        %2707 = vmatprep.subr.mxu0 0.0
        %2708 = vmatpush1.msra.mxu0 0.0
        %2709 = vmatprep.subr.mxu0 0.0
        %2710 = vmatpush1.msra.mxu0 0.0
        %2711 = vmatprep.subr.mxu0 0.0
        %2712 = vmatpush1.msra.mxu0 0.0
        %2713 = vmatprep.subr.mxu0 0.0
        %2714 = vmatpush1.msra.mxu0 0.0
        %2715 = vmatprep.subr.mxu0 0.0
        %2716 = vmatpush1.msra.mxu0 0.0
        %2717 = vmatprep.subr.mxu0 0.0
        %2718 = vmatpush1.msra.mxu0 0.0
        %2719 = vmatprep.subr.mxu0 0.0
        %2720 = vmatpush1.msra.mxu0 0.0
        %2721 = vmatprep.subr.mxu0 0.0
        %2722 = vmatpush1.msra.mxu0 0.0
        %2723 = vmatprep.mubr.f32.mxu0 0.0
        %2724 = vmatmul.mubr.f32.gmra.mrb[0].mxu0 %v2657
        %v2725 = vpop.f32.mrb[0].mxu0
        %v2726 = vadd.f32 0.0, %v2725
        %v2727 = vpop.f32.mrb[0].mxu0
        %2728 = vdwg.mxu0
        %v2729 = vld [vmem:[%s12] sm:$0xff]
        %v2730 = vld [vmem:[%s12 + $0x8] sm:$0xff]
        %v2731 = vld [vmem:[%s12 + $0x10] sm:$0xff]
        %v2732 = vld [vmem:[%s12 + $0x18] sm:$0xff]
        %v2733 = vld [vmem:[%s12 + $0x20] sm:$0xff]
        %v2734 = vld [vmem:[%s12 + $0x28] sm:$0xff]
        %v2735 = vld [vmem:[%s12 + $0x30] sm:$0xff]
        %v2736 = vld [vmem:[%s12 + $0x38] sm:$0xff]
        %v2737 = vld [vmem:[%s12 + $0x40] sm:$0xff]
        %v2738 = vld [vmem:[%s12 + $0x48] sm:$0xff]
        %v2739 = vld [vmem:[%s12 + $0x50] sm:$0xff]
        %v2740 = vld [vmem:[%s12 + $0x58] sm:$0xff]
        %v2741 = vld [vmem:[%s12 + $0x60] sm:$0xff]
        %v2742 = vld [vmem:[%s12 + $0x68] sm:$0xff]
        %v2743 = vld [vmem:[%s12 + $0x70] sm:$0xff]
        %v2744 = vld [vmem:[%s12 + $0x78] sm:$0xff]
        %v2745 = vld [vmem:[%s10] sm:$0xff]
        %v2746 = vld [vmem:[%s10 + $0x8] sm:$0xff]
        %v2747 = vld [vmem:[%s10 + $0x10] sm:$0xff]
        %v2748 = vld [vmem:[%s10 + $0x18] sm:$0xff]
        %v2749 = vld [vmem:[%s10 + $0x20] sm:$0xff]
        %v2750 = vld [vmem:[%s10 + $0x28] sm:$0xff]
        %v2751 = vld [vmem:[%s10 + $0x30] sm:$0xff]
        %v2752 = vld [vmem:[%s10 + $0x38] sm:$0xff]
        %v2754 = vsel %vm2655, %v2745, 0
        %v2757 = vsel %vm2655, %v2746, 0
        %v2760 = vsel %vm2655, %v2747, 0
        %v2763 = vsel %vm2655, %v2748, 0
        %v2766 = vsel %vm2655, %v2749, 0
        %v2769 = vsel %vm2655, %v2750, 0
        %v2772 = vsel %vm2655, %v2751, 0
        %v2775 = vsel %vm2655, %v2752, 0
        %2777 = vmatprep.subr.mxu0 0.0
        %2778 = vmatpush1.msra.mxu0 %v2546
        %2779 = vmatprep.subr.mxu0 0.0
        %2780 = vmatpush1.msra.mxu0 %v2551
        %2781 = vmatprep.subr.mxu0 0.0
        %2782 = vmatpush1.msra.mxu0 0.0
        %2783 = vmatprep.subr.mxu0 0.0
        %2784 = vmatpush1.msra.mxu0 0.0
        %2785 = vmatprep.subr.mxu0 0.0
        %2786 = vmatpush1.msra.mxu0 0.0
        %2787 = vmatprep.subr.mxu0 0.0
        %2788 = vmatpush1.msra.mxu0 0.0
        %2789 = vmatprep.subr.mxu0 0.0
        %2790 = vmatpush1.msra.mxu0 0.0
        %2791 = vmatprep.subr.mxu0 0.0
        %2792 = vmatpush1.msra.mxu0 0.0
        %2793 = vmatprep.subr.mxu0 0.0
        %2794 = vmatpush1.msra.mxu0 0.0
        %2795 = vmatprep.subr.mxu0 0.0
        %2796 = vmatpush1.msra.mxu0 0.0
        %2797 = vmatprep.subr.mxu0 0.0
        %2798 = vmatpush1.msra.mxu0 0.0
        %2799 = vmatprep.subr.mxu0 0.0
        %2800 = vmatpush1.msra.mxu0 0.0
        %2801 = vmatprep.subr.mxu0 0.0
        %2802 = vmatpush1.msra.mxu0 0.0
        %2803 = vmatprep.subr.mxu0 0.0
        %2804 = vmatpush1.msra.mxu0 0.0
        %2805 = vmatprep.subr.mxu0 0.0
        %2806 = vmatpush1.msra.mxu0 0.0
        %2807 = vmatprep.subr.mxu0 0.0
        %2808 = vmatpush1.msra.mxu0 0.0
        %2809 = vmatprep.subr.mxu0 0.0
        %2810 = vmatpush1.msra.mxu0 0.0
        %2811 = vmatprep.subr.mxu0 0.0
        %2812 = vmatpush1.msra.mxu0 0.0
        %2813 = vmatprep.subr.mxu0 0.0
        %2814 = vmatpush1.msra.mxu0 0.0
        %2815 = vmatprep.subr.mxu0 0.0
        %2816 = vmatpush1.msra.mxu0 0.0
        %2817 = vmatprep.subr.mxu0 0.0
        %2818 = vmatpush1.msra.mxu0 0.0
        %2819 = vmatprep.subr.mxu0 0.0
        %2820 = vmatpush1.msra.mxu0 0.0
        %2821 = vmatprep.subr.mxu0 0.0
        %2822 = vmatpush1.msra.mxu0 0.0
        %2823 = vmatprep.subr.mxu0 0.0
        %2824 = vmatpush1.msra.mxu0 0.0
        %2825 = vmatprep.subr.mxu0 0.0
        %2826 = vmatpush1.msra.mxu0 0.0
        %2827 = vmatprep.subr.mxu0 0.0
        %2828 = vmatpush1.msra.mxu0 0.0
        %2829 = vmatprep.subr.mxu0 0.0
        %2830 = vmatpush1.msra.mxu0 0.0
        %2831 = vmatprep.subr.mxu0 0.0
        %2832 = vmatpush1.msra.mxu0 0.0
        %2833 = vmatprep.subr.mxu0 0.0
        %2834 = vmatpush1.msra.mxu0 0.0
        %2835 = vmatprep.subr.mxu0 0.0
        %2836 = vmatpush1.msra.mxu0 0.0
        %2837 = vmatprep.subr.mxu0 0.0
        %2838 = vmatpush1.msra.mxu0 0.0
        %2839 = vmatprep.subr.mxu0 0.0
        %2840 = vmatpush1.msra.mxu0 0.0
        %2841 = vmatprep.mubr.f32.mxu0 0.0
        %2842 = vmatmul.mubr.f32.gmra.mrb[0].mxu0 %v2754
        %v2843 = vpop.f32.mrb[0].mxu0
        %v2844 = vadd.f32 0.0, %v2843
        %v2845 = vpop.f32.mrb[0].mxu0
        %2846 = vmatprep.mubr.f32.mxu0 0.0
        %2847 = vmatmul.mubr.f32.gmra.mrb[0].mxu0 %v2757
        %v2848 = vpop.f32.mrb[0].mxu0
        %v2849 = vadd.f32 0.0, %v2848
        %v2850 = vpop.f32.mrb[0].mxu0
        %2851 = vmatprep.mubr.f32.mxu0 0.0
        %2852 = vmatmul.mubr.f32.gmra.mrb[0].mxu0 %v2760
        %v2853 = vpop.f32.mrb[0].mxu0
        %v2854 = vadd.f32 0.0, %v2853
        %v2855 = vpop.f32.mrb[0].mxu0
        %2856 = vmatprep.mubr.f32.mxu0 0.0
        %2857 = vmatmul.mubr.f32.gmra.mrb[0].mxu0 %v2763
        %v2858 = vpop.f32.mrb[0].mxu0
        %v2859 = vadd.f32 0.0, %v2858
        %v2860 = vpop.f32.mrb[0].mxu0
        %2861 = vmatprep.mubr.f32.mxu0 0.0
        %2862 = vmatmul.mubr.f32.gmra.mrb[0].mxu0 %v2766
        %v2863 = vpop.f32.mrb[0].mxu0
        %v2864 = vadd.f32 0.0, %v2863
        %v2865 = vpop.f32.mrb[0].mxu0
        %2866 = vmatprep.mubr.f32.mxu0 0.0
        %2867 = vmatmul.mubr.f32.gmra.mrb[0].mxu0 %v2769
        %v2868 = vpop.f32.mrb[0].mxu0
        %v2869 = vadd.f32 0.0, %v2868
        %v2870 = vpop.f32.mrb[0].mxu0
        %2871 = vmatprep.mubr.f32.mxu0 0.0
        %2872 = vmatmul.mubr.f32.gmra.mrb[0].mxu0 %v2772
        %v2873 = vpop.f32.mrb[0].mxu0
        %v2874 = vadd.f32 0.0, %v2873
        %v2875 = vpop.f32.mrb[0].mxu0
        %2876 = vmatprep.mubr.f32.mxu0 0.0
        %2877 = vmatmul.mubr.f32.gmra.mrb[0].mxu0 %v2775
        %v2878 = vpop.f32.mrb[0].mxu0
        %v2879 = vadd.f32 0.0, %v2878
        %v2880 = vpop.f32.mrb[0].mxu0
        %2881 = vdwg.mxu0
        %v2882 = vld [vmem:[%s13] sm:$0xff]
        %v2883 = vld [vmem:[%s13 + $0x8] sm:$0xff]
        %v2884 = vld [vmem:[%s13 + $0x10] sm:$0xff]
        %v2885 = vld [vmem:[%s13 + $0x18] sm:$0xff]
        %v2886 = vld [vmem:[%s13 + $0x20] sm:$0xff]
        %v2887 = vld [vmem:[%s13 + $0x28] sm:$0xff]
        %v2888 = vld [vmem:[%s13 + $0x30] sm:$0xff]
        %v2889 = vld [vmem:[%s13 + $0x38] sm:$0xff]
        %v2890 = vld [vmem:[%s13 + $0x40] sm:$0xff]
        %v2891 = vld [vmem:[%s13 + $0x48] sm:$0xff]
        %v2892 = vld [vmem:[%s13 + $0x50] sm:$0xff]
        %v2893 = vld [vmem:[%s13 + $0x58] sm:$0xff]
        %v2894 = vld [vmem:[%s13 + $0x60] sm:$0xff]
        %v2895 = vld [vmem:[%s13 + $0x68] sm:$0xff]
        %v2896 = vld [vmem:[%s13 + $0x70] sm:$0xff]
        %v2897 = vld [vmem:[%s13 + $0x78] sm:$0xff]
        %2898 = vmatprep.subr.mxu0 0.0
        %2899 = vmatpush1.msra.mxu0 %v2882
        %2900 = vmatprep.subr.mxu0 0.0
        %2901 = vmatpush1.msra.mxu0 %v2883
        %2902 = vmatprep.subr.mxu0 0.0
        %2903 = vmatpush1.msra.mxu0 %v2884
        %2904 = vmatprep.subr.mxu0 0.0
        %2905 = vmatpush1.msra.mxu0 %v2885
        %2906 = vmatprep.subr.mxu0 0.0
        %2907 = vmatpush1.msra.mxu0 %v2886
        %2908 = vmatprep.subr.mxu0 0.0
        %2909 = vmatpush1.msra.mxu0 %v2887
        %2910 = vmatprep.subr.mxu0 0.0
        %2911 = vmatpush1.msra.mxu0 %v2888
        %2912 = vmatprep.subr.mxu0 0.0
        %2913 = vmatpush1.msra.mxu0 %v2889
        %2914 = vmatprep.subr.mxu0 0.0
        %2915 = vmatpush1.msra.mxu0 %v2890
        %2916 = vmatprep.subr.mxu0 0.0
        %2917 = vmatpush1.msra.mxu0 %v2891
        %2918 = vmatprep.subr.mxu0 0.0
        %2919 = vmatpush1.msra.mxu0 %v2892
        %2920 = vmatprep.subr.mxu0 0.0
        %2921 = vmatpush1.msra.mxu0 %v2893
        %2922 = vmatprep.subr.mxu0 0.0
        %2923 = vmatpush1.msra.mxu0 %v2894
        %2924 = vmatprep.subr.mxu0 0.0
        %2925 = vmatpush1.msra.mxu0 %v2895
        %2926 = vmatprep.subr.mxu0 0.0
        %2927 = vmatpush1.msra.mxu0 %v2896
        %2928 = vmatprep.subr.mxu0 0.0
        %2929 = vmatpush1.msra.mxu0 %v2897
        %2930 = vmatprep.subr.mxu0 0.0
        %2931 = vmatpush1.msra.mxu0 0.0
        %2932 = vmatprep.subr.mxu0 0.0
        %2933 = vmatpush1.msra.mxu0 0.0
        %2934 = vmatprep.subr.mxu0 0.0
        %2935 = vmatpush1.msra.mxu0 0.0
        %2936 = vmatprep.subr.mxu0 0.0
        %2937 = vmatpush1.msra.mxu0 0.0
        %2938 = vmatprep.subr.mxu0 0.0
        %2939 = vmatpush1.msra.mxu0 0.0
        %2940 = vmatprep.subr.mxu0 0.0
        %2941 = vmatpush1.msra.mxu0 0.0
        %2942 = vmatprep.subr.mxu0 0.0
        %2943 = vmatpush1.msra.mxu0 0.0
        %2944 = vmatprep.subr.mxu0 0.0
        %2945 = vmatpush1.msra.mxu0 0.0
        %2946 = vmatprep.subr.mxu0 0.0
        %2947 = vmatpush1.msra.mxu0 0.0
        %2948 = vmatprep.subr.mxu0 0.0
        %2949 = vmatpush1.msra.mxu0 0.0
        %2950 = vmatprep.subr.mxu0 0.0
        %2951 = vmatpush1.msra.mxu0 0.0
        %2952 = vmatprep.subr.mxu0 0.0
        %2953 = vmatpush1.msra.mxu0 0.0
        %2954 = vmatprep.subr.mxu0 0.0
        %2955 = vmatpush1.msra.mxu0 0.0
        %2956 = vmatprep.subr.mxu0 0.0
        %2957 = vmatpush1.msra.mxu0 0.0
        %2958 = vmatprep.subr.mxu0 0.0
        %2959 = vmatpush1.msra.mxu0 0.0
        %2960 = vmatprep.subr.mxu0 0.0
        %2961 = vmatpush1.msra.mxu0 0.0
        %2962 = vmatprep.mubr.f32.mxu0 0.0
        %2963 = vmatmul.mubr.f32.gmra.mrb[0].mxu0 %v2844
        %v2964 = vpop.f32.mrb[0].mxu0
        %v2965 = vadd.f32 0.0, %v2964
        %v2966 = vpop.f32.mrb[0].mxu0
        %2967 = vmatprep.mubr.f32.mxu0 0.0
        %2968 = vmatmul.mubr.f32.gmra.mrb[0].mxu0 %v2849
        %v2969 = vpop.f32.mrb[0].mxu0
        %v2970 = vadd.f32 0.0, %v2969
        %v2971 = vpop.f32.mrb[0].mxu0
        %2972 = vmatprep.mubr.f32.mxu0 0.0
        %2973 = vmatmul.mubr.f32.gmra.mrb[0].mxu0 %v2854
        %v2974 = vpop.f32.mrb[0].mxu0
        %v2975 = vadd.f32 0.0, %v2974
        %v2976 = vpop.f32.mrb[0].mxu0
        %2977 = vmatprep.mubr.f32.mxu0 0.0
        %2978 = vmatmul.mubr.f32.gmra.mrb[0].mxu0 %v2859
        %v2979 = vpop.f32.mrb[0].mxu0
        %v2980 = vadd.f32 0.0, %v2979
        %v2981 = vpop.f32.mrb[0].mxu0
        %2982 = vmatprep.mubr.f32.mxu0 0.0
        %2983 = vmatmul.mubr.f32.gmra.mrb[0].mxu0 %v2864
        %v2984 = vpop.f32.mrb[0].mxu0
        %v2985 = vadd.f32 0.0, %v2984
        %v2986 = vpop.f32.mrb[0].mxu0
        %2987 = vmatprep.mubr.f32.mxu0 0.0
        %2988 = vmatmul.mubr.f32.gmra.mrb[0].mxu0 %v2869
        %v2989 = vpop.f32.mrb[0].mxu0
        %v2990 = vadd.f32 0.0, %v2989
        %v2991 = vpop.f32.mrb[0].mxu0
        %2992 = vmatprep.mubr.f32.mxu0 0.0
        %2993 = vmatmul.mubr.f32.gmra.mrb[0].mxu0 %v2874
        %v2994 = vpop.f32.mrb[0].mxu0
        %v2995 = vadd.f32 0.0, %v2994
        %v2996 = vpop.f32.mrb[0].mxu0
        %2997 = vmatprep.mubr.f32.mxu0 0.0
        %2998 = vmatmul.mubr.f32.gmra.mrb[0].mxu0 %v2879
        %v2999 = vpop.f32.mrb[0].mxu0
        %v3000 = vadd.f32 0.0, %v2999
        %v3001 = vpop.f32.mrb[0].mxu0
        %3002 = vdwg.mxu0
        %3003 = vmatprep.subr.mxu0 0.0
        %3004 = vmatpush1.msra.mxu0 %v2729
        %3005 = vmatprep.subr.mxu0 0.0
        %3006 = vmatpush1.msra.mxu0 %v2730
        %3007 = vmatprep.subr.mxu0 0.0
        %3008 = vmatpush1.msra.mxu0 %v2731
        %3009 = vmatprep.subr.mxu0 0.0
        %3010 = vmatpush1.msra.mxu0 %v2732
        %3011 = vmatprep.subr.mxu0 0.0
        %3012 = vmatpush1.msra.mxu0 %v2733
        %3013 = vmatprep.subr.mxu0 0.0
        %3014 = vmatpush1.msra.mxu0 %v2734
        %3015 = vmatprep.subr.mxu0 0.0
        %3016 = vmatpush1.msra.mxu0 %v2735
        %3017 = vmatprep.subr.mxu0 0.0
        %3018 = vmatpush1.msra.mxu0 %v2736
        %3019 = vmatprep.subr.mxu0 0.0
        %3020 = vmatpush1.msra.mxu0 %v2737
        %3021 = vmatprep.subr.mxu0 0.0
        %3022 = vmatpush1.msra.mxu0 %v2738
        %3023 = vmatprep.subr.mxu0 0.0
        %3024 = vmatpush1.msra.mxu0 %v2739
        %3025 = vmatprep.subr.mxu0 0.0
        %3026 = vmatpush1.msra.mxu0 %v2740
        %3027 = vmatprep.subr.mxu0 0.0
        %3028 = vmatpush1.msra.mxu0 %v2741
        %3029 = vmatprep.subr.mxu0 0.0
        %3030 = vmatpush1.msra.mxu0 %v2742
        %3031 = vmatprep.subr.mxu0 0.0
        %3032 = vmatpush1.msra.mxu0 %v2743
        %3033 = vmatprep.subr.mxu0 0.0
        %3034 = vmatpush1.msra.mxu0 %v2744
        %3035 = vmatprep.subr.mxu0 0.0
        %3036 = vmatpush1.msra.mxu0 0.0
        %3037 = vmatprep.subr.mxu0 0.0
        %3038 = vmatpush1.msra.mxu0 0.0
        %3039 = vmatprep.subr.mxu0 0.0
        %3040 = vmatpush1.msra.mxu0 0.0
        %3041 = vmatprep.subr.mxu0 0.0
        %3042 = vmatpush1.msra.mxu0 0.0
        %3043 = vmatprep.subr.mxu0 0.0
        %3044 = vmatpush1.msra.mxu0 0.0
        %3045 = vmatprep.subr.mxu0 0.0
        %3046 = vmatpush1.msra.mxu0 0.0
        %3047 = vmatprep.subr.mxu0 0.0
        %3048 = vmatpush1.msra.mxu0 0.0
        %3049 = vmatprep.subr.mxu0 0.0
        %3050 = vmatpush1.msra.mxu0 0.0
        %3051 = vmatprep.subr.mxu0 0.0
        %3052 = vmatpush1.msra.mxu0 0.0
        %3053 = vmatprep.subr.mxu0 0.0
        %3054 = vmatpush1.msra.mxu0 0.0
        %3055 = vmatprep.subr.mxu0 0.0
        %3056 = vmatpush1.msra.mxu0 0.0
        %3057 = vmatprep.subr.mxu0 0.0
        %3058 = vmatpush1.msra.mxu0 0.0
        %3059 = vmatprep.subr.mxu0 0.0
        %3060 = vmatpush1.msra.mxu0 0.0
        %3061 = vmatprep.subr.mxu0 0.0
        %3062 = vmatpush1.msra.mxu0 0.0
        %3063 = vmatprep.subr.mxu0 0.0
        %3064 = vmatpush1.msra.mxu0 0.0
        %3065 = vmatprep.subr.mxu0 0.0
        %3066 = vmatpush1.msra.mxu0 0.0
        %3067 = vmatprep.mubr.f32.mxu0 0.0
        %3068 = vmatmul.mubr.f32.gmra.mrb[0].mxu0 %v2296
        %v3069 = vpop.f32.mrb[0].mxu0
        %v3070 = vadd.f32 %v2965, %v3069
        %v3071 = vpop.f32.mrb[0].mxu0
        %3072 = vmatprep.mubr.f32.mxu0 0.0
        %3073 = vmatmul.mubr.f32.gmra.mrb[0].mxu0 %v2301
        %v3074 = vpop.f32.mrb[0].mxu0
        %v3075 = vadd.f32 %v2970, %v3074
        %v3076 = vpop.f32.mrb[0].mxu0
        %3077 = vmatprep.mubr.f32.mxu0 0.0
        %3078 = vmatmul.mubr.f32.gmra.mrb[0].mxu0 %v2306
        %v3079 = vpop.f32.mrb[0].mxu0
        %v3080 = vadd.f32 %v2975, %v3079
        %v3081 = vpop.f32.mrb[0].mxu0
        %3082 = vmatprep.mubr.f32.mxu0 0.0
        %3083 = vmatmul.mubr.f32.gmra.mrb[0].mxu0 %v2311
        %v3084 = vpop.f32.mrb[0].mxu0
        %v3085 = vadd.f32 %v2980, %v3084
        %v3086 = vpop.f32.mrb[0].mxu0
        %3087 = vmatprep.mubr.f32.mxu0 0.0
        %3088 = vmatmul.mubr.f32.gmra.mrb[0].mxu0 %v2316
        %v3089 = vpop.f32.mrb[0].mxu0
        %v3090 = vadd.f32 %v2985, %v3089
        %v3091 = vpop.f32.mrb[0].mxu0
        %3092 = vmatprep.mubr.f32.mxu0 0.0
        %3093 = vmatmul.mubr.f32.gmra.mrb[0].mxu0 %v2321
        %v3094 = vpop.f32.mrb[0].mxu0
        %v3095 = vadd.f32 %v2990, %v3094
        %v3096 = vpop.f32.mrb[0].mxu0
        %3097 = vmatprep.mubr.f32.mxu0 0.0
        %3098 = vmatmul.mubr.f32.gmra.mrb[0].mxu0 %v2326
        %v3099 = vpop.f32.mrb[0].mxu0
        %v3100 = vadd.f32 %v2995, %v3099
        %v3101 = vpop.f32.mrb[0].mxu0
        %3102 = vmatprep.mubr.f32.mxu0 0.0
        %3103 = vmatmul.mubr.f32.gmra.mrb[0].mxu0 %v2331
        %v3104 = vpop.f32.mrb[0].mxu0
        %v3105 = vadd.f32 %v3000, %v3104
        %v3106 = vpop.f32.mrb[0].mxu0
        %3107 = vdwg.mxu0
        %v3108 = vld [vmem:[%s11] sm:$0xff]
        %v3109 = vld [vmem:[%s11 + $0x8] sm:$0xff]
        %v3110 = vld [vmem:[%s11 + $0x10] sm:$0xff]
        %v3111 = vld [vmem:[%s11 + $0x18] sm:$0xff]
        %v3112 = vld [vmem:[%s11 + $0x20] sm:$0xff]
        %v3113 = vld [vmem:[%s11 + $0x28] sm:$0xff]
        %v3114 = vld [vmem:[%s11 + $0x30] sm:$0xff]
        %v3115 = vld [vmem:[%s11 + $0x38] sm:$0xff]
        %vm3116 = vcmask 31744
        %v3118 = vsel %vm3116, %v3108, 0
        %v3121 = vsel %vm3116, %v3109, 0
        %v3124 = vsel %vm3116, %v3110, 0
        %v3127 = vsel %vm3116, %v3111, 0
        %v3130 = vsel %vm3116, %v3112, 0
        %v3133 = vsel %vm3116, %v3113, 0
        %v3136 = vsel %vm3116, %v3114, 0
        %v3139 = vsel %vm3116, %v3115, 0
        %vm3141 = vcmask 1043456
        %v3143 = vsel %vm3141, %v2726, 0
        %3145 = vmatprep.subr.mxu0 0.0
        %3146 = vmatpush1.msra.mxu0 %v3143
        %3147 = vmatprep.subr.mxu0 0.0
        %3148 = vmatpush1.msra.mxu0 0.0
        %3149 = vmatprep.subr.mxu0 0.0
        %3150 = vmatpush1.msra.mxu0 0.0
        %3151 = vmatprep.subr.mxu0 0.0
        %3152 = vmatpush1.msra.mxu0 0.0
        %3153 = vmatprep.subr.mxu0 0.0
        %3154 = vmatpush1.msra.mxu0 0.0
        %3155 = vmatprep.subr.mxu0 0.0
        %3156 = vmatpush1.msra.mxu0 0.0
        %3157 = vmatprep.subr.mxu0 0.0
        %3158 = vmatpush1.msra.mxu0 0.0
        %3159 = vmatprep.subr.mxu0 0.0
        %3160 = vmatpush1.msra.mxu0 0.0
        %3161 = vmatprep.subr.mxu0 0.0
        %3162 = vmatpush1.msra.mxu0 0.0
        %3163 = vmatprep.subr.mxu0 0.0
        %3164 = vmatpush1.msra.mxu0 0.0
        %3165 = vmatprep.subr.mxu0 0.0
        %3166 = vmatpush1.msra.mxu0 0.0
        %3167 = vmatprep.subr.mxu0 0.0
        %3168 = vmatpush1.msra.mxu0 0.0
        %3169 = vmatprep.subr.mxu0 0.0
        %3170 = vmatpush1.msra.mxu0 0.0
        %3171 = vmatprep.subr.mxu0 0.0
        %3172 = vmatpush1.msra.mxu0 0.0
        %3173 = vmatprep.subr.mxu0 0.0
        %3174 = vmatpush1.msra.mxu0 0.0
        %3175 = vmatprep.subr.mxu0 0.0
        %3176 = vmatpush1.msra.mxu0 0.0
        %3177 = vmatprep.subr.mxu0 0.0
        %3178 = vmatpush1.msra.mxu0 0.0
        %3179 = vmatprep.subr.mxu0 0.0
        %3180 = vmatpush1.msra.mxu0 0.0
        %3181 = vmatprep.subr.mxu0 0.0
        %3182 = vmatpush1.msra.mxu0 0.0
        %3183 = vmatprep.subr.mxu0 0.0
        %3184 = vmatpush1.msra.mxu0 0.0
        %3185 = vmatprep.subr.mxu0 0.0
        %3186 = vmatpush1.msra.mxu0 0.0
        %3187 = vmatprep.subr.mxu0 0.0
        %3188 = vmatpush1.msra.mxu0 0.0
        %3189 = vmatprep.subr.mxu0 0.0
        %3190 = vmatpush1.msra.mxu0 0.0
        %3191 = vmatprep.subr.mxu0 0.0
        %3192 = vmatpush1.msra.mxu0 0.0
        %3193 = vmatprep.subr.mxu0 0.0
        %3194 = vmatpush1.msra.mxu0 0.0
        %3195 = vmatprep.subr.mxu0 0.0
        %3196 = vmatpush1.msra.mxu0 0.0
        %3197 = vmatprep.subr.mxu0 0.0
        %3198 = vmatpush1.msra.mxu0 0.0
        %3199 = vmatprep.subr.mxu0 0.0
        %3200 = vmatpush1.msra.mxu0 0.0
        %3201 = vmatprep.subr.mxu0 0.0
        %3202 = vmatpush1.msra.mxu0 0.0
        %3203 = vmatprep.subr.mxu0 0.0
        %3204 = vmatpush1.msra.mxu0 0.0
        %3205 = vmatprep.subr.mxu0 0.0
        %3206 = vmatpush1.msra.mxu0 0.0
        %3207 = vmatprep.subr.mxu0 0.0
        %3208 = vmatpush1.msra.mxu0 0.0
        %3209 = vmatprep.mubr.f32.mxu0 0.0
        %3210 = vmatmul.mubr.f32.gmra.mrb[0].mxu0 %v3118
        %v3211 = vpop.f32.mrb[0].mxu0
        %v3212 = vadd.f32 0.0, %v3211
        %v3213 = vpop.f32.mrb[0].mxu0
        %3214 = vmatprep.mubr.f32.mxu0 0.0
        %3215 = vmatmul.mubr.f32.gmra.mrb[0].mxu0 %v3121
        %v3216 = vpop.f32.mrb[0].mxu0
        %v3217 = vadd.f32 0.0, %v3216
        %v3218 = vpop.f32.mrb[0].mxu0
        %3219 = vmatprep.mubr.f32.mxu0 0.0
        %3220 = vmatmul.mubr.f32.gmra.mrb[0].mxu0 %v3124
        %v3221 = vpop.f32.mrb[0].mxu0
        %v3222 = vadd.f32 0.0, %v3221
        %v3223 = vpop.f32.mrb[0].mxu0
        %3224 = vmatprep.mubr.f32.mxu0 0.0
        %3225 = vmatmul.mubr.f32.gmra.mrb[0].mxu0 %v3127
        %v3226 = vpop.f32.mrb[0].mxu0
        %v3227 = vadd.f32 0.0, %v3226
        %v3228 = vpop.f32.mrb[0].mxu0
        %3229 = vmatprep.mubr.f32.mxu0 0.0
        %3230 = vmatmul.mubr.f32.gmra.mrb[0].mxu0 %v3130
        %v3231 = vpop.f32.mrb[0].mxu0
        %v3232 = vadd.f32 0.0, %v3231
        %v3233 = vpop.f32.mrb[0].mxu0
        %3234 = vmatprep.mubr.f32.mxu0 0.0
        %3235 = vmatmul.mubr.f32.gmra.mrb[0].mxu0 %v3133
        %v3236 = vpop.f32.mrb[0].mxu0
        %v3237 = vadd.f32 0.0, %v3236
        %v3238 = vpop.f32.mrb[0].mxu0
        %3239 = vmatprep.mubr.f32.mxu0 0.0
        %3240 = vmatmul.mubr.f32.gmra.mrb[0].mxu0 %v3136
        %v3241 = vpop.f32.mrb[0].mxu0
        %v3242 = vadd.f32 0.0, %v3241
        %v3243 = vpop.f32.mrb[0].mxu0
        %3244 = vmatprep.mubr.f32.mxu0 0.0
        %3245 = vmatmul.mubr.f32.gmra.mrb[0].mxu0 %v3139
        %v3246 = vpop.f32.mrb[0].mxu0
        %v3247 = vadd.f32 0.0, %v3246
        %v3248 = vpop.f32.mrb[0].mxu0
        %3249 = vdwg.mxu0
        %v3250 = vld [vmem:[%s14] sm:$0xff]
        %v3251 = vld [vmem:[%s14 + $0x8] sm:$0xff]
        %v3252 = vld [vmem:[%s14 + $0x10] sm:$0xff]
        %v3253 = vld [vmem:[%s14 + $0x18] sm:$0xff]
        %v3254 = vld [vmem:[%s14 + $0x20] sm:$0xff]
        %v3255 = vld [vmem:[%s14 + $0x28] sm:$0xff]
        %v3256 = vld [vmem:[%s14 + $0x30] sm:$0xff]
        %v3257 = vld [vmem:[%s14 + $0x38] sm:$0xff]
        %v3258 = vld [vmem:[%s14 + $0x40] sm:$0xff]
        %v3259 = vld [vmem:[%s14 + $0x48] sm:$0xff]
        %v3260 = vld [vmem:[%s14 + $0x50] sm:$0xff]
        %v3261 = vld [vmem:[%s14 + $0x58] sm:$0xff]
        %v3262 = vld [vmem:[%s14 + $0x60] sm:$0xff]
        %v3263 = vld [vmem:[%s14 + $0x68] sm:$0xff]
        %v3264 = vld [vmem:[%s14 + $0x70] sm:$0xff]
        %v3265 = vld [vmem:[%s14 + $0x78] sm:$0xff]
        %3266 = vmatprep.subr.mxu0 0.0
        %3267 = vmatpush1.msra.mxu0 %v3250
        %3268 = vmatprep.subr.mxu0 0.0
        %3269 = vmatpush1.msra.mxu0 %v3251
        %3270 = vmatprep.subr.mxu0 0.0
        %3271 = vmatpush1.msra.mxu0 %v3252
        %3272 = vmatprep.subr.mxu0 0.0
        %3273 = vmatpush1.msra.mxu0 %v3253
        %3274 = vmatprep.subr.mxu0 0.0
        %3275 = vmatpush1.msra.mxu0 %v3254
        %3276 = vmatprep.subr.mxu0 0.0
        %3277 = vmatpush1.msra.mxu0 %v3255
        %3278 = vmatprep.subr.mxu0 0.0
        %3279 = vmatpush1.msra.mxu0 %v3256
        %3280 = vmatprep.subr.mxu0 0.0
        %3281 = vmatpush1.msra.mxu0 %v3257
        %3282 = vmatprep.subr.mxu0 0.0
        %3283 = vmatpush1.msra.mxu0 %v3258
        %3284 = vmatprep.subr.mxu0 0.0
        %3285 = vmatpush1.msra.mxu0 %v3259
        %3286 = vmatprep.subr.mxu0 0.0
        %3287 = vmatpush1.msra.mxu0 %v3260
        %3288 = vmatprep.subr.mxu0 0.0
        %3289 = vmatpush1.msra.mxu0 %v3261
        %3290 = vmatprep.subr.mxu0 0.0
        %3291 = vmatpush1.msra.mxu0 %v3262
        %3292 = vmatprep.subr.mxu0 0.0
        %3293 = vmatpush1.msra.mxu0 %v3263
        %3294 = vmatprep.subr.mxu0 0.0
        %3295 = vmatpush1.msra.mxu0 %v3264
        %3296 = vmatprep.subr.mxu0 0.0
        %3297 = vmatpush1.msra.mxu0 %v3265
        %3298 = vmatprep.subr.mxu0 0.0
        %3299 = vmatpush1.msra.mxu0 0.0
        %3300 = vmatprep.subr.mxu0 0.0
        %3301 = vmatpush1.msra.mxu0 0.0
        %3302 = vmatprep.subr.mxu0 0.0
        %3303 = vmatpush1.msra.mxu0 0.0
        %3304 = vmatprep.subr.mxu0 0.0
        %3305 = vmatpush1.msra.mxu0 0.0
        %3306 = vmatprep.subr.mxu0 0.0
        %3307 = vmatpush1.msra.mxu0 0.0
        %3308 = vmatprep.subr.mxu0 0.0
        %3309 = vmatpush1.msra.mxu0 0.0
        %3310 = vmatprep.subr.mxu0 0.0
        %3311 = vmatpush1.msra.mxu0 0.0
        %3312 = vmatprep.subr.mxu0 0.0
        %3313 = vmatpush1.msra.mxu0 0.0
        %3314 = vmatprep.subr.mxu0 0.0
        %3315 = vmatpush1.msra.mxu0 0.0
        %3316 = vmatprep.subr.mxu0 0.0
        %3317 = vmatpush1.msra.mxu0 0.0
        %3318 = vmatprep.subr.mxu0 0.0
        %3319 = vmatpush1.msra.mxu0 0.0
        %3320 = vmatprep.subr.mxu0 0.0
        %3321 = vmatpush1.msra.mxu0 0.0
        %3322 = vmatprep.subr.mxu0 0.0
        %3323 = vmatpush1.msra.mxu0 0.0
        %3324 = vmatprep.subr.mxu0 0.0
        %3325 = vmatpush1.msra.mxu0 0.0
        %3326 = vmatprep.subr.mxu0 0.0
        %3327 = vmatpush1.msra.mxu0 0.0
        %3328 = vmatprep.subr.mxu0 0.0
        %3329 = vmatpush1.msra.mxu0 0.0
        %3330 = vmatprep.mubr.f32.mxu0 0.0
        %3331 = vmatmul.mubr.f32.gmra.mrb[0].mxu0 %v3212
        %v3332 = vpop.f32.mrb[0].mxu0
        %v3333 = vadd.f32 0.0, %v3332
        %v3334 = vpop.f32.mrb[0].mxu0
        %3335 = vmatprep.mubr.f32.mxu0 0.0
        %3336 = vmatmul.mubr.f32.gmra.mrb[0].mxu0 %v3217
        %v3337 = vpop.f32.mrb[0].mxu0
        %v3338 = vadd.f32 0.0, %v3337
        %v3339 = vpop.f32.mrb[0].mxu0
        %3340 = vmatprep.mubr.f32.mxu0 0.0
        %3341 = vmatmul.mubr.f32.gmra.mrb[0].mxu0 %v3222
        %v3342 = vpop.f32.mrb[0].mxu0
        %v3343 = vadd.f32 0.0, %v3342
        %v3344 = vpop.f32.mrb[0].mxu0
        %3345 = vmatprep.mubr.f32.mxu0 0.0
        %3346 = vmatmul.mubr.f32.gmra.mrb[0].mxu0 %v3227
        %v3347 = vpop.f32.mrb[0].mxu0
        %v3348 = vadd.f32 0.0, %v3347
        %v3349 = vpop.f32.mrb[0].mxu0
        %3350 = vmatprep.mubr.f32.mxu0 0.0
        %3351 = vmatmul.mubr.f32.gmra.mrb[0].mxu0 %v3232
        %v3352 = vpop.f32.mrb[0].mxu0
        %v3353 = vadd.f32 0.0, %v3352
        %v3354 = vpop.f32.mrb[0].mxu0
        %3355 = vmatprep.mubr.f32.mxu0 0.0
        %3356 = vmatmul.mubr.f32.gmra.mrb[0].mxu0 %v3237
        %v3357 = vpop.f32.mrb[0].mxu0
        %v3358 = vadd.f32 0.0, %v3357
        %v3359 = vpop.f32.mrb[0].mxu0
        %3360 = vmatprep.mubr.f32.mxu0 0.0
        %3361 = vmatmul.mubr.f32.gmra.mrb[0].mxu0 %v3242
        %v3362 = vpop.f32.mrb[0].mxu0
        %v3363 = vadd.f32 0.0, %v3362
        %v3364 = vpop.f32.mrb[0].mxu0
        %3365 = vmatprep.mubr.f32.mxu0 0.0
        %3366 = vmatmul.mubr.f32.gmra.mrb[0].mxu0 %v3247
        %v3367 = vpop.f32.mrb[0].mxu0
        %v3368 = vadd.f32 0.0, %v3367
        %v3369 = vpop.f32.mrb[0].mxu0
        %3370 = vdwg.mxu0
        %v3371 = vadd.f32 %v3070, %v3333
        %v3372 = vadd.f32 %v3075, %v3338
        %v3373 = vadd.f32 %v3080, %v3343
        %v3374 = vadd.f32 %v3085, %v3348
        %v3375 = vadd.f32 %v3090, %v3353
        %v3376 = vadd.f32 %v3095, %v3358
        %v3377 = vadd.f32 %v3100, %v3363
        %v3378 = vadd.f32 %v3105, %v3368
        %3379 = vst [vmem:[%s488] sm:$0xff] %v3371
        %3380 = vst [vmem:[%s488 + $0x8] sm:$0xff] %v3372
        %3381 = vst [vmem:[%s488 + $0x10] sm:$0xff] %v3373
        %3382 = vst [vmem:[%s488 + $0x18] sm:$0xff] %v3374
        %3383 = vst [vmem:[%s488 + $0x20] sm:$0xff] %v3375
        %3384 = vst [vmem:[%s488 + $0x28] sm:$0xff] %v3376
        %3385 = vst [vmem:[%s488 + $0x30] sm:$0xff] %v3377
        %3386 = vst [vmem:[%s488 + $0x38] sm:$0xff] %v3378
        %s3387 = sand.u32 %s357, 1
        %s3388 = scalar_lea.sflag [#allocation3], %s3387
        %s3389 = sand.u32 %s357, 1
        %s3390 = smul.addr %s3389, 64
        %s3391 = scalar_lea.vmem [#allocation2], %s3390
        // Predicated region
        $region81: #{tpu_custom_call.1} parent=79 // pred_check
          %p3392 = pneg %p367
        $region82: #{tpu_custom_call.1} parent=79 // pred_check_branch
          %3394 = sbr.rel (%p3392) target = $region84
        $region83: #{tpu_custom_call.1} parent=79 // pred_region
          %s3395 = smul.u32 8, %s29
          %s3397 = ssub.s32 1024, 1024
          %3398 = vsyncadd %s3388, %s3397
          %s3399 = smul.addr %s3395, 128
          %s3400 = scalar_lea.hbm %s15, %s3399
          %s3401 = sshll.u32 %s3391, 4
          %s3402 = int_to_ptr.vmem [resolvable:$true] %s3401
          %3407 = dma.vmem_to_hbm [thread:$0]  %s3402, 1024, %s3400, %s3388, 128, 128, 8
        $region84: #{tpu_custom_call.1} parent=79 // pred_fallthru
          _
      $region80: #{tpu_custom_call.1} parent=5 // pred_fallthru
        _
      %p3408 = scmp.le.s32.totalorder 2, %s24
      // Predicated region
      $region85: #{tpu_custom_call.1} parent=5 // pred_check
        %p3409 = pneg %p3408
      $region86: #{tpu_custom_call.1} parent=5 // pred_check_branch
        %3411 = sbr.rel (%p3409) target = $region88
      $region87: #{tpu_custom_call.1} parent=5 // pred_region
        %s3412 = ssub.s32 %s24, 2
        // Predicated region
        $region89: #{tpu_custom_call.1} parent=87 // pred_check
          %p3413 = pneg %p373
        $region90: #{tpu_custom_call.1} parent=87 // pred_check_branch
          %3415 = sbr.rel (%p3413) target = $region92
        $region91: #{tpu_custom_call.1} parent=87 // pred_region
          %s3416 = sand.u32 %s358, 1
          %s3417 = scalar_lea.sflag [#allocation3], %s3416
          %s3418 = sand.u32 %s358, 1
          %s3419 = smul.addr %s3418, 64
          %s3420 = scalar_lea.vmem [#allocation2], %s3419
          %3421 = dma.done %s3417, 1024
        $region92: #{tpu_custom_call.1} parent=87 // pred_fallthru
          _
      $region88: #{tpu_custom_call.1} parent=5 // pred_fallthru
        _
    $region6: #{tpu_custom_call.1} parent=1 // loop_footer
      %s28 = sadd.s32 1, %s24
    $region7: #{tpu_custom_call.1} parent=1 // loop_footer_branch
      %23 = sbr.rel target = $region3
    $region8: #{tpu_custom_call.1} parent=1 // loop_exit
      _
    %3422 = vsyncpa [#allocation3], 1
    %s3423 = scalar_lea.sflag [#allocation3], 1
    %3424 = vsyncpa %s3423, 1

</llo_original>
